<compile_context>
chip_gen: v5e
topology: v5e:2x2
jax: 0.10.0
libtpu: 0.0.40
codegen_flags: <defaults>
</compile_context>

<pallas_src>
import functools

import jax
import jax.numpy as jnp
from jax.experimental import pallas as pl
from jax.experimental.pallas import tpu as pltpu

HEAD_PAD = 128   # per-head feature block padded to one full lane tile


def gat_fused_kernel(x_ref, mask_ref, seg_ref, *refs, cfgs):
    """All GATConv+ReLU layers fused; whole (small) graph resident in VMEM.

    refs = (w_aug_1, bias_1, ..., w_aug_L, bias_L, out_ref)
    cfgs = ((heads, out_dim, concat), ...)  -- static.
    """
    n_layers = len(cfgs)
    layer_refs = [refs[2 * i:2 * i + 2] for i in range(n_layers)]
    out_ref = refs[2 * n_layers]

    n = x_ref.shape[0]
    mask_rep = mask_ref[...]              # [N, MAXH*N]: 0 on edges, -1e30 off (tiled/head)
    seg = seg_ref[...]                    # [MAXH*N, MAXH] bf16 head-block indicator

    act = x_ref[...].astype(jnp.bfloat16)  # current activations (bf16, padded layout)

    for li, ((w_ref, b_ref), (heads, dim, concat)) in enumerate(
            zip(layer_refs, cfgs)):
        is_last = li == n_layers - 1
        hw = heads * HEAD_PAD

        # ONE fused MXU matmul: per-head features AND all 2H attention logits.
        # (bf16 inputs, f32 accumulation; last 128 columns of W_aug hold W@A.)
        ha = jnp.dot(act, w_ref[...], preferred_element_type=jnp.float32)  # [N, hw+128]
        ha_bf = ha.astype(jnp.bfloat16)

        a_all = ha[:, hw:hw + 2 * heads]          # [N, 2H] f32 logits
        a_src_t = a_all[:, 0:heads].T             # [H, N]  (single small transpose)
        a_dst = a_all[:, heads:2 * heads]         # [N, H]

        # Pack all heads along the lane axis: logits[i, hh*N + j] = dst_i + src_j.
        logits = jnp.concatenate(
            [a_dst[:, hh:hh + 1] + a_src_t[hh:hh + 1, :] for hh in range(heads)],
            axis=1)                                                       # [N, H*N]
        # Leaky-ReLU(0.2) then additive edge mask, all heads in one f32 pass.
        e = jnp.maximum(logits, 0.2 * logits) + mask_rep[:, :heads * n]
        # Per-dst-row shift (same constant for every head of a row -> softmax
        # unchanged; self-loops guarantee at least one unmasked source/row).
        e = e - jnp.max(e, axis=-1, keepdims=True)
        p = jnp.exp(e)                            # single EUP pass over all heads
        p_bf = p.astype(jnp.bfloat16)
        # Per-head softmax denominators via one tiny MXU matmul (no XLU reduces).
        denom = jnp.dot(p_bf, seg[:heads * n, :heads],
                        preferred_element_type=jnp.float32)               # [N, H]
        inv = pl.reciprocal(denom, approx=True)

        # Per-head aggregation on 128-aligned slices; normalize after the matmul.
        head_outs = []
        for hh in range(heads):                   # heads static -> unrolled
            o_h = jnp.dot(p_bf[:, hh * n:(hh + 1) * n],
                          ha_bf[:, hh * HEAD_PAD:(hh + 1) * HEAD_PAD],
                          preferred_element_type=jnp.float32)             # [N, 128]
            head_outs.append(o_h * inv[:, hh:hh + 1])

        if concat:
            o = jnp.concatenate(head_outs, axis=1) + b_ref[...]           # [N, H*128]
        else:
            acc = head_outs[0]
            for t in head_outs[1:]:
                acc = acc + t
            o = acc * (1.0 / heads) + b_ref[...]                          # head mean
        o = jnp.maximum(o, 0.0)                                           # ReLU

        if is_last:
            out_ref[...] = o                      # lane-dense (128-wide) store
        else:
            act = o.astype(jnp.bfloat16)


# ---------------------------- wrapper-side packing ---------------------------
def _scatter_rows(w, prev_heads, prev_dim):
    """Re-index W rows from dense per-head layout to HEAD_PAD-padded layout."""
    if prev_heads is None or prev_dim == HEAD_PAD:
        return w
    w_pad = jnp.zeros((prev_heads * HEAD_PAD, w.shape[1]), w.dtype)
    for hh in range(prev_heads):
        w_pad = w_pad.at[hh * HEAD_PAD:hh * HEAD_PAD + prev_dim, :].set(
            w[hh * prev_dim:(hh + 1) * prev_dim, :])
    return w_pad


def _scatter_cols(w, heads, dim):
    """Pad each head's output block of W out to HEAD_PAD columns."""
    if dim == HEAD_PAD:
        return w
    w_pad = jnp.zeros((w.shape[0], heads * HEAD_PAD), w.dtype)
    for hh in range(heads):
        w_pad = w_pad.at[:, hh * HEAD_PAD:hh * HEAD_PAD + dim].set(
            w[:, hh * dim:(hh + 1) * dim])
    return w_pad


def _block_diag_att_pad(att_src, att_dst):
    """[H*HEAD_PAD, 2H] block-diagonal attention matrix in the padded layout."""
    heads, dim = att_src.shape
    a = jnp.zeros((heads * HEAD_PAD, 2 * heads), jnp.float32)
    for hh in range(heads):
        a = a.at[hh * HEAD_PAD:hh * HEAD_PAD + dim, hh].set(att_src[hh])
        a = a.at[hh * HEAD_PAD:hh * HEAD_PAD + dim, heads + hh].set(att_dst[hh])
    return a


def _pad_bias(bias, heads, dim, concat):
    if concat:
        b_pad = jnp.zeros((1, heads * HEAD_PAD), jnp.float32)
        for hh in range(heads):
            b_pad = b_pad.at[:, hh * HEAD_PAD:hh * HEAD_PAD + dim].set(
                bias[:, hh * dim:(hh + 1) * dim])
        return b_pad
    b_pad = jnp.zeros((1, HEAD_PAD), jnp.float32)
    return b_pad.at[:, :dim].set(bias)


def gat_forward(x, layers, adj):
    """Fused forward pass of all GATConv+ReLU layers in one pallas_call."""
    n = x.shape[0]
    max_heads = max(h for (_, _, _, _, h, _, _) in layers)

    # Additive attention mask: 0 where edge j->i exists, -1e30 otherwise;
    # tiled head-major along lanes so the kernel can slice [:, :heads*N].
    mask_bias = (adj - 1.0) * jnp.float32(1e30)
    mask_rep = jnp.tile(mask_bias, (1, max_heads))                  # [N, MAXH*N]

    # Head-block indicator for the MXU softmax-denominator reduction.
    seg = jnp.zeros((max_heads * n, max_heads), jnp.float32)
    for hh in range(max_heads):
        seg = seg.at[hh * n:(hh + 1) * n, hh].set(1.0)
    seg = seg.astype(jnp.bfloat16)

    cfgs = tuple((h, d, c) for (_, _, _, _, h, d, c) in layers)
    flat = []
    prev = None                 # (effective_heads, dim) of the padded input layout
    for (w, att_src, att_dst, bias, h, d, c) in layers:
        w_rows = w if prev is None else _scatter_rows(w, prev[0], prev[1])
        w_p = _scatter_cols(w_rows, h, d)                           # [in_pad, h*128]
        wa = jnp.dot(w_p, _block_diag_att_pad(att_src, att_dst))    # [in_pad, 2h]
        pad = jnp.zeros((w_p.shape[0], HEAD_PAD - 2 * h), jnp.float32)
        w_aug = jnp.concatenate([w_p, wa, pad], axis=1)             # [in_pad, h*128+128]
        flat += [w_aug.astype(jnp.bfloat16), _pad_bias(bias, h, d, c)]
        prev = (h if c else 1, d)

    last_h, last_d, last_c = cfgs[-1]
    out_cols = (last_h if last_c else 1) * HEAD_PAD                 # lane-dense output

    kernel = functools.partial(gat_fused_kernel, cfgs=cfgs)
    n_in = 3 + len(flat)
    y_pad = pl.pallas_call(
        kernel,
        out_shape=jax.ShapeDtypeStruct((n, out_cols), jnp.float32),
        in_specs=[pl.BlockSpec(memory_space=pltpu.MemorySpace.VMEM)] * n_in,
        out_specs=pl.BlockSpec(memory_space=pltpu.MemorySpace.VMEM),
    )(x, mask_rep, seg, *flat)

    # Strip the per-head lane padding back out (cheap XLA slice/concat).
    if last_c:
        return jnp.concatenate(
            [y_pad[:, hh * HEAD_PAD:hh * HEAD_PAD + last_d] for hh in range(last_h)],
            axis=1)
    return y_pad[:, :last_d]


# ---- pure-JAX f32 reference (same semantics, independent math path) ---------
def gat_forward_ref(x, layers, adj):
    n = x.shape[0]
    out = x
    for (w, att_src, att_dst, bias, heads, dim, concat) in layers:
        h = jnp.dot(out, w)
        h3 = h.reshape(n, heads, dim)
        a_s = jnp.einsum('nhd,hd->nh', h3, att_src)
        a_d = jnp.einsum('nhd,hd->nh', h3, att_dst)
        e = a_d[:, None, :] + a_s[None, :, :]                 # [N_dst, N_src, H]
        e = jnp.where(e > 0, e, 0.2 * e)
        e = jnp.where(adj[:, :, None] > 0, e, -1e30)
        attn = jax.nn.softmax(e, axis=1)
        o = jnp.einsum('ijh,jhd->ihd', attn, h3)
        if concat:
            o = o.reshape(n, heads * dim) + bias
        else:
            o = o.mean(axis=1) + bias
        out = jnp.maximum(o, 0.0)
    return out


def glorot(key, shape):
    fan_in, fan_out = shape[0], shape[-1]
    limit = (6.0 / (fan_in + fan_out)) ** 0.5
    return jax.random.uniform(key, shape, jnp.float32, -limit, limit)


if __name__ == "__main__":
    key = jax.random.PRNGKey(0)
    N = 16            # graph nodes (drug + mirna features concatenated)
    INPUT_DIM = 32
    NUM_HEADS = 4

    kx, ke, kp = jax.random.split(key, 3)
    x = jax.random.normal(kx, (N, INPUT_DIM), jnp.float32)

    # Random sparse directed adjacency + self loops (add_self_loops=True).
    adj = (jax.random.uniform(ke, (N, N)) < 0.2).astype(jnp.float32)
    adj = jnp.maximum(adj, jnp.eye(N, dtype=jnp.float32))

    # (in_dim, out_dim, heads, concat) per GATConv layer, matching the module.
    layer_cfgs = [
        (INPUT_DIM, 128, NUM_HEADS, True),
        (128 * NUM_HEADS, 128, NUM_HEADS, True),
        (128 * NUM_HEADS, 64, NUM_HEADS, True),
        (64 * NUM_HEADS, 64, 1, False),
    ]
    params = []
    for kk, (din, dout, h, concat) in zip(jax.random.split(kp, len(layer_cfgs)),
                                          layer_cfgs):
        ka, kb, kc, kd = jax.random.split(kk, 4)
        w = glorot(ka, (din, h * dout))                # lin weight (bias=False)
        att_s = glorot(kb, (h, dout))                  # att_src, per head
        att_d = glorot(kc, (h, dout))                  # att_dst, per head
        bcols = h * dout if concat else dout
        bias = 0.01 * jax.random.normal(kd, (1, bcols), jnp.float32)
        params.append((w, att_s, att_d, bias, h, dout, concat))

    y = gat_forward(x, params, adj)
    y = jax.block_until_ready(y)

    y_ref = gat_forward_ref(x, params, adj)

    assert y.shape == (N, 64), y.shape
    assert bool(jnp.all(jnp.isfinite(y)))
    # Tolerance reflects intentional bf16 MXU inputs (f32 accumulation) over
    # 4 stacked layers plus the approx-reciprocal softmax normalization.
    max_err = float(jnp.max(jnp.abs(y - y_ref)))
    assert bool(jnp.allclose(y, y_ref, rtol=5e-2, atol=5e-2)), max_err
    # TODO(synk): the fc head (Linear(64,1)) lives in .predict(), not .forward(),
    # so it is intentionally not part of the translated forward pass.
    print("KERNEL_OK")
</pallas_src>

<mosaic_0001>
module attributes {stable_mosaic.version = 11 : i64} {
  func.func @gat_fused_kernel(%arg0: memref<16x32xf32, #tpu.memory_space<vmem>>, %arg1: memref<16x64xf32, #tpu.memory_space<vmem>>, %arg2: memref<64x4xbf16, #tpu.memory_space<vmem>>, %arg3: memref<32x640xbf16, #tpu.memory_space<vmem>>, %arg4: memref<1x512xf32, #tpu.memory_space<vmem>>, %arg5: memref<512x640xbf16, #tpu.memory_space<vmem>>, %arg6: memref<1x512xf32, #tpu.memory_space<vmem>>, %arg7: memref<512x640xbf16, #tpu.memory_space<vmem>>, %arg8: memref<1x512xf32, #tpu.memory_space<vmem>>, %arg9: memref<512x256xbf16, #tpu.memory_space<vmem>>, %arg10: memref<1x128xf32, #tpu.memory_space<vmem>>, %arg11: memref<16x128xf32, #tpu.memory_space<vmem>>) attributes {dimension_semantics = [], scalar_prefetch = 0 : i64, scratch_operands = 0 : i64, tpu.core_type = #tpu.core_type<tc>} {
    %c0 = arith.constant 0 : index
    %c0_0 = arith.constant 0 : index
    %0 = vector.load %arg1[%c0, %c0_0] : memref<16x64xf32, #tpu.memory_space<vmem>>, vector<16x64xf32>
    %c0_1 = arith.constant 0 : index
    %c0_2 = arith.constant 0 : index
    %1 = vector.load %arg2[%c0_1, %c0_2] : memref<64x4xbf16, #tpu.memory_space<vmem>>, vector<64x4xbf16>
    %c0_3 = arith.constant 0 : index
    %c0_4 = arith.constant 0 : index
    %2 = vector.load %arg0[%c0_3, %c0_4] : memref<16x32xf32, #tpu.memory_space<vmem>>, vector<16x32xf32>
    %3 = arith.truncf %2 : vector<16x32xf32> to vector<16x32xbf16>
    %c0_5 = arith.constant 0 : index
    %c0_6 = arith.constant 0 : index
    %4 = vector.load %arg3[%c0_5, %c0_6] : memref<32x640xbf16, #tpu.memory_space<vmem>>, vector<32x640xbf16>
    %cst = arith.constant dense<0.000000e+00> : vector<16x640xf32>
    %5 = tpu.matmul %3, %4, %cst {dimension_numbers = #tpu.dot_dimension_numbers<[1], [0], [0], [1], [0, 0, 1, 1], [], []>} : vector<16x32xbf16>, vector<32x640xbf16>, vector<16x640xf32> -> vector<16x640xf32>
    %6 = arith.truncf %5 : vector<16x640xf32> to vector<16x640xbf16>
    %7 = vector.extract_strided_slice %5 {offsets = [0, 512], sizes = [16, 8], strides = [1, 1]} : vector<16x640xf32> to vector<16x8xf32>
    %8 = vector.extract_strided_slice %7 {offsets = [0, 0], sizes = [16, 4], strides = [1, 1]} : vector<16x8xf32> to vector<16x4xf32>
    %9 = tpu.transpose %8, [1, 0] : vector<16x4xf32> -> vector<4x16xf32>
    %10 = vector.extract_strided_slice %7 {offsets = [0, 4], sizes = [16, 4], strides = [1, 1]} : vector<16x8xf32> to vector<16x4xf32>
    %11 = vector.extract_strided_slice %10 {offsets = [0, 0], sizes = [16, 1], strides = [1, 1]} : vector<16x4xf32> to vector<16x1xf32>
    %12 = vector.extract_strided_slice %9 {offsets = [0, 0], sizes = [1, 16], strides = [1, 1]} : vector<4x16xf32> to vector<1x16xf32>
    %13 = vector.broadcast %11 : vector<16x1xf32> to vector<16x16xf32>
    %14 = vector.broadcast %12 : vector<1x16xf32> to vector<16x16xf32>
    %15 = arith.addf %13, %14 : vector<16x16xf32>
    %16 = vector.extract_strided_slice %10 {offsets = [0, 1], sizes = [16, 1], strides = [1, 1]} : vector<16x4xf32> to vector<16x1xf32>
    %17 = vector.extract_strided_slice %9 {offsets = [1, 0], sizes = [1, 16], strides = [1, 1]} : vector<4x16xf32> to vector<1x16xf32>
    %18 = vector.broadcast %16 : vector<16x1xf32> to vector<16x16xf32>
    %19 = vector.broadcast %17 : vector<1x16xf32> to vector<16x16xf32>
    %20 = arith.addf %18, %19 : vector<16x16xf32>
    %21 = vector.extract_strided_slice %10 {offsets = [0, 2], sizes = [16, 1], strides = [1, 1]} : vector<16x4xf32> to vector<16x1xf32>
    %22 = vector.extract_strided_slice %9 {offsets = [2, 0], sizes = [1, 16], strides = [1, 1]} : vector<4x16xf32> to vector<1x16xf32>
    %23 = vector.broadcast %21 : vector<16x1xf32> to vector<16x16xf32>
    %24 = vector.broadcast %22 : vector<1x16xf32> to vector<16x16xf32>
    %25 = arith.addf %23, %24 : vector<16x16xf32>
    %26 = vector.extract_strided_slice %10 {offsets = [0, 3], sizes = [16, 1], strides = [1, 1]} : vector<16x4xf32> to vector<16x1xf32>
    %27 = vector.extract_strided_slice %9 {offsets = [3, 0], sizes = [1, 16], strides = [1, 1]} : vector<4x16xf32> to vector<1x16xf32>
    %28 = vector.broadcast %26 : vector<16x1xf32> to vector<16x16xf32>
    %29 = vector.broadcast %27 : vector<1x16xf32> to vector<16x16xf32>
    %30 = arith.addf %28, %29 : vector<16x16xf32>
    %31 = tpu.concatenate %15, %20, %25, %30 in 1 : vector<16x16xf32>, vector<16x16xf32>, vector<16x16xf32>, vector<16x16xf32> -> vector<16x64xf32>
    %cst_7 = arith.constant 2.000000e-01 : f32
    %32 = vector.broadcast %cst_7 : f32 to vector<16x64xf32>
    %33 = arith.mulf %32, %31 : vector<16x64xf32>
    %34 = arith.maximumf %31, %33 : vector<16x64xf32>
    %35 = arith.addf %34, %0 : vector<16x64xf32>
    %cst_8 = arith.constant dense<0xFF800000> : vector<16xf32>
    %36 = vector.multi_reduction <maximumf>, %35, %cst_8 [1] : vector<16x64xf32> to vector<16xf32>
    %37 = vector.shape_cast %36 : vector<16xf32> to vector<16x1xf32>
    %38 = vector.broadcast %37 : vector<16x1xf32> to vector<16x64xf32>
    %39 = arith.subf %35, %38 : vector<16x64xf32>
    %40 = math.exp %39 : vector<16x64xf32>
    %41 = arith.truncf %40 : vector<16x64xf32> to vector<16x64xbf16>
    %cst_9 = arith.constant dense<0.000000e+00> : vector<16x4xf32>
    %42 = tpu.matmul %41, %1, %cst_9 {dimension_numbers = #tpu.dot_dimension_numbers<[1], [0], [0], [1], [0, 0, 1, 1], [], []>} : vector<16x64xbf16>, vector<64x4xbf16>, vector<16x4xf32> -> vector<16x4xf32>
    %43 = tpu.reciprocal %42 {approx = true} : vector<16x4xf32> -> vector<16x4xf32>
    %44 = vector.extract_strided_slice %41 {offsets = [0, 0], sizes = [16, 16], strides = [1, 1]} : vector<16x64xbf16> to vector<16x16xbf16>
    %45 = vector.extract_strided_slice %6 {offsets = [0, 0], sizes = [16, 128], strides = [1, 1]} : vector<16x640xbf16> to vector<16x128xbf16>
    %cst_10 = arith.constant dense<0.000000e+00> : vector<16x128xf32>
    %46 = tpu.matmul %44, %45, %cst_10 {dimension_numbers = #tpu.dot_dimension_numbers<[1], [0], [0], [1], [0, 0, 1, 1], [], []>} : vector<16x16xbf16>, vector<16x128xbf16>, vector<16x128xf32> -> vector<16x128xf32>
    %47 = vector.extract_strided_slice %43 {offsets = [0, 0], sizes = [16, 1], strides = [1, 1]} : vector<16x4xf32> to vector<16x1xf32>
    %48 = vector.broadcast %47 : vector<16x1xf32> to vector<16x128xf32>
    %49 = arith.mulf %46, %48 : vector<16x128xf32>
    %50 = vector.extract_strided_slice %41 {offsets = [0, 16], sizes = [16, 16], strides = [1, 1]} : vector<16x64xbf16> to vector<16x16xbf16>
    %51 = vector.extract_strided_slice %6 {offsets = [0, 128], sizes = [16, 128], strides = [1, 1]} : vector<16x640xbf16> to vector<16x128xbf16>
    %cst_11 = arith.constant dense<0.000000e+00> : vector<16x128xf32>
    %52 = tpu.matmul %50, %51, %cst_11 {dimension_numbers = #tpu.dot_dimension_numbers<[1], [0], [0], [1], [0, 0, 1, 1], [], []>} : vector<16x16xbf16>, vector<16x128xbf16>, vector<16x128xf32> -> vector<16x128xf32>
    %53 = vector.extract_strided_slice %43 {offsets = [0, 1], sizes = [16, 1], strides = [1, 1]} : vector<16x4xf32> to vector<16x1xf32>
    %54 = vector.broadcast %53 : vector<16x1xf32> to vector<16x128xf32>
    %55 = arith.mulf %52, %54 : vector<16x128xf32>
    %56 = vector.extract_strided_slice %41 {offsets = [0, 32], sizes = [16, 16], strides = [1, 1]} : vector<16x64xbf16> to vector<16x16xbf16>
    %57 = vector.extract_strided_slice %6 {offsets = [0, 256], sizes = [16, 128], strides = [1, 1]} : vector<16x640xbf16> to vector<16x128xbf16>
    %cst_12 = arith.constant dense<0.000000e+00> : vector<16x128xf32>
    %58 = tpu.matmul %56, %57, %cst_12 {dimension_numbers = #tpu.dot_dimension_numbers<[1], [0], [0], [1], [0, 0, 1, 1], [], []>} : vector<16x16xbf16>, vector<16x128xbf16>, vector<16x128xf32> -> vector<16x128xf32>
    %59 = vector.extract_strided_slice %43 {offsets = [0, 2], sizes = [16, 1], strides = [1, 1]} : vector<16x4xf32> to vector<16x1xf32>
    %60 = vector.broadcast %59 : vector<16x1xf32> to vector<16x128xf32>
    %61 = arith.mulf %58, %60 : vector<16x128xf32>
    %62 = vector.extract_strided_slice %41 {offsets = [0, 48], sizes = [16, 16], strides = [1, 1]} : vector<16x64xbf16> to vector<16x16xbf16>
    %63 = vector.extract_strided_slice %6 {offsets = [0, 384], sizes = [16, 128], strides = [1, 1]} : vector<16x640xbf16> to vector<16x128xbf16>
    %cst_13 = arith.constant dense<0.000000e+00> : vector<16x128xf32>
    %64 = tpu.matmul %62, %63, %cst_13 {dimension_numbers = #tpu.dot_dimension_numbers<[1], [0], [0], [1], [0, 0, 1, 1], [], []>} : vector<16x16xbf16>, vector<16x128xbf16>, vector<16x128xf32> -> vector<16x128xf32>
    %65 = vector.extract_strided_slice %43 {offsets = [0, 3], sizes = [16, 1], strides = [1, 1]} : vector<16x4xf32> to vector<16x1xf32>
    %66 = vector.broadcast %65 : vector<16x1xf32> to vector<16x128xf32>
    %67 = arith.mulf %64, %66 : vector<16x128xf32>
    %68 = tpu.concatenate %49, %55, %61, %67 in 1 : vector<16x128xf32>, vector<16x128xf32>, vector<16x128xf32>, vector<16x128xf32> -> vector<16x512xf32>
    %c0_14 = arith.constant 0 : index
    %c0_15 = arith.constant 0 : index
    %69 = vector.load %arg4[%c0_14, %c0_15] : memref<1x512xf32, #tpu.memory_space<vmem>>, vector<1x512xf32>
    %70 = vector.broadcast %69 : vector<1x512xf32> to vector<16x512xf32>
    %71 = arith.addf %68, %70 : vector<16x512xf32>
    %cst_16 = arith.constant 0.000000e+00 : f32
    %72 = vector.broadcast %cst_16 : f32 to vector<16x512xf32>
    %73 = arith.maximumf %71, %72 : vector<16x512xf32>
    %74 = arith.truncf %73 : vector<16x512xf32> to vector<16x512xbf16>
    %c0_17 = arith.constant 0 : index
    %c0_18 = arith.constant 0 : index
    %75 = vector.load %arg5[%c0_17, %c0_18] : memref<512x640xbf16, #tpu.memory_space<vmem>>, vector<512x640xbf16>
    %cst_19 = arith.constant dense<0.000000e+00> : vector<16x640xf32>
    %76 = tpu.matmul %74, %75, %cst_19 {dimension_numbers = #tpu.dot_dimension_numbers<[1], [0], [0], [1], [0, 0, 1, 1], [], []>} : vector<16x512xbf16>, vector<512x640xbf16>, vector<16x640xf32> -> vector<16x640xf32>
    %77 = arith.truncf %76 : vector<16x640xf32> to vector<16x640xbf16>
    %78 = vector.extract_strided_slice %76 {offsets = [0, 512], sizes = [16, 8], strides = [1, 1]} : vector<16x640xf32> to vector<16x8xf32>
    %79 = vector.extract_strided_slice %78 {offsets = [0, 0], sizes = [16, 4], strides = [1, 1]} : vector<16x8xf32> to vector<16x4xf32>
    %80 = tpu.transpose %79, [1, 0] : vector<16x4xf32> -> vector<4x16xf32>
    %81 = vector.extract_strided_slice %78 {offsets = [0, 4], sizes = [16, 4], strides = [1, 1]} : vector<16x8xf32> to vector<16x4xf32>
    %82 = vector.extract_strided_slice %81 {offsets = [0, 0], sizes = [16, 1], strides = [1, 1]} : vector<16x4xf32> to vector<16x1xf32>
    %83 = vector.extract_strided_slice %80 {offsets = [0, 0], sizes = [1, 16], strides = [1, 1]} : vector<4x16xf32> to vector<1x16xf32>
    %84 = vector.broadcast %82 : vector<16x1xf32> to vector<16x16xf32>
    %85 = vector.broadcast %83 : vector<1x16xf32> to vector<16x16xf32>
    %86 = arith.addf %84, %85 : vector<16x16xf32>
    %87 = vector.extract_strided_slice %81 {offsets = [0, 1], sizes = [16, 1], strides = [1, 1]} : vector<16x4xf32> to vector<16x1xf32>
    %88 = vector.extract_strided_slice %80 {offsets = [1, 0], sizes = [1, 16], strides = [1, 1]} : vector<4x16xf32> to vector<1x16xf32>
    %89 = vector.broadcast %87 : vector<16x1xf32> to vector<16x16xf32>
    %90 = vector.broadcast %88 : vector<1x16xf32> to vector<16x16xf32>
    %91 = arith.addf %89, %90 : vector<16x16xf32>
    %92 = vector.extract_strided_slice %81 {offsets = [0, 2], sizes = [16, 1], strides = [1, 1]} : vector<16x4xf32> to vector<16x1xf32>
    %93 = vector.extract_strided_slice %80 {offsets = [2, 0], sizes = [1, 16], strides = [1, 1]} : vector<4x16xf32> to vector<1x16xf32>
    %94 = vector.broadcast %92 : vector<16x1xf32> to vector<16x16xf32>
    %95 = vector.broadcast %93 : vector<1x16xf32> to vector<16x16xf32>
    %96 = arith.addf %94, %95 : vector<16x16xf32>
    %97 = vector.extract_strided_slice %81 {offsets = [0, 3], sizes = [16, 1], strides = [1, 1]} : vector<16x4xf32> to vector<16x1xf32>
    %98 = vector.extract_strided_slice %80 {offsets = [3, 0], sizes = [1, 16], strides = [1, 1]} : vector<4x16xf32> to vector<1x16xf32>
    %99 = vector.broadcast %97 : vector<16x1xf32> to vector<16x16xf32>
    %100 = vector.broadcast %98 : vector<1x16xf32> to vector<16x16xf32>
    %101 = arith.addf %99, %100 : vector<16x16xf32>
    %102 = tpu.concatenate %86, %91, %96, %101 in 1 : vector<16x16xf32>, vector<16x16xf32>, vector<16x16xf32>, vector<16x16xf32> -> vector<16x64xf32>
    %cst_20 = arith.constant 2.000000e-01 : f32
    %103 = vector.broadcast %cst_20 : f32 to vector<16x64xf32>
    %104 = arith.mulf %103, %102 : vector<16x64xf32>
    %105 = arith.maximumf %102, %104 : vector<16x64xf32>
    %106 = arith.addf %105, %0 : vector<16x64xf32>
    %cst_21 = arith.constant dense<0xFF800000> : vector<16xf32>
    %107 = vector.multi_reduction <maximumf>, %106, %cst_21 [1] : vector<16x64xf32> to vector<16xf32>
    %108 = vector.shape_cast %107 : vector<16xf32> to vector<16x1xf32>
    %109 = vector.broadcast %108 : vector<16x1xf32> to vector<16x64xf32>
    %110 = arith.subf %106, %109 : vector<16x64xf32>
    %111 = math.exp %110 : vector<16x64xf32>
    %112 = arith.truncf %111 : vector<16x64xf32> to vector<16x64xbf16>
    %cst_22 = arith.constant dense<0.000000e+00> : vector<16x4xf32>
    %113 = tpu.matmul %112, %1, %cst_22 {dimension_numbers = #tpu.dot_dimension_numbers<[1], [0], [0], [1], [0, 0, 1, 1], [], []>} : vector<16x64xbf16>, vector<64x4xbf16>, vector<16x4xf32> -> vector<16x4xf32>
    %114 = tpu.reciprocal %113 {approx = true} : vector<16x4xf32> -> vector<16x4xf32>
    %115 = vector.extract_strided_slice %112 {offsets = [0, 0], sizes = [16, 16], strides = [1, 1]} : vector<16x64xbf16> to vector<16x16xbf16>
    %116 = vector.extract_strided_slice %77 {offsets = [0, 0], sizes = [16, 128], strides = [1, 1]} : vector<16x640xbf16> to vector<16x128xbf16>
    %cst_23 = arith.constant dense<0.000000e+00> : vector<16x128xf32>
    %117 = tpu.matmul %115, %116, %cst_23 {dimension_numbers = #tpu.dot_dimension_numbers<[1], [0], [0], [1], [0, 0, 1, 1], [], []>} : vector<16x16xbf16>, vector<16x128xbf16>, vector<16x128xf32> -> vector<16x128xf32>
    %118 = vector.extract_strided_slice %114 {offsets = [0, 0], sizes = [16, 1], strides = [1, 1]} : vector<16x4xf32> to vector<16x1xf32>
    %119 = vector.broadcast %118 : vector<16x1xf32> to vector<16x128xf32>
    %120 = arith.mulf %117, %119 : vector<16x128xf32>
    %121 = vector.extract_strided_slice %112 {offsets = [0, 16], sizes = [16, 16], strides = [1, 1]} : vector<16x64xbf16> to vector<16x16xbf16>
    %122 = vector.extract_strided_slice %77 {offsets = [0, 128], sizes = [16, 128], strides = [1, 1]} : vector<16x640xbf16> to vector<16x128xbf16>
    %cst_24 = arith.constant dense<0.000000e+00> : vector<16x128xf32>
    %123 = tpu.matmul %121, %122, %cst_24 {dimension_numbers = #tpu.dot_dimension_numbers<[1], [0], [0], [1], [0, 0, 1, 1], [], []>} : vector<16x16xbf16>, vector<16x128xbf16>, vector<16x128xf32> -> vector<16x128xf32>
    %124 = vector.extract_strided_slice %114 {offsets = [0, 1], sizes = [16, 1], strides = [1, 1]} : vector<16x4xf32> to vector<16x1xf32>
    %125 = vector.broadcast %124 : vector<16x1xf32> to vector<16x128xf32>
    %126 = arith.mulf %123, %125 : vector<16x128xf32>
    %127 = vector.extract_strided_slice %112 {offsets = [0, 32], sizes = [16, 16], strides = [1, 1]} : vector<16x64xbf16> to vector<16x16xbf16>
    %128 = vector.extract_strided_slice %77 {offsets = [0, 256], sizes = [16, 128], strides = [1, 1]} : vector<16x640xbf16> to vector<16x128xbf16>
    %cst_25 = arith.constant dense<0.000000e+00> : vector<16x128xf32>
    %129 = tpu.matmul %127, %128, %cst_25 {dimension_numbers = #tpu.dot_dimension_numbers<[1], [0], [0], [1], [0, 0, 1, 1], [], []>} : vector<16x16xbf16>, vector<16x128xbf16>, vector<16x128xf32> -> vector<16x128xf32>
    %130 = vector.extract_strided_slice %114 {offsets = [0, 2], sizes = [16, 1], strides = [1, 1]} : vector<16x4xf32> to vector<16x1xf32>
    %131 = vector.broadcast %130 : vector<16x1xf32> to vector<16x128xf32>
    %132 = arith.mulf %129, %131 : vector<16x128xf32>
    %133 = vector.extract_strided_slice %112 {offsets = [0, 48], sizes = [16, 16], strides = [1, 1]} : vector<16x64xbf16> to vector<16x16xbf16>
    %134 = vector.extract_strided_slice %77 {offsets = [0, 384], sizes = [16, 128], strides = [1, 1]} : vector<16x640xbf16> to vector<16x128xbf16>
    %cst_26 = arith.constant dense<0.000000e+00> : vector<16x128xf32>
    %135 = tpu.matmul %133, %134, %cst_26 {dimension_numbers = #tpu.dot_dimension_numbers<[1], [0], [0], [1], [0, 0, 1, 1], [], []>} : vector<16x16xbf16>, vector<16x128xbf16>, vector<16x128xf32> -> vector<16x128xf32>
    %136 = vector.extract_strided_slice %114 {offsets = [0, 3], sizes = [16, 1], strides = [1, 1]} : vector<16x4xf32> to vector<16x1xf32>
    %137 = vector.broadcast %136 : vector<16x1xf32> to vector<16x128xf32>
    %138 = arith.mulf %135, %137 : vector<16x128xf32>
    %139 = tpu.concatenate %120, %126, %132, %138 in 1 : vector<16x128xf32>, vector<16x128xf32>, vector<16x128xf32>, vector<16x128xf32> -> vector<16x512xf32>
    %c0_27 = arith.constant 0 : index
    %c0_28 = arith.constant 0 : index
    %140 = vector.load %arg6[%c0_27, %c0_28] : memref<1x512xf32, #tpu.memory_space<vmem>>, vector<1x512xf32>
    %141 = vector.broadcast %140 : vector<1x512xf32> to vector<16x512xf32>
    %142 = arith.addf %139, %141 : vector<16x512xf32>
    %cst_29 = arith.constant 0.000000e+00 : f32
    %143 = vector.broadcast %cst_29 : f32 to vector<16x512xf32>
    %144 = arith.maximumf %142, %143 : vector<16x512xf32>
    %145 = arith.truncf %144 : vector<16x512xf32> to vector<16x512xbf16>
    %c0_30 = arith.constant 0 : index
    %c0_31 = arith.constant 0 : index
    %146 = vector.load %arg7[%c0_30, %c0_31] : memref<512x640xbf16, #tpu.memory_space<vmem>>, vector<512x640xbf16>
    %cst_32 = arith.constant dense<0.000000e+00> : vector<16x640xf32>
    %147 = tpu.matmul %145, %146, %cst_32 {dimension_numbers = #tpu.dot_dimension_numbers<[1], [0], [0], [1], [0, 0, 1, 1], [], []>} : vector<16x512xbf16>, vector<512x640xbf16>, vector<16x640xf32> -> vector<16x640xf32>
    %148 = arith.truncf %147 : vector<16x640xf32> to vector<16x640xbf16>
    %149 = vector.extract_strided_slice %147 {offsets = [0, 512], sizes = [16, 8], strides = [1, 1]} : vector<16x640xf32> to vector<16x8xf32>
    %150 = vector.extract_strided_slice %149 {offsets = [0, 0], sizes = [16, 4], strides = [1, 1]} : vector<16x8xf32> to vector<16x4xf32>
    %151 = tpu.transpose %150, [1, 0] : vector<16x4xf32> -> vector<4x16xf32>
    %152 = vector.extract_strided_slice %149 {offsets = [0, 4], sizes = [16, 4], strides = [1, 1]} : vector<16x8xf32> to vector<16x4xf32>
    %153 = vector.extract_strided_slice %152 {offsets = [0, 0], sizes = [16, 1], strides = [1, 1]} : vector<16x4xf32> to vector<16x1xf32>
    %154 = vector.extract_strided_slice %151 {offsets = [0, 0], sizes = [1, 16], strides = [1, 1]} : vector<4x16xf32> to vector<1x16xf32>
    %155 = vector.broadcast %153 : vector<16x1xf32> to vector<16x16xf32>
    %156 = vector.broadcast %154 : vector<1x16xf32> to vector<16x16xf32>
    %157 = arith.addf %155, %156 : vector<16x16xf32>
    %158 = vector.extract_strided_slice %152 {offsets = [0, 1], sizes = [16, 1], strides = [1, 1]} : vector<16x4xf32> to vector<16x1xf32>
    %159 = vector.extract_strided_slice %151 {offsets = [1, 0], sizes = [1, 16], strides = [1, 1]} : vector<4x16xf32> to vector<1x16xf32>
    %160 = vector.broadcast %158 : vector<16x1xf32> to vector<16x16xf32>
    %161 = vector.broadcast %159 : vector<1x16xf32> to vector<16x16xf32>
    %162 = arith.addf %160, %161 : vector<16x16xf32>
    %163 = vector.extract_strided_slice %152 {offsets = [0, 2], sizes = [16, 1], strides = [1, 1]} : vector<16x4xf32> to vector<16x1xf32>
    %164 = vector.extract_strided_slice %151 {offsets = [2, 0], sizes = [1, 16], strides = [1, 1]} : vector<4x16xf32> to vector<1x16xf32>
    %165 = vector.broadcast %163 : vector<16x1xf32> to vector<16x16xf32>
    %166 = vector.broadcast %164 : vector<1x16xf32> to vector<16x16xf32>
    %167 = arith.addf %165, %166 : vector<16x16xf32>
    %168 = vector.extract_strided_slice %152 {offsets = [0, 3], sizes = [16, 1], strides = [1, 1]} : vector<16x4xf32> to vector<16x1xf32>
    %169 = vector.extract_strided_slice %151 {offsets = [3, 0], sizes = [1, 16], strides = [1, 1]} : vector<4x16xf32> to vector<1x16xf32>
    %170 = vector.broadcast %168 : vector<16x1xf32> to vector<16x16xf32>
    %171 = vector.broadcast %169 : vector<1x16xf32> to vector<16x16xf32>
    %172 = arith.addf %170, %171 : vector<16x16xf32>
    %173 = tpu.concatenate %157, %162, %167, %172 in 1 : vector<16x16xf32>, vector<16x16xf32>, vector<16x16xf32>, vector<16x16xf32> -> vector<16x64xf32>
    %cst_33 = arith.constant 2.000000e-01 : f32
    %174 = vector.broadcast %cst_33 : f32 to vector<16x64xf32>
    %175 = arith.mulf %174, %173 : vector<16x64xf32>
    %176 = arith.maximumf %173, %175 : vector<16x64xf32>
    %177 = arith.addf %176, %0 : vector<16x64xf32>
    %cst_34 = arith.constant dense<0xFF800000> : vector<16xf32>
    %178 = vector.multi_reduction <maximumf>, %177, %cst_34 [1] : vector<16x64xf32> to vector<16xf32>
    %179 = vector.shape_cast %178 : vector<16xf32> to vector<16x1xf32>
    %180 = vector.broadcast %179 : vector<16x1xf32> to vector<16x64xf32>
    %181 = arith.subf %177, %180 : vector<16x64xf32>
    %182 = math.exp %181 : vector<16x64xf32>
    %183 = arith.truncf %182 : vector<16x64xf32> to vector<16x64xbf16>
    %cst_35 = arith.constant dense<0.000000e+00> : vector<16x4xf32>
    %184 = tpu.matmul %183, %1, %cst_35 {dimension_numbers = #tpu.dot_dimension_numbers<[1], [0], [0], [1], [0, 0, 1, 1], [], []>} : vector<16x64xbf16>, vector<64x4xbf16>, vector<16x4xf32> -> vector<16x4xf32>
    %185 = tpu.reciprocal %184 {approx = true} : vector<16x4xf32> -> vector<16x4xf32>
    %186 = vector.extract_strided_slice %183 {offsets = [0, 0], sizes = [16, 16], strides = [1, 1]} : vector<16x64xbf16> to vector<16x16xbf16>
    %187 = vector.extract_strided_slice %148 {offsets = [0, 0], sizes = [16, 128], strides = [1, 1]} : vector<16x640xbf16> to vector<16x128xbf16>
    %cst_36 = arith.constant dense<0.000000e+00> : vector<16x128xf32>
    %188 = tpu.matmul %186, %187, %cst_36 {dimension_numbers = #tpu.dot_dimension_numbers<[1], [0], [0], [1], [0, 0, 1, 1], [], []>} : vector<16x16xbf16>, vector<16x128xbf16>, vector<16x128xf32> -> vector<16x128xf32>
    %189 = vector.extract_strided_slice %185 {offsets = [0, 0], sizes = [16, 1], strides = [1, 1]} : vector<16x4xf32> to vector<16x1xf32>
    %190 = vector.broadcast %189 : vector<16x1xf32> to vector<16x128xf32>
    %191 = arith.mulf %188, %190 : vector<16x128xf32>
    %192 = vector.extract_strided_slice %183 {offsets = [0, 16], sizes = [16, 16], strides = [1, 1]} : vector<16x64xbf16> to vector<16x16xbf16>
    %193 = vector.extract_strided_slice %148 {offsets = [0, 128], sizes = [16, 128], strides = [1, 1]} : vector<16x640xbf16> to vector<16x128xbf16>
    %cst_37 = arith.constant dense<0.000000e+00> : vector<16x128xf32>
    %194 = tpu.matmul %192, %193, %cst_37 {dimension_numbers = #tpu.dot_dimension_numbers<[1], [0], [0], [1], [0, 0, 1, 1], [], []>} : vector<16x16xbf16>, vector<16x128xbf16>, vector<16x128xf32> -> vector<16x128xf32>
    %195 = vector.extract_strided_slice %185 {offsets = [0, 1], sizes = [16, 1], strides = [1, 1]} : vector<16x4xf32> to vector<16x1xf32>
    %196 = vector.broadcast %195 : vector<16x1xf32> to vector<16x128xf32>
    %197 = arith.mulf %194, %196 : vector<16x128xf32>
    %198 = vector.extract_strided_slice %183 {offsets = [0, 32], sizes = [16, 16], strides = [1, 1]} : vector<16x64xbf16> to vector<16x16xbf16>
    %199 = vector.extract_strided_slice %148 {offsets = [0, 256], sizes = [16, 128], strides = [1, 1]} : vector<16x640xbf16> to vector<16x128xbf16>
    %cst_38 = arith.constant dense<0.000000e+00> : vector<16x128xf32>
    %200 = tpu.matmul %198, %199, %cst_38 {dimension_numbers = #tpu.dot_dimension_numbers<[1], [0], [0], [1], [0, 0, 1, 1], [], []>} : vector<16x16xbf16>, vector<16x128xbf16>, vector<16x128xf32> -> vector<16x128xf32>
    %201 = vector.extract_strided_slice %185 {offsets = [0, 2], sizes = [16, 1], strides = [1, 1]} : vector<16x4xf32> to vector<16x1xf32>
    %202 = vector.broadcast %201 : vector<16x1xf32> to vector<16x128xf32>
    %203 = arith.mulf %200, %202 : vector<16x128xf32>
    %204 = vector.extract_strided_slice %183 {offsets = [0, 48], sizes = [16, 16], strides = [1, 1]} : vector<16x64xbf16> to vector<16x16xbf16>
    %205 = vector.extract_strided_slice %148 {offsets = [0, 384], sizes = [16, 128], strides = [1, 1]} : vector<16x640xbf16> to vector<16x128xbf16>
    %cst_39 = arith.constant dense<0.000000e+00> : vector<16x128xf32>
    %206 = tpu.matmul %204, %205, %cst_39 {dimension_numbers = #tpu.dot_dimension_numbers<[1], [0], [0], [1], [0, 0, 1, 1], [], []>} : vector<16x16xbf16>, vector<16x128xbf16>, vector<16x128xf32> -> vector<16x128xf32>
    %207 = vector.extract_strided_slice %185 {offsets = [0, 3], sizes = [16, 1], strides = [1, 1]} : vector<16x4xf32> to vector<16x1xf32>
    %208 = vector.broadcast %207 : vector<16x1xf32> to vector<16x128xf32>
    %209 = arith.mulf %206, %208 : vector<16x128xf32>
    %210 = tpu.concatenate %191, %197, %203, %209 in 1 : vector<16x128xf32>, vector<16x128xf32>, vector<16x128xf32>, vector<16x128xf32> -> vector<16x512xf32>
    %c0_40 = arith.constant 0 : index
    %c0_41 = arith.constant 0 : index
    %211 = vector.load %arg8[%c0_40, %c0_41] : memref<1x512xf32, #tpu.memory_space<vmem>>, vector<1x512xf32>
    %212 = vector.broadcast %211 : vector<1x512xf32> to vector<16x512xf32>
    %213 = arith.addf %210, %212 : vector<16x512xf32>
    %cst_42 = arith.constant 0.000000e+00 : f32
    %214 = vector.broadcast %cst_42 : f32 to vector<16x512xf32>
    %215 = arith.maximumf %213, %214 : vector<16x512xf32>
    %216 = arith.truncf %215 : vector<16x512xf32> to vector<16x512xbf16>
    %c0_43 = arith.constant 0 : index
    %c0_44 = arith.constant 0 : index
    %217 = vector.load %arg9[%c0_43, %c0_44] : memref<512x256xbf16, #tpu.memory_space<vmem>>, vector<512x256xbf16>
    %cst_45 = arith.constant dense<0.000000e+00> : vector<16x256xf32>
    %218 = tpu.matmul %216, %217, %cst_45 {dimension_numbers = #tpu.dot_dimension_numbers<[1], [0], [0], [1], [0, 0, 1, 1], [], []>} : vector<16x512xbf16>, vector<512x256xbf16>, vector<16x256xf32> -> vector<16x256xf32>
    %219 = arith.truncf %218 : vector<16x256xf32> to vector<16x256xbf16>
    %220 = vector.extract_strided_slice %218 {offsets = [0, 128], sizes = [16, 2], strides = [1, 1]} : vector<16x256xf32> to vector<16x2xf32>
    %221 = vector.extract_strided_slice %220 {offsets = [0, 0], sizes = [16, 1], strides = [1, 1]} : vector<16x2xf32> to vector<16x1xf32>
    %222 = tpu.transpose %221, [1, 0] : vector<16x1xf32> -> vector<1x16xf32>
    %223 = vector.extract_strided_slice %220 {offsets = [0, 1], sizes = [16, 1], strides = [1, 1]} : vector<16x2xf32> to vector<16x1xf32>
    %224 = vector.broadcast %223 : vector<16x1xf32> to vector<16x16xf32>
    %225 = vector.broadcast %222 : vector<1x16xf32> to vector<16x16xf32>
    %226 = arith.addf %224, %225 : vector<16x16xf32>
    %cst_46 = arith.constant 2.000000e-01 : f32
    %227 = vector.broadcast %cst_46 : f32 to vector<16x16xf32>
    %228 = arith.mulf %227, %226 : vector<16x16xf32>
    %229 = arith.maximumf %226, %228 : vector<16x16xf32>
    %230 = vector.extract_strided_slice %0 {offsets = [0, 0], sizes = [16, 16], strides = [1, 1]} : vector<16x64xf32> to vector<16x16xf32>
    %231 = arith.addf %229, %230 : vector<16x16xf32>
    %cst_47 = arith.constant dense<0xFF800000> : vector<16xf32>
    %232 = vector.multi_reduction <maximumf>, %231, %cst_47 [1] : vector<16x16xf32> to vector<16xf32>
    %233 = vector.shape_cast %232 : vector<16xf32> to vector<16x1xf32>
    %234 = vector.broadcast %233 : vector<16x1xf32> to vector<16x16xf32>
    %235 = arith.subf %231, %234 : vector<16x16xf32>
    %236 = math.exp %235 : vector<16x16xf32>
    %237 = arith.truncf %236 : vector<16x16xf32> to vector<16x16xbf16>
    %238 = vector.extract_strided_slice %1 {offsets = [0, 0], sizes = [16, 1], strides = [1, 1]} : vector<64x4xbf16> to vector<16x1xbf16>
    %cst_48 = arith.constant dense<0.000000e+00> : vector<16x1xf32>
    %239 = tpu.matmul %237, %238, %cst_48 {dimension_numbers = #tpu.dot_dimension_numbers<[1], [0], [0], [1], [0, 0, 1, 1], [], []>} : vector<16x16xbf16>, vector<16x1xbf16>, vector<16x1xf32> -> vector<16x1xf32>
    %240 = tpu.reciprocal %239 {approx = true} : vector<16x1xf32> -> vector<16x1xf32>
    %241 = vector.extract_strided_slice %219 {offsets = [0, 0], sizes = [16, 128], strides = [1, 1]} : vector<16x256xbf16> to vector<16x128xbf16>
    %cst_49 = arith.constant dense<0.000000e+00> : vector<16x128xf32>
    %242 = tpu.matmul %237, %241, %cst_49 {dimension_numbers = #tpu.dot_dimension_numbers<[1], [0], [0], [1], [0, 0, 1, 1], [], []>} : vector<16x16xbf16>, vector<16x128xbf16>, vector<16x128xf32> -> vector<16x128xf32>
    %243 = vector.broadcast %240 : vector<16x1xf32> to vector<16x128xf32>
    %244 = arith.mulf %242, %243 : vector<16x128xf32>
    %cst_50 = arith.constant 1.000000e+00 : f32
    %245 = vector.broadcast %cst_50 : f32 to vector<16x128xf32>
    %246 = arith.mulf %244, %245 : vector<16x128xf32>
    %c0_51 = arith.constant 0 : index
    %c0_52 = arith.constant 0 : index
    %247 = vector.load %arg10[%c0_51, %c0_52] : memref<1x128xf32, #tpu.memory_space<vmem>>, vector<1x128xf32>
    %248 = vector.broadcast %247 : vector<1x128xf32> to vector<16x128xf32>
    %249 = arith.addf %246, %248 : vector<16x128xf32>
    %cst_53 = arith.constant 0.000000e+00 : f32
    %250 = vector.broadcast %cst_53 : f32 to vector<16x128xf32>
    %251 = arith.maximumf %249, %250 : vector<16x128xf32>
    %c0_54 = arith.constant 0 : index
    %c0_55 = arith.constant 0 : index
    %252 = vector.load %arg11[%c0_54, %c0_55] : memref<16x128xf32, #tpu.memory_space<vmem>>, vector<16x128xf32>
    tpu.vector_store %arg11[%c0_54, %c0_55], %251 {strides = array<i32>} : memref<16x128xf32, #tpu.memory_space<vmem>>, vector<16x128xf32>,
    return
  }
}

</mosaic_0001>

<llo_original>
// kernel: tpu_custom_call.1
$region0: #{tpu_custom_call.1}
  #allocation0 [shape = 'u32[]', space=smem, size = 0x4, offset = 0x4, fixed_abs, tag = 'smem constant byte address 0x4 - core index']
  #allocation1 [shape = 'u32[72,128]{1,0:T(1,128)}', space=vmem, size = 0x9000, scoped, tag = 'internal scratch']
  %s0 = inlined_call_operand.vmem [shape: f32[16,32], index: 0, kind: input, shape index: {}]
  %s1 = inlined_call_operand.vmem [shape: f32[16,64], index: 1, kind: input, shape index: {}]
  %s2 = inlined_call_operand.vmem [shape: bf16[64,4], index: 2, kind: input, shape index: {}]
  %s3 = inlined_call_operand.hbm [shape: bf16[32,640], index: 3, kind: input, shape index: {}]
  %s4 = inlined_call_operand.vmem [shape: f32[1,512], index: 4, kind: input, shape index: {}]
  %s5 = inlined_call_operand.hbm [shape: bf16[512,640], index: 5, kind: input, shape index: {}]
  %s6 = inlined_call_operand.hbm [shape: f32[1,512], index: 6, kind: input, shape index: {}]
  %s7 = inlined_call_operand.hbm [shape: bf16[512,640], index: 7, kind: input, shape index: {}]
  %s8 = inlined_call_operand.vmem [shape: f32[1,512], index: 8, kind: input, shape index: {}]
  %s9 = inlined_call_operand.hbm [shape: bf16[512,256], index: 9, kind: input, shape index: {}]
  %s10 = inlined_call_operand.vmem [shape: f32[1,128], index: 10, kind: input, shape index: {}]
  %s11 = inlined_call_operand.hbm [shape: f32[16,128], index: 11, kind: output, shape index: {}]
  %s12 = sld [smem:[#allocation0]]
  $region74: #{tpu_custom_call.1} parent=0
    _
  %s14 = ssub.s32 1, %s12
  %s15 = scalar_select 0, %s14, %s12
  $region1: #{tpu_custom_call.1} parent=0
    #allocation2 [shape = 'u8[40960]{0}', space=vmem, size = 0xa000, scoped, tag = 'input window, operand 3, single buffered']
    #allocation3 [shape = 's32[1]{0}', space=sflag, size = 0x4, scoped, tag = 'scoped memory for tpu_custom_call.1']
    #allocation4 [shape = 's32[1]{0}', space=sflag, size = 0x4, scoped, tag = 'scoped memory for tpu_custom_call.1']
    #allocation5 [shape = 'u8[655360]{0}', space=vmem, size = 0xa0000, scoped, tag = 'input window, operand 5, single buffered']
    #allocation6 [shape = 's32[1]{0}', space=sflag, size = 0x4, scoped, tag = 'scoped memory for tpu_custom_call.1']
    #allocation7 [shape = 'u8[2048]{0}', space=vmem, size = 0x800, scoped, tag = 'input window, operand 6, single buffered']
    #allocation8 [shape = 'u8[655360]{0}', space=vmem, size = 0xa0000, scoped, tag = 'input window, operand 7, single buffered']
    #allocation9 [shape = 's32[1]{0}', space=sflag, size = 0x4, scoped, tag = 'scoped memory for tpu_custom_call.1']
    #allocation10 [shape = 'u8[262144]{0}', space=vmem, size = 0x40000, scoped, tag = 'input window, operand 9, single buffered']
    #allocation11 [shape = 'u8[8192]{0}', space=vmem, size = 0x2000, scoped, tag = 'output window, operand 0, single buffered']
    %16 = vsyncpa [#allocation3], 0
    %17 = vsyncpa [#allocation6], 0
    %18 = vsyncpa [#allocation9], 0
    %19 = vsyncpa [#allocation4], 0
    // Predicated region
    $region2: #{tpu_custom_call.1} parent=1 // pred_check
      _
    $region3: #{tpu_custom_call.1} parent=1 // pred_check_branch
      %21 = sbr.rel (0) target = $region5
    $region4: #{tpu_custom_call.1} parent=1 // pred_region
      _
    $region5: #{tpu_custom_call.1} parent=1 // pred_fallthru
      _
    // Predicated region
    $region6: #{tpu_custom_call.1} parent=1 // pred_check
      _
    $region7: #{tpu_custom_call.1} parent=1 // pred_check_branch
      %23 = sbr.rel (0) target = $region9
    $region8: #{tpu_custom_call.1} parent=1 // pred_region
      _
    $region9: #{tpu_custom_call.1} parent=1 // pred_fallthru
      _
    // Predicated region
    $region10: #{tpu_custom_call.1} parent=1 // pred_check
      _
    $region11: #{tpu_custom_call.1} parent=1 // pred_check_branch
      %25 = sbr.rel (0) target = $region13
    $region12: #{tpu_custom_call.1} parent=1 // pred_region
      _
    $region13: #{tpu_custom_call.1} parent=1 // pred_fallthru
      _
    // Predicated region
    $region14: #{tpu_custom_call.1} parent=1 // pred_check
      _
    $region15: #{tpu_custom_call.1} parent=1 // pred_check_branch
      %27 = sbr.rel (0) target = $region17
    $region16: #{tpu_custom_call.1} parent=1 // pred_region
      %29 = vsyncadd [#allocation3], 0
      %s30 = sshll.u32 %s3, 4
      %s31 = int_to_ptr.hbm [resolvable:$true] %s30
      %s32 = sshll.u32 [#allocation2], 4
      %s33 = int_to_ptr.vmem [resolvable:$true] %s32
      %38 = dma.hbm_to_vmem [thread:$0]  %s31, 1280, %s33, [#allocation3], 320, 320, 20
    $region17: #{tpu_custom_call.1} parent=1 // pred_fallthru
      _
    // Predicated region
    $region18: #{tpu_custom_call.1} parent=1 // pred_check
      _
    $region19: #{tpu_custom_call.1} parent=1 // pred_check_branch
      %40 = sbr.rel (0) target = $region21
    $region20: #{tpu_custom_call.1} parent=1 // pred_region
      _
    $region21: #{tpu_custom_call.1} parent=1 // pred_fallthru
      _
    // Predicated region
    $region22: #{tpu_custom_call.1} parent=1 // pred_check
      _
    $region23: #{tpu_custom_call.1} parent=1 // pred_check_branch
      %42 = sbr.rel (0) target = $region25
    $region24: #{tpu_custom_call.1} parent=1 // pred_region
      %44 = vsyncadd [#allocation6], 0
      %s45 = sshll.u32 %s5, 4
      %s46 = int_to_ptr.hbm [resolvable:$true] %s45
      %s47 = sshll.u32 [#allocation5], 4
      %s48 = int_to_ptr.vmem [resolvable:$true] %s47
      %53 = dma.hbm_to_vmem [thread:$0]  %s46, 20480, %s48, [#allocation6], 320, 320, 20
    $region25: #{tpu_custom_call.1} parent=1 // pred_fallthru
      _
    // Predicated region
    $region26: #{tpu_custom_call.1} parent=1 // pred_check
      _
    $region27: #{tpu_custom_call.1} parent=1 // pred_check_branch
      %55 = sbr.rel (0) target = $region29
    $region28: #{tpu_custom_call.1} parent=1 // pred_region
      %57 = vsyncadd [#allocation6], 0
      %s59 = sshll.u32 %s6, 4
      %s60 = int_to_ptr.hbm [resolvable:$true] %s59
      %s61 = sshll.u32 [#allocation7], 4
      %s62 = int_to_ptr.vmem [resolvable:$true] %s61
      %64 = dma.hbm_to_vmem [thread:$0]  %s60, 64, %s62, [#allocation6]
    $region29: #{tpu_custom_call.1} parent=1 // pred_fallthru
      _
    // Predicated region
    $region30: #{tpu_custom_call.1} parent=1 // pred_check
      _
    $region31: #{tpu_custom_call.1} parent=1 // pred_check_branch
      %66 = sbr.rel (0) target = $region33
    $region32: #{tpu_custom_call.1} parent=1 // pred_region
      %68 = vsyncadd [#allocation9], 0
      %s69 = sshll.u32 %s7, 4
      %s70 = int_to_ptr.hbm [resolvable:$true] %s69
      %s71 = sshll.u32 [#allocation8], 4
      %s72 = int_to_ptr.vmem [resolvable:$true] %s71
      %77 = dma.hbm_to_vmem [thread:$0]  %s70, 20480, %s72, [#allocation9], 320, 320, 20
    $region33: #{tpu_custom_call.1} parent=1 // pred_fallthru
      _
    // Predicated region
    $region34: #{tpu_custom_call.1} parent=1 // pred_check
      _
    $region35: #{tpu_custom_call.1} parent=1 // pred_check_branch
      %79 = sbr.rel (0) target = $region37
    $region36: #{tpu_custom_call.1} parent=1 // pred_region
      _
    $region37: #{tpu_custom_call.1} parent=1 // pred_fallthru
      _
    // Predicated region
    $region38: #{tpu_custom_call.1} parent=1 // pred_check
      _
    $region39: #{tpu_custom_call.1} parent=1 // pred_check_branch
      %81 = sbr.rel (0) target = $region41
    $region40: #{tpu_custom_call.1} parent=1 // pred_region
      %83 = vsyncadd [#allocation9], 0
      %s84 = sshll.u32 %s9, 4
      %s85 = int_to_ptr.hbm [resolvable:$true] %s84
      %s86 = sshll.u32 [#allocation10], 4
      %s87 = int_to_ptr.vmem [resolvable:$true] %s86
      %92 = dma.hbm_to_vmem [thread:$0]  %s85, 8192, %s87, [#allocation9], 128, 128, 8
    $region41: #{tpu_custom_call.1} parent=1 // pred_fallthru
      _
    // Predicated region
    $region42: #{tpu_custom_call.1} parent=1 // pred_check
      _
    $region43: #{tpu_custom_call.1} parent=1 // pred_check_branch
      %94 = sbr.rel (0) target = $region45
    $region44: #{tpu_custom_call.1} parent=1 // pred_region
      _
    $region45: #{tpu_custom_call.1} parent=1 // pred_fallthru
      _
    // Predicated region
    $region46: #{tpu_custom_call.1} parent=1 // pred_check
      _
    $region47: #{tpu_custom_call.1} parent=1 // pred_check_branch
      %96 = sbr.rel (0) target = $region49
    $region48: #{tpu_custom_call.1} parent=1 // pred_region
      %98 = dma.done [#allocation3], 1280
    $region49: #{tpu_custom_call.1} parent=1 // pred_fallthru
      _
    // Predicated region
    $region50: #{tpu_custom_call.1} parent=1 // pred_check
      _
    $region51: #{tpu_custom_call.1} parent=1 // pred_check_branch
      %100 = sbr.rel (0) target = $region53
    $region52: #{tpu_custom_call.1} parent=1 // pred_region
      %102 = dma.done [#allocation6], 20480
    $region53: #{tpu_custom_call.1} parent=1 // pred_fallthru
      _
    // Predicated region
    $region54: #{tpu_custom_call.1} parent=1 // pred_check
      _
    $region55: #{tpu_custom_call.1} parent=1 // pred_check_branch
      %104 = sbr.rel (0) target = $region57
    $region56: #{tpu_custom_call.1} parent=1 // pred_region
      %106 = dma.done [#allocation6], 64
    $region57: #{tpu_custom_call.1} parent=1 // pred_fallthru
      _
    // Predicated region
    $region58: #{tpu_custom_call.1} parent=1 // pred_check
      _
    $region59: #{tpu_custom_call.1} parent=1 // pred_check_branch
      %108 = sbr.rel (0) target = $region61
    $region60: #{tpu_custom_call.1} parent=1 // pred_region
      %110 = dma.done [#allocation9], 20480
    $region61: #{tpu_custom_call.1} parent=1 // pred_fallthru
      _
    // Predicated region
    $region62: #{tpu_custom_call.1} parent=1 // pred_check
      _
    $region63: #{tpu_custom_call.1} parent=1 // pred_check_branch
      %112 = sbr.rel (0) target = $region65
    $region64: #{tpu_custom_call.1} parent=1 // pred_region
      %114 = dma.done [#allocation9], 8192
    $region65: #{tpu_custom_call.1} parent=1 // pred_fallthru
      _
    %v116 = vld [vmem:[%s1] sm:$0xff]
    %v117 = vld [vmem:[%s1 + $0x8] sm:$0xff]
    %v118 = vld [vmem:[%s2] sm:$0xf]
    %v119 = vld [vmem:[%s2 + $0x4] sm:$0xf]
    %v120 = vld [vmem:[%s2 + $0x8] sm:$0xf]
    %v121 = vld [vmem:[%s2 + $0xc] sm:$0xf]
    %v122 = vld [vmem:[%s2 + $0x10] sm:$0xf]
    %v123 = vld [vmem:[%s2 + $0x14] sm:$0xf]
    %v124 = vld [vmem:[%s2 + $0x18] sm:$0xf]
    %v125 = vld [vmem:[%s2 + $0x1c] sm:$0xf]
    %v126 = vld [vmem:[%s0] sm:$0xff]
    %v127 = vld [vmem:[%s0 + $0x8] sm:$0xff]
    %v128 = vpack.c.bf16 %v127, %v126
    %v129 = vld [vmem:[#allocation2] sm:$0xff]
    %v130 = vld [vmem:[#allocation2 + $0x8] sm:$0xff]
    %v131 = vld [vmem:[#allocation2 + $0x10] sm:$0xf]
    %v132 = vld [vmem:[#allocation2 + $0x14] sm:$0xff]
    %v133 = vld [vmem:[#allocation2 + $0x1c] sm:$0xff]
    %v134 = vld [vmem:[#allocation2 + $0x24] sm:$0xf]
    %v135 = vld [vmem:[#allocation2 + $0x28] sm:$0xff]
    %v136 = vld [vmem:[#allocation2 + $0x30] sm:$0xff]
    %v137 = vld [vmem:[#allocation2 + $0x38] sm:$0xf]
    %v138 = vld [vmem:[#allocation2 + $0x3c] sm:$0xff]
    %v139 = vld [vmem:[#allocation2 + $0x44] sm:$0xff]
    %v140 = vld [vmem:[#allocation2 + $0x4c] sm:$0xf]
    %v153 = vunpack.c.l.b16 %v129
    %v154 = vunpack.c.h.b16 %v129
    %v155 = vunpack.c.l.b16 %v130
    %v156 = vunpack.c.h.b16 %v130
    %v157 = vunpack.c.l.b16 %v131
    %v158 = vunpack.c.l.b16 %v132
    %v159 = vunpack.c.h.b16 %v132
    %v160 = vunpack.c.l.b16 %v133
    %v161 = vunpack.c.h.b16 %v133
    %v162 = vunpack.c.l.b16 %v134
    %v163 = vunpack.c.l.b16 %v135
    %v164 = vunpack.c.h.b16 %v135
    %v165 = vunpack.c.l.b16 %v136
    %v166 = vunpack.c.h.b16 %v136
    %v167 = vunpack.c.l.b16 %v137
    %v168 = vunpack.c.l.b16 %v138
    %v169 = vunpack.c.h.b16 %v138
    %v170 = vunpack.c.l.b16 %v139
    %v171 = vunpack.c.h.b16 %v139
    %v172 = vunpack.c.l.b16 %v140
    %v173 = vpack.c.b16 %v158, %v153
    %v174 = vpack.c.b16 %v159, %v154
    %v175 = vpack.c.b16 %v160, %v155
    %v176 = vpack.c.b16 %v161, %v156
    %v177 = vpack.c.b16 %v162, %v157
    %v178 = vpack.c.b16 %v168, %v163
    %v179 = vpack.c.b16 %v169, %v164
    %v180 = vpack.c.b16 %v170, %v165
    %v181 = vpack.c.b16 %v171, %v166
    %v182 = vpack.c.b16 %v172, %v167
    %vm193 = vcmask 261120
    %v195 = vsel %vm193, %v128, 0
    %197 = vmatpush.bf16.msra.mxu0 0
    %198 = vmatpush.bf16.msra.mxu0 0
    %199 = vmatpush.bf16.msra.mxu0 0
    %200 = vmatpush.bf16.msra.mxu0 0
    %201 = vmatpush.bf16.msra.mxu0 0
    %202 = vmatpush.bf16.msra.mxu0 0
    %203 = vmatpush.bf16.msra.mxu0 %v178
    %204 = vmatpush.bf16.msra.mxu0 %v173
    %205 = vmatmul.bf16.gmra.mxu0 %v195
    %v206 = vpop.f32.mrf.mxu0
    %v207 = vadd.f32 0.0, %v206
    %v208 = vpop.f32.mrf.mxu0
    %v209 = vadd.f32 0.0, %v208
    %210 = vdwg.mxu0
    %211 = vmatpush.bf16.msra.mxu0 0
    %212 = vmatpush.bf16.msra.mxu0 0
    %213 = vmatpush.bf16.msra.mxu0 0
    %214 = vmatpush.bf16.msra.mxu0 0
    %215 = vmatpush.bf16.msra.mxu0 0
    %216 = vmatpush.bf16.msra.mxu0 0
    %217 = vmatpush.bf16.msra.mxu0 %v179
    %218 = vmatpush.bf16.msra.mxu0 %v174
    %219 = vmatmul.bf16.gmra.mxu0 %v195
    %v220 = vpop.f32.mrf.mxu0
    %v221 = vadd.f32 0.0, %v220
    %v222 = vpop.f32.mrf.mxu0
    %v223 = vadd.f32 0.0, %v222
    %224 = vdwg.mxu0
    %225 = vmatpush.bf16.msra.mxu0 0
    %226 = vmatpush.bf16.msra.mxu0 0
    %227 = vmatpush.bf16.msra.mxu0 0
    %228 = vmatpush.bf16.msra.mxu0 0
    %229 = vmatpush.bf16.msra.mxu0 0
    %230 = vmatpush.bf16.msra.mxu0 0
    %231 = vmatpush.bf16.msra.mxu0 %v180
    %232 = vmatpush.bf16.msra.mxu0 %v175
    %233 = vmatmul.bf16.gmra.mxu0 %v195
    %v234 = vpop.f32.mrf.mxu0
    %v235 = vadd.f32 0.0, %v234
    %v236 = vpop.f32.mrf.mxu0
    %v237 = vadd.f32 0.0, %v236
    %238 = vdwg.mxu0
    %239 = vmatpush.bf16.msra.mxu0 0
    %240 = vmatpush.bf16.msra.mxu0 0
    %241 = vmatpush.bf16.msra.mxu0 0
    %242 = vmatpush.bf16.msra.mxu0 0
    %243 = vmatpush.bf16.msra.mxu0 0
    %244 = vmatpush.bf16.msra.mxu0 0
    %245 = vmatpush.bf16.msra.mxu0 %v181
    %246 = vmatpush.bf16.msra.mxu0 %v176
    %247 = vmatmul.bf16.gmra.mxu0 %v195
    %v248 = vpop.f32.mrf.mxu0
    %v249 = vadd.f32 0.0, %v248
    %v250 = vpop.f32.mrf.mxu0
    %v251 = vadd.f32 0.0, %v250
    %252 = vdwg.mxu0
    %253 = vmatpush.bf16.msra.mxu0 0
    %254 = vmatpush.bf16.msra.mxu0 0
    %255 = vmatpush.bf16.msra.mxu0 0
    %256 = vmatpush.bf16.msra.mxu0 0
    %257 = vmatpush.bf16.msra.mxu0 0
    %258 = vmatpush.bf16.msra.mxu0 0
    %259 = vmatpush.bf16.msra.mxu0 %v182
    %260 = vmatpush.bf16.msra.mxu0 %v177
    %261 = vmatmul.bf16.gmra.mxu0 %v195
    %v262 = vpop.f32.mrf.mxu0
    %v263 = vadd.f32 0.0, %v262
    %v264 = vpop.f32.mrf.mxu0
    %v265 = vadd.f32 0.0, %v264
    %266 = vdwg.mxu0
    %v267 = vpack.c.bf16 %v221, %v207
    %v268 = vpack.c.bf16 %v249, %v235
    %v269 = vpack.c.bf16 %v223, %v209
    %v270 = vpack.c.bf16 %v251, %v237
    %271 = vxpose.xlu0.b32.start [1/16] %v263, 128
    %272 = vxpose.xlu0.b32.cont [2/16] %v265, 128
    %273 = vxpose.xlu0.b32.cont [3/16] 0.0, 128
    %274 = vxpose.xlu0.b32.cont [4/16] 0.0, 128
    %275 = vxpose.xlu0.b32.cont [5/16] 0.0, 128
    %276 = vxpose.xlu0.b32.cont [6/16] 0.0, 128
    %277 = vxpose.xlu0.b32.cont [7/16] 0.0, 128
    %278 = vxpose.xlu0.b32.cont [8/16] 0.0, 128
    %279 = vxpose.xlu0.b32.cont [9/16] 0.0, 128
    %280 = vxpose.xlu0.b32.cont [10/16] 0.0, 128
    %281 = vxpose.xlu0.b32.cont [11/16] 0.0, 128
    %282 = vxpose.xlu0.b32.cont [12/16] 0.0, 128
    %283 = vxpose.xlu0.b32.cont [13/16] 0.0, 128
    %284 = vxpose.xlu0.b32.cont [14/16] 0.0, 128
    %285 = vxpose.xlu0.b32.cont [15/16] 0.0, 128
    %286 = vxpose.xlu0.b32.end [16/16] 0.0, 128
    %v287 = vpop.trf.xlu0
    %v288 = vpop.trf.xlu0
    %v289 = vpop.trf.xlu0
    %v290 = vpop.trf.xlu0
    %v291 = vpop.trf.xlu0
    %v292 = vpop.trf.xlu0
    %v293 = vpop.trf.xlu0
    %v294 = vpop.trf.xlu0
    %v295 = vpop.trf.xlu0
    %v296 = vpop.trf.xlu0
    %v297 = vpop.trf.xlu0
    %v298 = vpop.trf.xlu0
    %v299 = vpop.trf.xlu0
    %v300 = vpop.trf.xlu0
    %v301 = vpop.trf.xlu0
    %v302 = vpop.trf.xlu0
    %304 = vset.pattern.permute.xlu0 4
    %305 = vperm.xlu0 %304, %v263
    %v306 = vpop.permute.xlu0 %305
    %309 = vset.pattern.permute.xlu0 4
    %310 = vperm.xlu0 %309, %v265
    %v311 = vpop.permute.xlu0 %310
    %v313 = vperm.slane %v287, 0
    %v314 = vadd.f32 %v306, %v313
    %v315 = vadd.f32 %v311, %v313
    %316 = vset.pattern.permute.xlu0 5
    %317 = vperm.xlu0 %316, %v263
    %v318 = vpop.permute.xlu0 %317
    %320 = vset.pattern.permute.xlu0 5
    %321 = vperm.xlu0 %320, %v265
    %v322 = vpop.permute.xlu0 %321
    %v324 = vperm.slane %v287, 1
    %v325 = vadd.f32 %v318, %v324
    %v326 = vadd.f32 %v322, %v324
    %327 = vset.pattern.permute.xlu0 6
    %328 = vperm.xlu0 %327, %v263
    %v329 = vpop.permute.xlu0 %328
    %331 = vset.pattern.permute.xlu0 6
    %332 = vperm.xlu0 %331, %v265
    %v333 = vpop.permute.xlu0 %332
    %v335 = vperm.slane %v287, 2
    %v336 = vadd.f32 %v329, %v335
    %v337 = vadd.f32 %v333, %v335
    %338 = vset.pattern.permute.xlu0 7
    %339 = vperm.xlu0 %338, %v263
    %v340 = vpop.permute.xlu0 %339
    %342 = vset.pattern.permute.xlu0 7
    %343 = vperm.xlu0 %342, %v265
    %v344 = vpop.permute.xlu0 %343
    %v346 = vperm.slane %v287, 3
    %v347 = vadd.f32 %v340, %v346
    %v348 = vadd.f32 %v344, %v346
    %351 = vrot.lane.b32.xlu0 %v325, 16
    %v352 = vpop.permute.xlu0 %351
    %353 = vrot.lane.b32.xlu0 %v326, 16
    %v354 = vpop.permute.xlu0 %353
    %359 = vrot.lane.b32.xlu0 %v336, 32
    %v360 = vpop.permute.xlu0 %359
    %361 = vrot.lane.b32.xlu0 %v337, 32
    %v362 = vpop.permute.xlu0 %361
    %367 = vrot.lane.b32.xlu0 %v347, 48
    %v368 = vpop.permute.xlu0 %367
    %369 = vrot.lane.b32.xlu0 %v348, 48
    %v370 = vpop.permute.xlu0 %369
    %vm373 = vcmask 130048
    %v374 = vsel %vm373, %v314, %v352
    %v375 = vsel %vm373, %v315, %v354
    %v376 = vsel %vm193, %v374, %v360
    %v377 = vsel %vm193, %v375, %v362
    %vm378 = vcmask 392192
    %v379 = vsel %vm378, %v376, %v368
    %v380 = vsel %vm378, %v377, %v370
    %v381 = vmul.f32 %v379, 0.2
    %v382 = vmul.f32 %v380, 0.2
    %v383 = vmax.f32 %v379, %v381
    %v384 = vmax.f32 %v380, %v382
    %v385 = vadd.f32 %v383, %v116
    %v386 = vadd.f32 %v384, %v117
    %vm387 = vcmask 523264
    %v388 = vsel %vm387, %v385, -inf
    %389 = vmax.xlane.f32.xlu0 %v388
    %v390 = vpop.xlane.xlu0 %389
    %v391 = vsel %vm387, %v386, -inf
    %392 = vmax.xlane.f32.xlu0 %v391
    %v393 = vpop.xlane.xlu0 %392
    %v394 = vsub.f32 %v385, %v390
    %v395 = vsub.f32 %v386, %v393
    %v396 = vmul.f32 %v394, 1.442695
    %v397 = vpow.pop %v396
    %v398 = vmul.f32 %v395, 1.442695
    %v399 = vpow.pop %v398
    %v400 = vpack.c.bf16 %v397, %v397
    %v401 = vpack.c.bf16 %v399, %v399
    %v404 = vunpack.c.l.b16 %v400
    %v405 = vunpack.c.l.b16 %v401
    %v406 = vpack.c.b16 %v405, %v404
    %v415 = vunpack.c.l.b16 %v118
    %v416 = vunpack.c.l.b16 %v119
    %v417 = vunpack.c.l.b16 %v120
    %v418 = vunpack.c.l.b16 %v121
    %v419 = vunpack.c.l.b16 %v122
    %v420 = vunpack.c.l.b16 %v123
    %v421 = vunpack.c.l.b16 %v124
    %v422 = vunpack.c.l.b16 %v125
    %v423 = vpack.c.b16 %v416, %v415
    %v424 = vpack.c.b16 %v418, %v417
    %v425 = vpack.c.b16 %v420, %v419
    %v426 = vpack.c.b16 %v422, %v421
    %v432 = vsel %vm387, %v406, 0
    %434 = vmatpush.bf16.msra.mxu0 0
    %435 = vmatpush.bf16.msra.mxu0 0
    %436 = vmatpush.bf16.msra.mxu0 0
    %437 = vmatpush.bf16.msra.mxu0 0
    %438 = vmatpush.bf16.msra.mxu0 %v426
    %439 = vmatpush.bf16.msra.mxu0 %v425
    %440 = vmatpush.bf16.msra.mxu0 %v424
    %441 = vmatpush.bf16.msra.mxu0 %v423
    %442 = vmatmul.bf16.gmra.mxu0 %v432
    %v443 = vpop.f32.mrf.mxu0
    %v444 = vadd.f32 0.0, %v443
    %v445 = vpop.f32.mrf.mxu0
    %v446 = vadd.f32 0.0, %v445
    %447 = vdwg.mxu0
    %v448 = vrcp.pop %v444
    %v449 = vrcp.pop %v446
    %v452 = vunpack.c.l.b16 %v267
    %v453 = vunpack.c.l.b16 %v269
    %v454 = vpack.c.b16 %v453, %v452
    %v456 = vsel %vm373, %v406, 0
    %458 = vmatpush.bf16.msra.mxu0 0
    %459 = vmatpush.bf16.msra.mxu0 0
    %460 = vmatpush.bf16.msra.mxu0 0
    %461 = vmatpush.bf16.msra.mxu0 0
    %462 = vmatpush.bf16.msra.mxu0 0
    %463 = vmatpush.bf16.msra.mxu0 0
    %464 = vmatpush.bf16.msra.mxu0 0
    %465 = vmatpush.bf16.msra.mxu0 %v454
    %466 = vmatmul.bf16.gmra.mxu0 %v456
    %v467 = vpop.f32.mrf.mxu0
    %v468 = vadd.f32 0.0, %v467
    %v469 = vpop.f32.mrf.mxu0
    %v470 = vadd.f32 0.0, %v469
    %471 = vdwg.mxu0
    %473 = vset.pattern.permute.xlu0 0
    %474 = vperm.xlu0 %473, %v448
    %v475 = vpop.permute.xlu0 %474
    %478 = vset.pattern.permute.xlu0 0
    %479 = vperm.xlu0 %478, %v449
    %v480 = vpop.permute.xlu0 %479
    %v482 = vmul.f32 %v468, %v475
    %v483 = vmul.f32 %v470, %v480
    %484 = vrot.lane.b32.xlu0 %v406, 112
    %v485 = vpop.permute.xlu0 %484
    %v486 = vunpack.c.h.b16 %v267
    %v487 = vunpack.c.h.b16 %v269
    %v488 = vpack.c.b16 %v487, %v486
    %v491 = vsel %vm373, %v485, 0
    %493 = vmatpush.bf16.msra.mxu0 0
    %494 = vmatpush.bf16.msra.mxu0 0
    %495 = vmatpush.bf16.msra.mxu0 0
    %496 = vmatpush.bf16.msra.mxu0 0
    %497 = vmatpush.bf16.msra.mxu0 0
    %498 = vmatpush.bf16.msra.mxu0 0
    %499 = vmatpush.bf16.msra.mxu0 0
    %500 = vmatpush.bf16.msra.mxu0 %v488
    %501 = vmatmul.bf16.gmra.mxu0 %v491
    %v502 = vpop.f32.mrf.mxu0
    %v503 = vadd.f32 0.0, %v502
    %v504 = vpop.f32.mrf.mxu0
    %v505 = vadd.f32 0.0, %v504
    %506 = vdwg.mxu0
    %507 = vset.pattern.permute.xlu0 1
    %508 = vperm.xlu0 %507, %v448
    %v509 = vpop.permute.xlu0 %508
    %511 = vset.pattern.permute.xlu0 1
    %512 = vperm.xlu0 %511, %v449
    %v513 = vpop.permute.xlu0 %512
    %v515 = vmul.f32 %v503, %v509
    %v516 = vmul.f32 %v505, %v513
    %517 = vrot.lane.b32.xlu0 %v406, 96
    %v518 = vpop.permute.xlu0 %517
    %v521 = vunpack.c.l.b16 %v268
    %v522 = vunpack.c.l.b16 %v270
    %v523 = vpack.c.b16 %v522, %v521
    %v526 = vsel %vm373, %v518, 0
    %528 = vmatpush.bf16.msra.mxu0 0
    %529 = vmatpush.bf16.msra.mxu0 0
    %530 = vmatpush.bf16.msra.mxu0 0
    %531 = vmatpush.bf16.msra.mxu0 0
    %532 = vmatpush.bf16.msra.mxu0 0
    %533 = vmatpush.bf16.msra.mxu0 0
    %534 = vmatpush.bf16.msra.mxu0 0
    %535 = vmatpush.bf16.msra.mxu0 %v523
    %536 = vmatmul.bf16.gmra.mxu0 %v526
    %v537 = vpop.f32.mrf.mxu0
    %v538 = vadd.f32 0.0, %v537
    %v539 = vpop.f32.mrf.mxu0
    %v540 = vadd.f32 0.0, %v539
    %541 = vdwg.mxu0
    %542 = vset.pattern.permute.xlu0 2
    %543 = vperm.xlu0 %542, %v448
    %v544 = vpop.permute.xlu0 %543
    %546 = vset.pattern.permute.xlu0 2
    %547 = vperm.xlu0 %546, %v449
    %v548 = vpop.permute.xlu0 %547
    %v550 = vmul.f32 %v538, %v544
    %v551 = vmul.f32 %v540, %v548
    %552 = vrot.lane.b32.xlu0 %v406, 80
    %v553 = vpop.permute.xlu0 %552
    %v554 = vunpack.c.h.b16 %v268
    %v555 = vunpack.c.h.b16 %v270
    %v556 = vpack.c.b16 %v555, %v554
    %v559 = vsel %vm373, %v553, 0
    %561 = vmatpush.bf16.msra.mxu0 0
    %562 = vmatpush.bf16.msra.mxu0 0
    %563 = vmatpush.bf16.msra.mxu0 0
    %564 = vmatpush.bf16.msra.mxu0 0
    %565 = vmatpush.bf16.msra.mxu0 0
    %566 = vmatpush.bf16.msra.mxu0 0
    %567 = vmatpush.bf16.msra.mxu0 0
    %568 = vmatpush.bf16.msra.mxu0 %v556
    %569 = vmatmul.bf16.gmra.mxu0 %v559
    %v570 = vpop.f32.mrf.mxu0
    %v571 = vadd.f32 0.0, %v570
    %v572 = vpop.f32.mrf.mxu0
    %v573 = vadd.f32 0.0, %v572
    %574 = vdwg.mxu0
    %575 = vset.pattern.permute.xlu0 3
    %576 = vperm.xlu0 %575, %v448
    %v577 = vpop.permute.xlu0 %576
    %579 = vset.pattern.permute.xlu0 3
    %580 = vperm.xlu0 %579, %v449
    %v581 = vpop.permute.xlu0 %580
    %v583 = vmul.f32 %v571, %v577
    %v584 = vmul.f32 %v573, %v581
    %v585 = vld [vmem:[%s4] sm:$0xf]
    %v587 = vperm.slane %v585, 0
    %v588 = vperm.slane %v585, 1
    %v589 = vperm.slane %v585, 2
    %v590 = vperm.slane %v585, 3
    %v595 = vadd.f32 %v482, %v587
    %v596 = vadd.f32 %v515, %v588
    %v597 = vadd.f32 %v550, %v589
    %v598 = vadd.f32 %v583, %v590
    %v599 = vadd.f32 %v483, %v587
    %v600 = vadd.f32 %v516, %v588
    %v601 = vadd.f32 %v551, %v589
    %v602 = vadd.f32 %v584, %v590
    %v603 = vmax.f32 %v595, 0.0
    %v604 = vmax.f32 %v596, 0.0
    %v605 = vmax.f32 %v597, 0.0
    %v606 = vmax.f32 %v598, 0.0
    %v607 = vmax.f32 %v599, 0.0
    %v608 = vmax.f32 %v600, 0.0
    %v609 = vmax.f32 %v601, 0.0
    %v610 = vmax.f32 %v602, 0.0
    %v611 = vpack.c.bf16 %v607, %v603
    %v612 = vpack.c.bf16 %v608, %v604
    %v613 = vpack.c.bf16 %v609, %v605
    %v614 = vpack.c.bf16 %v610, %v606
    %v615 = vld [vmem:[#allocation5] sm:$0xff]
    %v616 = vld [vmem:[#allocation5 + $0x8] sm:$0xff]
    %v617 = vld [vmem:[#allocation5 + $0x10] sm:$0xf]
    %v618 = vld [vmem:[#allocation5 + $0x14] sm:$0xff]
    %v619 = vld [vmem:[#allocation5 + $0x1c] sm:$0xff]
    %v620 = vld [vmem:[#allocation5 + $0x24] sm:$0xf]
    %v621 = vld [vmem:[#allocation5 + $0x28] sm:$0xff]
    %v622 = vld [vmem:[#allocation5 + $0x30] sm:$0xff]
    %v623 = vld [vmem:[#allocation5 + $0x38] sm:$0xf]
    %v624 = vld [vmem:[#allocation5 + $0x3c] sm:$0xff]
    %v625 = vld [vmem:[#allocation5 + $0x44] sm:$0xff]
    %v626 = vld [vmem:[#allocation5 + $0x4c] sm:$0xf]
    %v627 = vld [vmem:[#allocation5 + $0x50] sm:$0xff]
    %v628 = vld [vmem:[#allocation5 + $0x58] sm:$0xff]
    %v629 = vld [vmem:[#allocation5 + $0x60] sm:$0xf]
    %v630 = vld [vmem:[#allocation5 + $0x64] sm:$0xff]
    %v631 = vld [vmem:[#allocation5 + $0x6c] sm:$0xff]
    %v632 = vld [vmem:[#allocation5 + $0x74] sm:$0xf]
    %v633 = vld [vmem:[#allocation5 + $0x78] sm:$0xff]
    %v634 = vld [vmem:[#allocation5 + $0x80] sm:$0xff]
    %v635 = vld [vmem:[#allocation5 + $0x88] sm:$0xf]
    %v636 = vld [vmem:[#allocation5 + $0x8c] sm:$0xff]
    %v637 = vld [vmem:[#allocation5 + $0x94] sm:$0xff]
    %v638 = vld [vmem:[#allocation5 + $0x9c] sm:$0xf]
    %v639 = vld [vmem:[#allocation5 + $0xa0] sm:$0xff]
    %v640 = vld [vmem:[#allocation5 + $0xa8] sm:$0xff]
    %v641 = vld [vmem:[#allocation5 + $0xb0] sm:$0xf]
    %v642 = vld [vmem:[#allocation5 + $0xb4] sm:$0xff]
    %v643 = vld [vmem:[#allocation5 + $0xbc] sm:$0xff]
    %v644 = vld [vmem:[#allocation5 + $0xc4] sm:$0xf]
    %v645 = vld [vmem:[#allocation5 + $0xc8] sm:$0xff]
    %v646 = vld [vmem:[#allocation5 + $0xd0] sm:$0xff]
    %v647 = vld [vmem:[#allocation5 + $0xd8] sm:$0xf]
    %v648 = vld [vmem:[#allocation5 + $0xdc] sm:$0xff]
    %v649 = vld [vmem:[#allocation5 + $0xe4] sm:$0xff]
    %v650 = vld [vmem:[#allocation5 + $0xec] sm:$0xf]
    %v651 = vld [vmem:[#allocation5 + $0xf0] sm:$0xff]
    %v652 = vld [vmem:[#allocation5 + $0xf8] sm:$0xff]
    %v653 = vld [vmem:[#allocation5 + $0x100] sm:$0xf]
    %v654 = vld [vmem:[#allocation5 + $0x104] sm:$0xff]
    %v655 = vld [vmem:[#allocation5 + $0x10c] sm:$0xff]
    %v656 = vld [vmem:[#allocation5 + $0x114] sm:$0xf]
    %v657 = vld [vmem:[#allocation5 + $0x118] sm:$0xff]
    %v658 = vld [vmem:[#allocation5 + $0x120] sm:$0xff]
    %v659 = vld [vmem:[#allocation5 + $0x128] sm:$0xf]
    %v660 = vld [vmem:[#allocation5 + $0x12c] sm:$0xff]
    %v661 = vld [vmem:[#allocation5 + $0x134] sm:$0xff]
    %v662 = vld [vmem:[#allocation5 + $0x13c] sm:$0xf]
    %v663 = vld [vmem:[#allocation5 + $0x140] sm:$0xff]
    %v664 = vld [vmem:[#allocation5 + $0x148] sm:$0xff]
    %v665 = vld [vmem:[#allocation5 + $0x150] sm:$0xf]
    %v666 = vld [vmem:[#allocation5 + $0x154] sm:$0xff]
    %v667 = vld [vmem:[#allocation5 + $0x15c] sm:$0xff]
    %v668 = vld [vmem:[#allocation5 + $0x164] sm:$0xf]
    %v669 = vld [vmem:[#allocation5 + $0x168] sm:$0xff]
    %v670 = vld [vmem:[#allocation5 + $0x170] sm:$0xff]
    %v671 = vld [vmem:[#allocation5 + $0x178] sm:$0xf]
    %v672 = vld [vmem:[#allocation5 + $0x17c] sm:$0xff]
    %v673 = vld [vmem:[#allocation5 + $0x184] sm:$0xff]
    %v674 = vld [vmem:[#allocation5 + $0x18c] sm:$0xf]
    %v675 = vld [vmem:[#allocation5 + $0x190] sm:$0xff]
    %v676 = vld [vmem:[#allocation5 + $0x198] sm:$0xff]
    %v677 = vld [vmem:[#allocation5 + $0x1a0] sm:$0xf]
    %v678 = vld [vmem:[#allocation5 + $0x1a4] sm:$0xff]
    %v679 = vld [vmem:[#allocation5 + $0x1ac] sm:$0xff]
    %v680 = vld [vmem:[#allocation5 + $0x1b4] sm:$0xf]
    %v681 = vld [vmem:[#allocation5 + $0x1b8] sm:$0xff]
    %v682 = vld [vmem:[#allocation5 + $0x1c0] sm:$0xff]
    %v683 = vld [vmem:[#allocation5 + $0x1c8] sm:$0xf]
    %v684 = vld [vmem:[#allocation5 + $0x1cc] sm:$0xff]
    %v685 = vld [vmem:[#allocation5 + $0x1d4] sm:$0xff]
    %v686 = vld [vmem:[#allocation5 + $0x1dc] sm:$0xf]
    %v687 = vld [vmem:[#allocation5 + $0x1e0] sm:$0xff]
    %v688 = vld [vmem:[#allocation5 + $0x1e8] sm:$0xff]
    %v689 = vld [vmem:[#allocation5 + $0x1f0] sm:$0xf]
    %v690 = vld [vmem:[#allocation5 + $0x1f4] sm:$0xff]
    %v691 = vld [vmem:[#allocation5 + $0x1fc] sm:$0xff]
    %v692 = vld [vmem:[#allocation5 + $0x204] sm:$0xf]
    %v693 = vld [vmem:[#allocation5 + $0x208] sm:$0xff]
    %v694 = vld [vmem:[#allocation5 + $0x210] sm:$0xff]
    %v695 = vld [vmem:[#allocation5 + $0x218] sm:$0xf]
    %v696 = vld [vmem:[#allocation5 + $0x21c] sm:$0xff]
    %v697 = vld [vmem:[#allocation5 + $0x224] sm:$0xff]
    %v698 = vld [vmem:[#allocation5 + $0x22c] sm:$0xf]
    %v699 = vld [vmem:[#allocation5 + $0x230] sm:$0xff]
    %v700 = vld [vmem:[#allocation5 + $0x238] sm:$0xff]
    %v701 = vld [vmem:[#allocation5 + $0x240] sm:$0xf]
    %v702 = vld [vmem:[#allocation5 + $0x244] sm:$0xff]
    %v703 = vld [vmem:[#allocation5 + $0x24c] sm:$0xff]
    %v704 = vld [vmem:[#allocation5 + $0x254] sm:$0xf]
    %v705 = vld [vmem:[#allocation5 + $0x258] sm:$0xff]
    %v706 = vld [vmem:[#allocation5 + $0x260] sm:$0xff]
    %v707 = vld [vmem:[#allocation5 + $0x268] sm:$0xf]
    %v708 = vld [vmem:[#allocation5 + $0x26c] sm:$0xff]
    %v709 = vld [vmem:[#allocation5 + $0x274] sm:$0xff]
    %v710 = vld [vmem:[#allocation5 + $0x27c] sm:$0xf]
    %v711 = vld [vmem:[#allocation5 + $0x280] sm:$0xff]
    %v712 = vld [vmem:[#allocation5 + $0x288] sm:$0xff]
    %v713 = vld [vmem:[#allocation5 + $0x290] sm:$0xf]
    %v714 = vld [vmem:[#allocation5 + $0x294] sm:$0xff]
    %v715 = vld [vmem:[#allocation5 + $0x29c] sm:$0xff]
    %v716 = vld [vmem:[#allocation5 + $0x2a4] sm:$0xf]
    %v717 = vld [vmem:[#allocation5 + $0x2a8] sm:$0xff]
    %v718 = vld [vmem:[#allocation5 + $0x2b0] sm:$0xff]
    %v719 = vld [vmem:[#allocation5 + $0x2b8] sm:$0xf]
    %v720 = vld [vmem:[#allocation5 + $0x2bc] sm:$0xff]
    %v721 = vld [vmem:[#allocation5 + $0x2c4] sm:$0xff]
    %v722 = vld [vmem:[#allocation5 + $0x2cc] sm:$0xf]
    %v723 = vld [vmem:[#allocation5 + $0x2d0] sm:$0xff]
    %v724 = vld [vmem:[#allocation5 + $0x2d8] sm:$0xff]
    %v725 = vld [vmem:[#allocation5 + $0x2e0] sm:$0xf]
    %v726 = vld [vmem:[#allocation5 + $0x2e4] sm:$0xff]
    %v727 = vld [vmem:[#allocation5 + $0x2ec] sm:$0xff]
    %v728 = vld [vmem:[#allocation5 + $0x2f4] sm:$0xf]
    %v729 = vld [vmem:[#allocation5 + $0x2f8] sm:$0xff]
    %v730 = vld [vmem:[#allocation5 + $0x300] sm:$0xff]
    %v731 = vld [vmem:[#allocation5 + $0x308] sm:$0xf]
    %v732 = vld [vmem:[#allocation5 + $0x30c] sm:$0xff]
    %v733 = vld [vmem:[#allocation5 + $0x314] sm:$0xff]
    %v734 = vld [vmem:[#allocation5 + $0x31c] sm:$0xf]
    %v735 = vld [vmem:[#allocation5 + $0x320] sm:$0xff]
    %v736 = vld [vmem:[#allocation5 + $0x328] sm:$0xff]
    %v737 = vld [vmem:[#allocation5 + $0x330] sm:$0xf]
    %v738 = vld [vmem:[#allocation5 + $0x334] sm:$0xff]
    %v739 = vld [vmem:[#allocation5 + $0x33c] sm:$0xff]
    %v740 = vld [vmem:[#allocation5 + $0x344] sm:$0xf]
    %v741 = vld [vmem:[#allocation5 + $0x348] sm:$0xff]
    %v742 = vld [vmem:[#allocation5 + $0x350] sm:$0xff]
    %v743 = vld [vmem:[#allocation5 + $0x358] sm:$0xf]
    %v744 = vld [vmem:[#allocation5 + $0x35c] sm:$0xff]
    %v745 = vld [vmem:[#allocation5 + $0x364] sm:$0xff]
    %v746 = vld [vmem:[#allocation5 + $0x36c] sm:$0xf]
    %v747 = vld [vmem:[#allocation5 + $0x370] sm:$0xff]
    %v748 = vld [vmem:[#allocation5 + $0x378] sm:$0xff]
    %v749 = vld [vmem:[#allocation5 + $0x380] sm:$0xf]
    %v750 = vld [vmem:[#allocation5 + $0x384] sm:$0xff]
    %v751 = vld [vmem:[#allocation5 + $0x38c] sm:$0xff]
    %v752 = vld [vmem:[#allocation5 + $0x394] sm:$0xf]
    %v753 = vld [vmem:[#allocation5 + $0x398] sm:$0xff]
    %v754 = vld [vmem:[#allocation5 + $0x3a0] sm:$0xff]
    %v755 = vld [vmem:[#allocation5 + $0x3a8] sm:$0xf]
    %v756 = vld [vmem:[#allocation5 + $0x3ac] sm:$0xff]
    %v757 = vld [vmem:[#allocation5 + $0x3b4] sm:$0xff]
    %v758 = vld [vmem:[#allocation5 + $0x3bc] sm:$0xf]
    %v759 = vld [vmem:[#allocation5 + $0x3c0] sm:$0xff]
    %v760 = vld [vmem:[#allocation5 + $0x3c8] sm:$0xff]
    %v761 = vld [vmem:[#allocation5 + $0x3d0] sm:$0xf]
    %v762 = vld [vmem:[#allocation5 + $0x3d4] sm:$0xff]
    %v763 = vld [vmem:[#allocation5 + $0x3dc] sm:$0xff]
    %v764 = vld [vmem:[#allocation5 + $0x3e4] sm:$0xf]
    %v765 = vld [vmem:[#allocation5 + $0x3e8] sm:$0xff]
    %v766 = vld [vmem:[#allocation5 + $0x3f0] sm:$0xff]
    %v767 = vld [vmem:[#allocation5 + $0x3f8] sm:$0xf]
    %v768 = vld [vmem:[#allocation5 + $0x3fc] sm:$0xff]
    %v769 = vld [vmem:[#allocation5 + $0x404] sm:$0xff]
    %v770 = vld [vmem:[#allocation5 + $0x40c] sm:$0xf]
    %v771 = vld [vmem:[#allocation5 + $0x410] sm:$0xff]
    %v772 = vld [vmem:[#allocation5 + $0x418] sm:$0xff]
    %v773 = vld [vmem:[#allocation5 + $0x420] sm:$0xf]
    %v774 = vld [vmem:[#allocation5 + $0x424] sm:$0xff]
    %v775 = vld [vmem:[#allocation5 + $0x42c] sm:$0xff]
    %v776 = vld [vmem:[#allocation5 + $0x434] sm:$0xf]
    %v777 = vld [vmem:[#allocation5 + $0x438] sm:$0xff]
    %v778 = vld [vmem:[#allocation5 + $0x440] sm:$0xff]
    %v779 = vld [vmem:[#allocation5 + $0x448] sm:$0xf]
    %v780 = vld [vmem:[#allocation5 + $0x44c] sm:$0xff]
    %v781 = vld [vmem:[#allocation5 + $0x454] sm:$0xff]
    %v782 = vld [vmem:[#allocation5 + $0x45c] sm:$0xf]
    %v783 = vld [vmem:[#allocation5 + $0x460] sm:$0xff]
    %v784 = vld [vmem:[#allocation5 + $0x468] sm:$0xff]
    %v785 = vld [vmem:[#allocation5 + $0x470] sm:$0xf]
    %v786 = vld [vmem:[#allocation5 + $0x474] sm:$0xff]
    %v787 = vld [vmem:[#allocation5 + $0x47c] sm:$0xff]
    %v788 = vld [vmem:[#allocation5 + $0x484] sm:$0xf]
    %v789 = vld [vmem:[#allocation5 + $0x488] sm:$0xff]
    %v790 = vld [vmem:[#allocation5 + $0x490] sm:$0xff]
    %v791 = vld [vmem:[#allocation5 + $0x498] sm:$0xf]
    %v792 = vld [vmem:[#allocation5 + $0x49c] sm:$0xff]
    %v793 = vld [vmem:[#allocation5 + $0x4a4] sm:$0xff]
    %v794 = vld [vmem:[#allocation5 + $0x4ac] sm:$0xf]
    %v795 = vld [vmem:[#allocation5 + $0x4b0] sm:$0xff]
    %v796 = vld [vmem:[#allocation5 + $0x4b8] sm:$0xff]
    %v797 = vld [vmem:[#allocation5 + $0x4c0] sm:$0xf]
    %v798 = vld [vmem:[#allocation5 + $0x4c4] sm:$0xff]
    %v799 = vld [vmem:[#allocation5 + $0x4cc] sm:$0xff]
    %v800 = vld [vmem:[#allocation5 + $0x4d4] sm:$0xf]
    %v801 = vld [vmem:[#allocation5 + $0x4d8] sm:$0xff]
    %v802 = vld [vmem:[#allocation5 + $0x4e0] sm:$0xff]
    %v803 = vld [vmem:[#allocation5 + $0x4e8] sm:$0xf]
    %v804 = vld [vmem:[#allocation5 + $0x4ec] sm:$0xff]
    %v805 = vld [vmem:[#allocation5 + $0x4f4] sm:$0xff]
    %v806 = vld [vmem:[#allocation5 + $0x4fc] sm:$0xf]
    %v999 = vunpack.c.l.b16 %v615
    %v1000 = vunpack.c.h.b16 %v615
    %v1001 = vunpack.c.l.b16 %v616
    %v1002 = vunpack.c.h.b16 %v616
    %v1003 = vunpack.c.l.b16 %v617
    %v1004 = vunpack.c.l.b16 %v618
    %v1005 = vunpack.c.h.b16 %v618
    %v1006 = vunpack.c.l.b16 %v619
    %v1007 = vunpack.c.h.b16 %v619
    %v1008 = vunpack.c.l.b16 %v620
    %v1009 = vunpack.c.l.b16 %v621
    %v1010 = vunpack.c.h.b16 %v621
    %v1011 = vunpack.c.l.b16 %v622
    %v1012 = vunpack.c.h.b16 %v622
    %v1013 = vunpack.c.l.b16 %v623
    %v1014 = vunpack.c.l.b16 %v624
    %v1015 = vunpack.c.h.b16 %v624
    %v1016 = vunpack.c.l.b16 %v625
    %v1017 = vunpack.c.h.b16 %v625
    %v1018 = vunpack.c.l.b16 %v626
    %v1019 = vunpack.c.l.b16 %v627
    %v1020 = vunpack.c.h.b16 %v627
    %v1021 = vunpack.c.l.b16 %v628
    %v1022 = vunpack.c.h.b16 %v628
    %v1023 = vunpack.c.l.b16 %v629
    %v1024 = vunpack.c.l.b16 %v630
    %v1025 = vunpack.c.h.b16 %v630
    %v1026 = vunpack.c.l.b16 %v631
    %v1027 = vunpack.c.h.b16 %v631
    %v1028 = vunpack.c.l.b16 %v632
    %v1029 = vunpack.c.l.b16 %v633
    %v1030 = vunpack.c.h.b16 %v633
    %v1031 = vunpack.c.l.b16 %v634
    %v1032 = vunpack.c.h.b16 %v634
    %v1033 = vunpack.c.l.b16 %v635
    %v1034 = vunpack.c.l.b16 %v636
    %v1035 = vunpack.c.h.b16 %v636
    %v1036 = vunpack.c.l.b16 %v637
    %v1037 = vunpack.c.h.b16 %v637
    %v1038 = vunpack.c.l.b16 %v638
    %v1039 = vunpack.c.l.b16 %v639
    %v1040 = vunpack.c.h.b16 %v639
    %v1041 = vunpack.c.l.b16 %v640
    %v1042 = vunpack.c.h.b16 %v640
    %v1043 = vunpack.c.l.b16 %v641
    %v1044 = vunpack.c.l.b16 %v642
    %v1045 = vunpack.c.h.b16 %v642
    %v1046 = vunpack.c.l.b16 %v643
    %v1047 = vunpack.c.h.b16 %v643
    %v1048 = vunpack.c.l.b16 %v644
    %v1049 = vunpack.c.l.b16 %v645
    %v1050 = vunpack.c.h.b16 %v645
    %v1051 = vunpack.c.l.b16 %v646
    %v1052 = vunpack.c.h.b16 %v646
    %v1053 = vunpack.c.l.b16 %v647
    %v1054 = vunpack.c.l.b16 %v648
    %v1055 = vunpack.c.h.b16 %v648
    %v1056 = vunpack.c.l.b16 %v649
    %v1057 = vunpack.c.h.b16 %v649
    %v1058 = vunpack.c.l.b16 %v650
    %v1059 = vunpack.c.l.b16 %v651
    %v1060 = vunpack.c.h.b16 %v651
    %v1061 = vunpack.c.l.b16 %v652
    %v1062 = vunpack.c.h.b16 %v652
    %v1063 = vunpack.c.l.b16 %v653
    %v1064 = vunpack.c.l.b16 %v654
    %v1065 = vunpack.c.h.b16 %v654
    %v1066 = vunpack.c.l.b16 %v655
    %v1067 = vunpack.c.h.b16 %v655
    %v1068 = vunpack.c.l.b16 %v656
    %v1069 = vunpack.c.l.b16 %v657
    %v1070 = vunpack.c.h.b16 %v657
    %v1071 = vunpack.c.l.b16 %v658
    %v1072 = vunpack.c.h.b16 %v658
    %v1073 = vunpack.c.l.b16 %v659
    %v1074 = vunpack.c.l.b16 %v660
    %v1075 = vunpack.c.h.b16 %v660
    %v1076 = vunpack.c.l.b16 %v661
    %v1077 = vunpack.c.h.b16 %v661
    %v1078 = vunpack.c.l.b16 %v662
    %v1079 = vunpack.c.l.b16 %v663
    %v1080 = vunpack.c.h.b16 %v663
    %v1081 = vunpack.c.l.b16 %v664
    %v1082 = vunpack.c.h.b16 %v664
    %v1083 = vunpack.c.l.b16 %v665
    %v1084 = vunpack.c.l.b16 %v666
    %v1085 = vunpack.c.h.b16 %v666
    %v1086 = vunpack.c.l.b16 %v667
    %v1087 = vunpack.c.h.b16 %v667
    %v1088 = vunpack.c.l.b16 %v668
    %v1089 = vunpack.c.l.b16 %v669
    %v1090 = vunpack.c.h.b16 %v669
    %v1091 = vunpack.c.l.b16 %v670
    %v1092 = vunpack.c.h.b16 %v670
    %v1093 = vunpack.c.l.b16 %v671
    %v1094 = vunpack.c.l.b16 %v672
    %v1095 = vunpack.c.h.b16 %v672
    %v1096 = vunpack.c.l.b16 %v673
    %v1097 = vunpack.c.h.b16 %v673
    %v1098 = vunpack.c.l.b16 %v674
    %v1099 = vunpack.c.l.b16 %v675
    %v1100 = vunpack.c.h.b16 %v675
    %v1101 = vunpack.c.l.b16 %v676
    %v1102 = vunpack.c.h.b16 %v676
    %v1103 = vunpack.c.l.b16 %v677
    %v1104 = vunpack.c.l.b16 %v678
    %v1105 = vunpack.c.h.b16 %v678
    %v1106 = vunpack.c.l.b16 %v679
    %v1107 = vunpack.c.h.b16 %v679
    %v1108 = vunpack.c.l.b16 %v680
    %v1109 = vunpack.c.l.b16 %v681
    %v1110 = vunpack.c.h.b16 %v681
    %v1111 = vunpack.c.l.b16 %v682
    %v1112 = vunpack.c.h.b16 %v682
    %v1113 = vunpack.c.l.b16 %v683
    %v1114 = vunpack.c.l.b16 %v684
    %v1115 = vunpack.c.h.b16 %v684
    %v1116 = vunpack.c.l.b16 %v685
    %v1117 = vunpack.c.h.b16 %v685
    %v1118 = vunpack.c.l.b16 %v686
    %v1119 = vunpack.c.l.b16 %v687
    %v1120 = vunpack.c.h.b16 %v687
    %v1121 = vunpack.c.l.b16 %v688
    %v1122 = vunpack.c.h.b16 %v688
    %v1123 = vunpack.c.l.b16 %v689
    %v1124 = vunpack.c.l.b16 %v690
    %v1125 = vunpack.c.h.b16 %v690
    %v1126 = vunpack.c.l.b16 %v691
    %v1127 = vunpack.c.h.b16 %v691
    %v1128 = vunpack.c.l.b16 %v692
    %v1129 = vunpack.c.l.b16 %v693
    %v1130 = vunpack.c.h.b16 %v693
    %v1131 = vunpack.c.l.b16 %v694
    %v1132 = vunpack.c.h.b16 %v694
    %v1133 = vunpack.c.l.b16 %v695
    %v1134 = vunpack.c.l.b16 %v696
    %v1135 = vunpack.c.h.b16 %v696
    %v1136 = vunpack.c.l.b16 %v697
    %v1137 = vunpack.c.h.b16 %v697
    %v1138 = vunpack.c.l.b16 %v698
    %v1139 = vunpack.c.l.b16 %v699
    %v1140 = vunpack.c.h.b16 %v699
    %v1141 = vunpack.c.l.b16 %v700
    %v1142 = vunpack.c.h.b16 %v700
    %v1143 = vunpack.c.l.b16 %v701
    %v1144 = vunpack.c.l.b16 %v702
    %v1145 = vunpack.c.h.b16 %v702
    %v1146 = vunpack.c.l.b16 %v703
    %v1147 = vunpack.c.h.b16 %v703
    %v1148 = vunpack.c.l.b16 %v704
    %v1149 = vunpack.c.l.b16 %v705
    %v1150 = vunpack.c.h.b16 %v705
    %v1151 = vunpack.c.l.b16 %v706
    %v1152 = vunpack.c.h.b16 %v706
    %v1153 = vunpack.c.l.b16 %v707
    %v1154 = vunpack.c.l.b16 %v708
    %v1155 = vunpack.c.h.b16 %v708
    %v1156 = vunpack.c.l.b16 %v709
    %v1157 = vunpack.c.h.b16 %v709
    %v1158 = vunpack.c.l.b16 %v710
    %v1159 = vunpack.c.l.b16 %v711
    %v1160 = vunpack.c.h.b16 %v711
    %v1161 = vunpack.c.l.b16 %v712
    %v1162 = vunpack.c.h.b16 %v712
    %v1163 = vunpack.c.l.b16 %v713
    %v1164 = vunpack.c.l.b16 %v714
    %v1165 = vunpack.c.h.b16 %v714
    %v1166 = vunpack.c.l.b16 %v715
    %v1167 = vunpack.c.h.b16 %v715
    %v1168 = vunpack.c.l.b16 %v716
    %v1169 = vunpack.c.l.b16 %v717
    %v1170 = vunpack.c.h.b16 %v717
    %v1171 = vunpack.c.l.b16 %v718
    %v1172 = vunpack.c.h.b16 %v718
    %v1173 = vunpack.c.l.b16 %v719
    %v1174 = vunpack.c.l.b16 %v720
    %v1175 = vunpack.c.h.b16 %v720
    %v1176 = vunpack.c.l.b16 %v721
    %v1177 = vunpack.c.h.b16 %v721
    %v1178 = vunpack.c.l.b16 %v722
    %v1179 = vunpack.c.l.b16 %v723
    %v1180 = vunpack.c.h.b16 %v723
    %v1181 = vunpack.c.l.b16 %v724
    %v1182 = vunpack.c.h.b16 %v724
    %v1183 = vunpack.c.l.b16 %v725
    %v1184 = vunpack.c.l.b16 %v726
    %v1185 = vunpack.c.h.b16 %v726
    %v1186 = vunpack.c.l.b16 %v727
    %v1187 = vunpack.c.h.b16 %v727
    %v1188 = vunpack.c.l.b16 %v728
    %v1189 = vunpack.c.l.b16 %v729
    %v1190 = vunpack.c.h.b16 %v729
    %v1191 = vunpack.c.l.b16 %v730
    %v1192 = vunpack.c.h.b16 %v730
    %v1193 = vunpack.c.l.b16 %v731
    %v1194 = vunpack.c.l.b16 %v732
    %v1195 = vunpack.c.h.b16 %v732
    %v1196 = vunpack.c.l.b16 %v733
    %v1197 = vunpack.c.h.b16 %v733
    %v1198 = vunpack.c.l.b16 %v734
    %v1199 = vunpack.c.l.b16 %v735
    %v1200 = vunpack.c.h.b16 %v735
    %v1201 = vunpack.c.l.b16 %v736
    %v1202 = vunpack.c.h.b16 %v736
    %v1203 = vunpack.c.l.b16 %v737
    %v1204 = vunpack.c.l.b16 %v738
    %v1205 = vunpack.c.h.b16 %v738
    %v1206 = vunpack.c.l.b16 %v739
    %v1207 = vunpack.c.h.b16 %v739
    %v1208 = vunpack.c.l.b16 %v740
    %v1209 = vunpack.c.l.b16 %v741
    %v1210 = vunpack.c.h.b16 %v741
    %v1211 = vunpack.c.l.b16 %v742
    %v1212 = vunpack.c.h.b16 %v742
    %v1213 = vunpack.c.l.b16 %v743
    %v1214 = vunpack.c.l.b16 %v744
    %v1215 = vunpack.c.h.b16 %v744
    %v1216 = vunpack.c.l.b16 %v745
    %v1217 = vunpack.c.h.b16 %v745
    %v1218 = vunpack.c.l.b16 %v746
    %v1219 = vunpack.c.l.b16 %v747
    %v1220 = vunpack.c.h.b16 %v747
    %v1221 = vunpack.c.l.b16 %v748
    %v1222 = vunpack.c.h.b16 %v748
    %v1223 = vunpack.c.l.b16 %v749
    %v1224 = vunpack.c.l.b16 %v750
    %v1225 = vunpack.c.h.b16 %v750
    %v1226 = vunpack.c.l.b16 %v751
    %v1227 = vunpack.c.h.b16 %v751
    %v1228 = vunpack.c.l.b16 %v752
    %v1229 = vunpack.c.l.b16 %v753
    %v1230 = vunpack.c.h.b16 %v753
    %v1231 = vunpack.c.l.b16 %v754
    %v1232 = vunpack.c.h.b16 %v754
    %v1233 = vunpack.c.l.b16 %v755
    %v1234 = vunpack.c.l.b16 %v756
    %v1235 = vunpack.c.h.b16 %v756
    %v1236 = vunpack.c.l.b16 %v757
    %v1237 = vunpack.c.h.b16 %v757
    %v1238 = vunpack.c.l.b16 %v758
    %v1239 = vunpack.c.l.b16 %v759
    %v1240 = vunpack.c.h.b16 %v759
    %v1241 = vunpack.c.l.b16 %v760
    %v1242 = vunpack.c.h.b16 %v760
    %v1243 = vunpack.c.l.b16 %v761
    %v1244 = vunpack.c.l.b16 %v762
    %v1245 = vunpack.c.h.b16 %v762
    %v1246 = vunpack.c.l.b16 %v763
    %v1247 = vunpack.c.h.b16 %v763
    %v1248 = vunpack.c.l.b16 %v764
    %v1249 = vunpack.c.l.b16 %v765
    %v1250 = vunpack.c.h.b16 %v765
    %v1251 = vunpack.c.l.b16 %v766
    %v1252 = vunpack.c.h.b16 %v766
    %v1253 = vunpack.c.l.b16 %v767
    %v1254 = vunpack.c.l.b16 %v768
    %v1255 = vunpack.c.h.b16 %v768
    %v1256 = vunpack.c.l.b16 %v769
    %v1257 = vunpack.c.h.b16 %v769
    %v1258 = vunpack.c.l.b16 %v770
    %v1259 = vunpack.c.l.b16 %v771
    %v1260 = vunpack.c.h.b16 %v771
    %v1261 = vunpack.c.l.b16 %v772
    %v1262 = vunpack.c.h.b16 %v772
    %v1263 = vunpack.c.l.b16 %v773
    %v1264 = vunpack.c.l.b16 %v774
    %v1265 = vunpack.c.h.b16 %v774
    %v1266 = vunpack.c.l.b16 %v775
    %v1267 = vunpack.c.h.b16 %v775
    %v1268 = vunpack.c.l.b16 %v776
    %v1269 = vunpack.c.l.b16 %v777
    %v1270 = vunpack.c.h.b16 %v777
    %v1271 = vunpack.c.l.b16 %v778
    %v1272 = vunpack.c.h.b16 %v778
    %v1273 = vunpack.c.l.b16 %v779
    %v1274 = vunpack.c.l.b16 %v780
    %v1275 = vunpack.c.h.b16 %v780
    %v1276 = vunpack.c.l.b16 %v781
    %v1277 = vunpack.c.h.b16 %v781
    %v1278 = vunpack.c.l.b16 %v782
    %v1279 = vunpack.c.l.b16 %v783
    %v1280 = vunpack.c.h.b16 %v783
    %v1281 = vunpack.c.l.b16 %v784
    %v1282 = vunpack.c.h.b16 %v784
    %v1283 = vunpack.c.l.b16 %v785
    %v1284 = vunpack.c.l.b16 %v786
    %v1285 = vunpack.c.h.b16 %v786
    %v1286 = vunpack.c.l.b16 %v787
    %v1287 = vunpack.c.h.b16 %v787
    %v1288 = vunpack.c.l.b16 %v788
    %v1289 = vunpack.c.l.b16 %v789
    %v1290 = vunpack.c.h.b16 %v789
    %v1291 = vunpack.c.l.b16 %v790
    %v1292 = vunpack.c.h.b16 %v790
    %v1293 = vunpack.c.l.b16 %v791
    %v1294 = vunpack.c.l.b16 %v792
    %v1295 = vunpack.c.h.b16 %v792
    %v1296 = vunpack.c.l.b16 %v793
    %v1297 = vunpack.c.h.b16 %v793
    %v1298 = vunpack.c.l.b16 %v794
    %v1299 = vunpack.c.l.b16 %v795
    %v1300 = vunpack.c.h.b16 %v795
    %v1301 = vunpack.c.l.b16 %v796
    %v1302 = vunpack.c.h.b16 %v796
    %v1303 = vunpack.c.l.b16 %v797
    %v1304 = vunpack.c.l.b16 %v798
    %v1305 = vunpack.c.h.b16 %v798
    %v1306 = vunpack.c.l.b16 %v799
    %v1307 = vunpack.c.h.b16 %v799
    %v1308 = vunpack.c.l.b16 %v800
    %v1309 = vunpack.c.l.b16 %v801
    %v1310 = vunpack.c.h.b16 %v801
    %v1311 = vunpack.c.l.b16 %v802
    %v1312 = vunpack.c.h.b16 %v802
    %v1313 = vunpack.c.l.b16 %v803
    %v1314 = vunpack.c.l.b16 %v804
    %v1315 = vunpack.c.h.b16 %v804
    %v1316 = vunpack.c.l.b16 %v805
    %v1317 = vunpack.c.h.b16 %v805
    %v1318 = vunpack.c.l.b16 %v806
    %v1319 = vpack.c.b16 %v1004, %v999
    %v1320 = vpack.c.b16 %v1005, %v1000
    %v1321 = vpack.c.b16 %v1006, %v1001
    %v1322 = vpack.c.b16 %v1007, %v1002
    %v1323 = vpack.c.b16 %v1008, %v1003
    %v1324 = vpack.c.b16 %v1014, %v1009
    %v1325 = vpack.c.b16 %v1015, %v1010
    %v1326 = vpack.c.b16 %v1016, %v1011
    %v1327 = vpack.c.b16 %v1017, %v1012
    %v1328 = vpack.c.b16 %v1018, %v1013
    %v1329 = vpack.c.b16 %v1024, %v1019
    %v1330 = vpack.c.b16 %v1025, %v1020
    %v1331 = vpack.c.b16 %v1026, %v1021
    %v1332 = vpack.c.b16 %v1027, %v1022
    %v1333 = vpack.c.b16 %v1028, %v1023
    %v1334 = vpack.c.b16 %v1034, %v1029
    %v1335 = vpack.c.b16 %v1035, %v1030
    %v1336 = vpack.c.b16 %v1036, %v1031
    %v1337 = vpack.c.b16 %v1037, %v1032
    %v1338 = vpack.c.b16 %v1038, %v1033
    %v1339 = vpack.c.b16 %v1044, %v1039
    %v1340 = vpack.c.b16 %v1045, %v1040
    %v1341 = vpack.c.b16 %v1046, %v1041
    %v1342 = vpack.c.b16 %v1047, %v1042
    %v1343 = vpack.c.b16 %v1048, %v1043
    %v1344 = vpack.c.b16 %v1054, %v1049
    %v1345 = vpack.c.b16 %v1055, %v1050
    %v1346 = vpack.c.b16 %v1056, %v1051
    %v1347 = vpack.c.b16 %v1057, %v1052
    %v1348 = vpack.c.b16 %v1058, %v1053
    %v1349 = vpack.c.b16 %v1064, %v1059
    %v1350 = vpack.c.b16 %v1065, %v1060
    %v1351 = vpack.c.b16 %v1066, %v1061
    %v1352 = vpack.c.b16 %v1067, %v1062
    %v1353 = vpack.c.b16 %v1068, %v1063
    %v1354 = vpack.c.b16 %v1074, %v1069
    %v1355 = vpack.c.b16 %v1075, %v1070
    %v1356 = vpack.c.b16 %v1076, %v1071
    %v1357 = vpack.c.b16 %v1077, %v1072
    %v1358 = vpack.c.b16 %v1078, %v1073
    %v1359 = vpack.c.b16 %v1084, %v1079
    %v1360 = vpack.c.b16 %v1085, %v1080
    %v1361 = vpack.c.b16 %v1086, %v1081
    %v1362 = vpack.c.b16 %v1087, %v1082
    %v1363 = vpack.c.b16 %v1088, %v1083
    %v1364 = vpack.c.b16 %v1094, %v1089
    %v1365 = vpack.c.b16 %v1095, %v1090
    %v1366 = vpack.c.b16 %v1096, %v1091
    %v1367 = vpack.c.b16 %v1097, %v1092
    %v1368 = vpack.c.b16 %v1098, %v1093
    %v1369 = vpack.c.b16 %v1104, %v1099
    %v1370 = vpack.c.b16 %v1105, %v1100
    %v1371 = vpack.c.b16 %v1106, %v1101
    %v1372 = vpack.c.b16 %v1107, %v1102
    %v1373 = vpack.c.b16 %v1108, %v1103
    %v1374 = vpack.c.b16 %v1114, %v1109
    %v1375 = vpack.c.b16 %v1115, %v1110
    %v1376 = vpack.c.b16 %v1116, %v1111
    %v1377 = vpack.c.b16 %v1117, %v1112
    %v1378 = vpack.c.b16 %v1118, %v1113
    %v1379 = vpack.c.b16 %v1124, %v1119
    %v1380 = vpack.c.b16 %v1125, %v1120
    %v1381 = vpack.c.b16 %v1126, %v1121
    %v1382 = vpack.c.b16 %v1127, %v1122
    %v1383 = vpack.c.b16 %v1128, %v1123
    %v1384 = vpack.c.b16 %v1134, %v1129
    %v1385 = vpack.c.b16 %v1135, %v1130
    %v1386 = vpack.c.b16 %v1136, %v1131
    %v1387 = vpack.c.b16 %v1137, %v1132
    %v1388 = vpack.c.b16 %v1138, %v1133
    %v1389 = vpack.c.b16 %v1144, %v1139
    %v1390 = vpack.c.b16 %v1145, %v1140
    %v1391 = vpack.c.b16 %v1146, %v1141
    %v1392 = vpack.c.b16 %v1147, %v1142
    %v1393 = vpack.c.b16 %v1148, %v1143
    %v1394 = vpack.c.b16 %v1154, %v1149
    %v1395 = vpack.c.b16 %v1155, %v1150
    %v1396 = vpack.c.b16 %v1156, %v1151
    %v1397 = vpack.c.b16 %v1157, %v1152
    %v1398 = vpack.c.b16 %v1158, %v1153
    %v1399 = vpack.c.b16 %v1164, %v1159
    %v1400 = vpack.c.b16 %v1165, %v1160
    %v1401 = vpack.c.b16 %v1166, %v1161
    %v1402 = vpack.c.b16 %v1167, %v1162
    %v1403 = vpack.c.b16 %v1168, %v1163
    %v1404 = vpack.c.b16 %v1174, %v1169
    %v1405 = vpack.c.b16 %v1175, %v1170
    %v1406 = vpack.c.b16 %v1176, %v1171
    %v1407 = vpack.c.b16 %v1177, %v1172
    %v1408 = vpack.c.b16 %v1178, %v1173
    %v1409 = vpack.c.b16 %v1184, %v1179
    %v1410 = vpack.c.b16 %v1185, %v1180
    %v1411 = vpack.c.b16 %v1186, %v1181
    %v1412 = vpack.c.b16 %v1187, %v1182
    %v1413 = vpack.c.b16 %v1188, %v1183
    %v1414 = vpack.c.b16 %v1194, %v1189
    %v1415 = vpack.c.b16 %v1195, %v1190
    %v1416 = vpack.c.b16 %v1196, %v1191
    %v1417 = vpack.c.b16 %v1197, %v1192
    %v1418 = vpack.c.b16 %v1198, %v1193
    %v1419 = vpack.c.b16 %v1204, %v1199
    %v1420 = vpack.c.b16 %v1205, %v1200
    %v1421 = vpack.c.b16 %v1206, %v1201
    %v1422 = vpack.c.b16 %v1207, %v1202
    %v1423 = vpack.c.b16 %v1208, %v1203
    %v1424 = vpack.c.b16 %v1214, %v1209
    %v1425 = vpack.c.b16 %v1215, %v1210
    %v1426 = vpack.c.b16 %v1216, %v1211
    %v1427 = vpack.c.b16 %v1217, %v1212
    %v1428 = vpack.c.b16 %v1218, %v1213
    %v1429 = vpack.c.b16 %v1224, %v1219
    %v1430 = vpack.c.b16 %v1225, %v1220
    %v1431 = vpack.c.b16 %v1226, %v1221
    %v1432 = vpack.c.b16 %v1227, %v1222
    %v1433 = vpack.c.b16 %v1228, %v1223
    %v1434 = vpack.c.b16 %v1234, %v1229
    %v1435 = vpack.c.b16 %v1235, %v1230
    %v1436 = vpack.c.b16 %v1236, %v1231
    %v1437 = vpack.c.b16 %v1237, %v1232
    %v1438 = vpack.c.b16 %v1238, %v1233
    %v1439 = vpack.c.b16 %v1244, %v1239
    %v1440 = vpack.c.b16 %v1245, %v1240
    %v1441 = vpack.c.b16 %v1246, %v1241
    %v1442 = vpack.c.b16 %v1247, %v1242
    %v1443 = vpack.c.b16 %v1248, %v1243
    %v1444 = vpack.c.b16 %v1254, %v1249
    %v1445 = vpack.c.b16 %v1255, %v1250
    %v1446 = vpack.c.b16 %v1256, %v1251
    %v1447 = vpack.c.b16 %v1257, %v1252
    %v1448 = vpack.c.b16 %v1258, %v1253
    %v1449 = vpack.c.b16 %v1264, %v1259
    %v1450 = vpack.c.b16 %v1265, %v1260
    %v1451 = vpack.c.b16 %v1266, %v1261
    %v1452 = vpack.c.b16 %v1267, %v1262
    %v1453 = vpack.c.b16 %v1268, %v1263
    %v1454 = vpack.c.b16 %v1274, %v1269
    %v1455 = vpack.c.b16 %v1275, %v1270
    %v1456 = vpack.c.b16 %v1276, %v1271
    %v1457 = vpack.c.b16 %v1277, %v1272
    %v1458 = vpack.c.b16 %v1278, %v1273
    %v1459 = vpack.c.b16 %v1284, %v1279
    %v1460 = vpack.c.b16 %v1285, %v1280
    %v1461 = vpack.c.b16 %v1286, %v1281
    %v1462 = vpack.c.b16 %v1287, %v1282
    %v1463 = vpack.c.b16 %v1288, %v1283
    %v1464 = vpack.c.b16 %v1294, %v1289
    %v1465 = vpack.c.b16 %v1295, %v1290
    %v1466 = vpack.c.b16 %v1296, %v1291
    %v1467 = vpack.c.b16 %v1297, %v1292
    %v1468 = vpack.c.b16 %v1298, %v1293
    %v1469 = vpack.c.b16 %v1304, %v1299
    %v1470 = vpack.c.b16 %v1305, %v1300
    %v1471 = vpack.c.b16 %v1306, %v1301
    %v1472 = vpack.c.b16 %v1307, %v1302
    %v1473 = vpack.c.b16 %v1308, %v1303
    %v1474 = vpack.c.b16 %v1314, %v1309
    %v1475 = vpack.c.b16 %v1315, %v1310
    %v1476 = vpack.c.b16 %v1316, %v1311
    %v1477 = vpack.c.b16 %v1317, %v1312
    %v1478 = vpack.c.b16 %v1318, %v1313
    %1639 = vmatpush.bf16.msra.mxu0 %v1354
    %1640 = vmatpush.bf16.msra.mxu0 %v1349
    %1641 = vmatpush.bf16.msra.mxu0 %v1344
    %1642 = vmatpush.bf16.msra.mxu0 %v1339
    %1643 = vmatpush.bf16.msra.mxu0 %v1334
    %1644 = vmatpush.bf16.msra.mxu0 %v1329
    %1645 = vmatpush.bf16.msra.mxu0 %v1324
    %1646 = vmatpush.bf16.msra.mxu0 %v1319
    %1647 = vmatmul.bf16.gmra.mxu0 %v611
    %v1648 = vpop.f32.mrf.mxu0
    %v1649 = vadd.f32 0.0, %v1648
    %v1650 = vpop.f32.mrf.mxu0
    %v1651 = vadd.f32 0.0, %v1650
    %1652 = vdwg.mxu0
    %1653 = vmatpush.bf16.msra.mxu0 %v1394
    %1654 = vmatpush.bf16.msra.mxu0 %v1389
    %1655 = vmatpush.bf16.msra.mxu0 %v1384
    %1656 = vmatpush.bf16.msra.mxu0 %v1379
    %1657 = vmatpush.bf16.msra.mxu0 %v1374
    %1658 = vmatpush.bf16.msra.mxu0 %v1369
    %1659 = vmatpush.bf16.msra.mxu0 %v1364
    %1660 = vmatpush.bf16.msra.mxu0 %v1359
    %1661 = vmatmul.bf16.gmra.mxu0 %v612
    %v1662 = vpop.f32.mrf.mxu0
    %v1663 = vadd.f32 %v1649, %v1662
    %v1664 = vpop.f32.mrf.mxu0
    %v1665 = vadd.f32 %v1651, %v1664
    %1666 = vdwg.mxu0
    %1667 = vmatpush.bf16.msra.mxu0 %v1434
    %1668 = vmatpush.bf16.msra.mxu0 %v1429
    %1669 = vmatpush.bf16.msra.mxu0 %v1424
    %1670 = vmatpush.bf16.msra.mxu0 %v1419
    %1671 = vmatpush.bf16.msra.mxu0 %v1414
    %1672 = vmatpush.bf16.msra.mxu0 %v1409
    %1673 = vmatpush.bf16.msra.mxu0 %v1404
    %1674 = vmatpush.bf16.msra.mxu0 %v1399
    %1675 = vmatmul.bf16.gmra.mxu0 %v613
    %v1676 = vpop.f32.mrf.mxu0
    %v1677 = vadd.f32 %v1663, %v1676
    %v1678 = vpop.f32.mrf.mxu0
    %v1679 = vadd.f32 %v1665, %v1678
    %1680 = vdwg.mxu0
    %1681 = vmatpush.bf16.msra.mxu0 %v1474
    %1682 = vmatpush.bf16.msra.mxu0 %v1469
    %1683 = vmatpush.bf16.msra.mxu0 %v1464
    %1684 = vmatpush.bf16.msra.mxu0 %v1459
    %1685 = vmatpush.bf16.msra.mxu0 %v1454
    %1686 = vmatpush.bf16.msra.mxu0 %v1449
    %1687 = vmatpush.bf16.msra.mxu0 %v1444
    %1688 = vmatpush.bf16.msra.mxu0 %v1439
    %1689 = vmatmul.bf16.gmra.mxu0 %v614
    %v1690 = vpop.f32.mrf.mxu0
    %v1691 = vadd.f32 %v1677, %v1690
    %v1692 = vpop.f32.mrf.mxu0
    %v1693 = vadd.f32 %v1679, %v1692
    %1694 = vdwg.mxu0
    %1695 = vmatpush.bf16.msra.mxu0 %v1355
    %1696 = vmatpush.bf16.msra.mxu0 %v1350
    %1697 = vmatpush.bf16.msra.mxu0 %v1345
    %1698 = vmatpush.bf16.msra.mxu0 %v1340
    %1699 = vmatpush.bf16.msra.mxu0 %v1335
    %1700 = vmatpush.bf16.msra.mxu0 %v1330
    %1701 = vmatpush.bf16.msra.mxu0 %v1325
    %1702 = vmatpush.bf16.msra.mxu0 %v1320
    %1703 = vmatmul.bf16.gmra.mxu0 %v611
    %v1704 = vpop.f32.mrf.mxu0
    %v1705 = vadd.f32 0.0, %v1704
    %v1706 = vpop.f32.mrf.mxu0
    %v1707 = vadd.f32 0.0, %v1706
    %1708 = vdwg.mxu0
    %1709 = vmatpush.bf16.msra.mxu0 %v1395
    %1710 = vmatpush.bf16.msra.mxu0 %v1390
    %1711 = vmatpush.bf16.msra.mxu0 %v1385
    %1712 = vmatpush.bf16.msra.mxu0 %v1380
    %1713 = vmatpush.bf16.msra.mxu0 %v1375
    %1714 = vmatpush.bf16.msra.mxu0 %v1370
    %1715 = vmatpush.bf16.msra.mxu0 %v1365
    %1716 = vmatpush.bf16.msra.mxu0 %v1360
    %1717 = vmatmul.bf16.gmra.mxu0 %v612
    %v1718 = vpop.f32.mrf.mxu0
    %v1719 = vadd.f32 %v1705, %v1718
    %v1720 = vpop.f32.mrf.mxu0
    %v1721 = vadd.f32 %v1707, %v1720
    %1722 = vdwg.mxu0
    %1723 = vmatpush.bf16.msra.mxu0 %v1435
    %1724 = vmatpush.bf16.msra.mxu0 %v1430
    %1725 = vmatpush.bf16.msra.mxu0 %v1425
    %1726 = vmatpush.bf16.msra.mxu0 %v1420
    %1727 = vmatpush.bf16.msra.mxu0 %v1415
    %1728 = vmatpush.bf16.msra.mxu0 %v1410
    %1729 = vmatpush.bf16.msra.mxu0 %v1405
    %1730 = vmatpush.bf16.msra.mxu0 %v1400
    %1731 = vmatmul.bf16.gmra.mxu0 %v613
    %v1732 = vpop.f32.mrf.mxu0
    %v1733 = vadd.f32 %v1719, %v1732
    %v1734 = vpop.f32.mrf.mxu0
    %v1735 = vadd.f32 %v1721, %v1734
    %1736 = vdwg.mxu0
    %1737 = vmatpush.bf16.msra.mxu0 %v1475
    %1738 = vmatpush.bf16.msra.mxu0 %v1470
    %1739 = vmatpush.bf16.msra.mxu0 %v1465
    %1740 = vmatpush.bf16.msra.mxu0 %v1460
    %1741 = vmatpush.bf16.msra.mxu0 %v1455
    %1742 = vmatpush.bf16.msra.mxu0 %v1450
    %1743 = vmatpush.bf16.msra.mxu0 %v1445
    %1744 = vmatpush.bf16.msra.mxu0 %v1440
    %1745 = vmatmul.bf16.gmra.mxu0 %v614
    %v1746 = vpop.f32.mrf.mxu0
    %v1747 = vadd.f32 %v1733, %v1746
    %v1748 = vpop.f32.mrf.mxu0
    %v1749 = vadd.f32 %v1735, %v1748
    %1750 = vdwg.mxu0
    %1751 = vmatpush.bf16.msra.mxu0 %v1356
    %1752 = vmatpush.bf16.msra.mxu0 %v1351
    %1753 = vmatpush.bf16.msra.mxu0 %v1346
    %1754 = vmatpush.bf16.msra.mxu0 %v1341
    %1755 = vmatpush.bf16.msra.mxu0 %v1336
    %1756 = vmatpush.bf16.msra.mxu0 %v1331
    %1757 = vmatpush.bf16.msra.mxu0 %v1326
    %1758 = vmatpush.bf16.msra.mxu0 %v1321
    %1759 = vmatmul.bf16.gmra.mxu0 %v611
    %v1760 = vpop.f32.mrf.mxu0
    %v1761 = vadd.f32 0.0, %v1760
    %v1762 = vpop.f32.mrf.mxu0
    %v1763 = vadd.f32 0.0, %v1762
    %1764 = vdwg.mxu0
    %1765 = vmatpush.bf16.msra.mxu0 %v1396
    %1766 = vmatpush.bf16.msra.mxu0 %v1391
    %1767 = vmatpush.bf16.msra.mxu0 %v1386
    %1768 = vmatpush.bf16.msra.mxu0 %v1381
    %1769 = vmatpush.bf16.msra.mxu0 %v1376
    %1770 = vmatpush.bf16.msra.mxu0 %v1371
    %1771 = vmatpush.bf16.msra.mxu0 %v1366
    %1772 = vmatpush.bf16.msra.mxu0 %v1361
    %1773 = vmatmul.bf16.gmra.mxu0 %v612
    %v1774 = vpop.f32.mrf.mxu0
    %v1775 = vadd.f32 %v1761, %v1774
    %v1776 = vpop.f32.mrf.mxu0
    %v1777 = vadd.f32 %v1763, %v1776
    %1778 = vdwg.mxu0
    %1779 = vmatpush.bf16.msra.mxu0 %v1436
    %1780 = vmatpush.bf16.msra.mxu0 %v1431
    %1781 = vmatpush.bf16.msra.mxu0 %v1426
    %1782 = vmatpush.bf16.msra.mxu0 %v1421
    %1783 = vmatpush.bf16.msra.mxu0 %v1416
    %1784 = vmatpush.bf16.msra.mxu0 %v1411
    %1785 = vmatpush.bf16.msra.mxu0 %v1406
    %1786 = vmatpush.bf16.msra.mxu0 %v1401
    %1787 = vmatmul.bf16.gmra.mxu0 %v613
    %v1788 = vpop.f32.mrf.mxu0
    %v1789 = vadd.f32 %v1775, %v1788
    %v1790 = vpop.f32.mrf.mxu0
    %v1791 = vadd.f32 %v1777, %v1790
    %1792 = vdwg.mxu0
    %1793 = vmatpush.bf16.msra.mxu0 %v1476
    %1794 = vmatpush.bf16.msra.mxu0 %v1471
    %1795 = vmatpush.bf16.msra.mxu0 %v1466
    %1796 = vmatpush.bf16.msra.mxu0 %v1461
    %1797 = vmatpush.bf16.msra.mxu0 %v1456
    %1798 = vmatpush.bf16.msra.mxu0 %v1451
    %1799 = vmatpush.bf16.msra.mxu0 %v1446
    %1800 = vmatpush.bf16.msra.mxu0 %v1441
    %1801 = vmatmul.bf16.gmra.mxu0 %v614
    %v1802 = vpop.f32.mrf.mxu0
    %v1803 = vadd.f32 %v1789, %v1802
    %v1804 = vpop.f32.mrf.mxu0
    %v1805 = vadd.f32 %v1791, %v1804
    %1806 = vdwg.mxu0
    %1807 = vmatpush.bf16.msra.mxu0 %v1357
    %1808 = vmatpush.bf16.msra.mxu0 %v1352
    %1809 = vmatpush.bf16.msra.mxu0 %v1347
    %1810 = vmatpush.bf16.msra.mxu0 %v1342
    %1811 = vmatpush.bf16.msra.mxu0 %v1337
    %1812 = vmatpush.bf16.msra.mxu0 %v1332
    %1813 = vmatpush.bf16.msra.mxu0 %v1327
    %1814 = vmatpush.bf16.msra.mxu0 %v1322
    %1815 = vmatmul.bf16.gmra.mxu0 %v611
    %v1816 = vpop.f32.mrf.mxu0
    %v1817 = vadd.f32 0.0, %v1816
    %v1818 = vpop.f32.mrf.mxu0
    %v1819 = vadd.f32 0.0, %v1818
    %1820 = vdwg.mxu0
    %1821 = vmatpush.bf16.msra.mxu0 %v1397
    %1822 = vmatpush.bf16.msra.mxu0 %v1392
    %1823 = vmatpush.bf16.msra.mxu0 %v1387
    %1824 = vmatpush.bf16.msra.mxu0 %v1382
    %1825 = vmatpush.bf16.msra.mxu0 %v1377
    %1826 = vmatpush.bf16.msra.mxu0 %v1372
    %1827 = vmatpush.bf16.msra.mxu0 %v1367
    %1828 = vmatpush.bf16.msra.mxu0 %v1362
    %1829 = vmatmul.bf16.gmra.mxu0 %v612
    %v1830 = vpop.f32.mrf.mxu0
    %v1831 = vadd.f32 %v1817, %v1830
    %v1832 = vpop.f32.mrf.mxu0
    %v1833 = vadd.f32 %v1819, %v1832
    %1834 = vdwg.mxu0
    %1835 = vmatpush.bf16.msra.mxu0 %v1437
    %1836 = vmatpush.bf16.msra.mxu0 %v1432
    %1837 = vmatpush.bf16.msra.mxu0 %v1427
    %1838 = vmatpush.bf16.msra.mxu0 %v1422
    %1839 = vmatpush.bf16.msra.mxu0 %v1417
    %1840 = vmatpush.bf16.msra.mxu0 %v1412
    %1841 = vmatpush.bf16.msra.mxu0 %v1407
    %1842 = vmatpush.bf16.msra.mxu0 %v1402
    %1843 = vmatmul.bf16.gmra.mxu0 %v613
    %v1844 = vpop.f32.mrf.mxu0
    %v1845 = vadd.f32 %v1831, %v1844
    %v1846 = vpop.f32.mrf.mxu0
    %v1847 = vadd.f32 %v1833, %v1846
    %1848 = vdwg.mxu0
    %1849 = vmatpush.bf16.msra.mxu0 %v1477
    %1850 = vmatpush.bf16.msra.mxu0 %v1472
    %1851 = vmatpush.bf16.msra.mxu0 %v1467
    %1852 = vmatpush.bf16.msra.mxu0 %v1462
    %1853 = vmatpush.bf16.msra.mxu0 %v1457
    %1854 = vmatpush.bf16.msra.mxu0 %v1452
    %1855 = vmatpush.bf16.msra.mxu0 %v1447
    %1856 = vmatpush.bf16.msra.mxu0 %v1442
    %1857 = vmatmul.bf16.gmra.mxu0 %v614
    %v1858 = vpop.f32.mrf.mxu0
    %v1859 = vadd.f32 %v1845, %v1858
    %v1860 = vpop.f32.mrf.mxu0
    %v1861 = vadd.f32 %v1847, %v1860
    %1862 = vdwg.mxu0
    %1863 = vmatpush.bf16.msra.mxu0 %v1358
    %1864 = vmatpush.bf16.msra.mxu0 %v1353
    %1865 = vmatpush.bf16.msra.mxu0 %v1348
    %1866 = vmatpush.bf16.msra.mxu0 %v1343
    %1867 = vmatpush.bf16.msra.mxu0 %v1338
    %1868 = vmatpush.bf16.msra.mxu0 %v1333
    %1869 = vmatpush.bf16.msra.mxu0 %v1328
    %1870 = vmatpush.bf16.msra.mxu0 %v1323
    %1871 = vmatmul.bf16.gmra.mxu0 %v611
    %v1872 = vpop.f32.mrf.mxu0
    %v1873 = vadd.f32 0.0, %v1872
    %v1874 = vpop.f32.mrf.mxu0
    %v1875 = vadd.f32 0.0, %v1874
    %1876 = vdwg.mxu0
    %1877 = vmatpush.bf16.msra.mxu0 %v1398
    %1878 = vmatpush.bf16.msra.mxu0 %v1393
    %1879 = vmatpush.bf16.msra.mxu0 %v1388
    %1880 = vmatpush.bf16.msra.mxu0 %v1383
    %1881 = vmatpush.bf16.msra.mxu0 %v1378
    %1882 = vmatpush.bf16.msra.mxu0 %v1373
    %1883 = vmatpush.bf16.msra.mxu0 %v1368
    %1884 = vmatpush.bf16.msra.mxu0 %v1363
    %1885 = vmatmul.bf16.gmra.mxu0 %v612
    %v1886 = vpop.f32.mrf.mxu0
    %v1887 = vadd.f32 %v1873, %v1886
    %v1888 = vpop.f32.mrf.mxu0
    %v1889 = vadd.f32 %v1875, %v1888
    %1890 = vdwg.mxu0
    %1891 = vmatpush.bf16.msra.mxu0 %v1438
    %1892 = vmatpush.bf16.msra.mxu0 %v1433
    %1893 = vmatpush.bf16.msra.mxu0 %v1428
    %1894 = vmatpush.bf16.msra.mxu0 %v1423
    %1895 = vmatpush.bf16.msra.mxu0 %v1418
    %1896 = vmatpush.bf16.msra.mxu0 %v1413
    %1897 = vmatpush.bf16.msra.mxu0 %v1408
    %1898 = vmatpush.bf16.msra.mxu0 %v1403
    %1899 = vmatmul.bf16.gmra.mxu0 %v613
    %v1900 = vpop.f32.mrf.mxu0
    %v1901 = vadd.f32 %v1887, %v1900
    %v1902 = vpop.f32.mrf.mxu0
    %v1903 = vadd.f32 %v1889, %v1902
    %1904 = vdwg.mxu0
    %1905 = vmatpush.bf16.msra.mxu0 %v1478
    %1906 = vmatpush.bf16.msra.mxu0 %v1473
    %1907 = vmatpush.bf16.msra.mxu0 %v1468
    %1908 = vmatpush.bf16.msra.mxu0 %v1463
    %1909 = vmatpush.bf16.msra.mxu0 %v1458
    %1910 = vmatpush.bf16.msra.mxu0 %v1453
    %1911 = vmatpush.bf16.msra.mxu0 %v1448
    %1912 = vmatpush.bf16.msra.mxu0 %v1443
    %1913 = vmatmul.bf16.gmra.mxu0 %v614
    %v1914 = vpop.f32.mrf.mxu0
    %v1915 = vadd.f32 %v1901, %v1914
    %v1916 = vpop.f32.mrf.mxu0
    %v1917 = vadd.f32 %v1903, %v1916
    %1918 = vdwg.mxu0
    %v1919 = vpack.c.bf16 %v1747, %v1691
    %v1920 = vpack.c.bf16 %v1859, %v1803
    %v1921 = vpack.c.bf16 %v1749, %v1693
    %v1922 = vpack.c.bf16 %v1861, %v1805
    %1923 = vxpose.xlu0.b32.start [1/16] %v1915, 128
    %1924 = vxpose.xlu0.b32.cont [2/16] %v1917, 128
    %1925 = vxpose.xlu0.b32.cont [3/16] 0.0, 128
    %1926 = vxpose.xlu0.b32.cont [4/16] 0.0, 128
    %1927 = vxpose.xlu0.b32.cont [5/16] 0.0, 128
    %1928 = vxpose.xlu0.b32.cont [6/16] 0.0, 128
    %1929 = vxpose.xlu0.b32.cont [7/16] 0.0, 128
    %1930 = vxpose.xlu0.b32.cont [8/16] 0.0, 128
    %1931 = vxpose.xlu0.b32.cont [9/16] 0.0, 128
    %1932 = vxpose.xlu0.b32.cont [10/16] 0.0, 128
    %1933 = vxpose.xlu0.b32.cont [11/16] 0.0, 128
    %1934 = vxpose.xlu0.b32.cont [12/16] 0.0, 128
    %1935 = vxpose.xlu0.b32.cont [13/16] 0.0, 128
    %1936 = vxpose.xlu0.b32.cont [14/16] 0.0, 128
    %1937 = vxpose.xlu0.b32.cont [15/16] 0.0, 128
    %1938 = vxpose.xlu0.b32.end [16/16] 0.0, 128
    %v1939 = vpop.trf.xlu0
    %v1940 = vpop.trf.xlu0
    %v1941 = vpop.trf.xlu0
    %v1942 = vpop.trf.xlu0
    %v1943 = vpop.trf.xlu0
    %v1944 = vpop.trf.xlu0
    %v1945 = vpop.trf.xlu0
    %v1946 = vpop.trf.xlu0
    %v1947 = vpop.trf.xlu0
    %v1948 = vpop.trf.xlu0
    %v1949 = vpop.trf.xlu0
    %v1950 = vpop.trf.xlu0
    %v1951 = vpop.trf.xlu0
    %v1952 = vpop.trf.xlu0
    %v1953 = vpop.trf.xlu0
    %v1954 = vpop.trf.xlu0
    %1956 = vset.pattern.permute.xlu0 4
    %1957 = vperm.xlu0 %1956, %v1915
    %v1958 = vpop.permute.xlu0 %1957
    %1961 = vset.pattern.permute.xlu0 4
    %1962 = vperm.xlu0 %1961, %v1917
    %v1963 = vpop.permute.xlu0 %1962
    %v1965 = vperm.slane %v1939, 0
    %v1966 = vadd.f32 %v1958, %v1965
    %v1967 = vadd.f32 %v1963, %v1965
    %1968 = vset.pattern.permute.xlu0 5
    %1969 = vperm.xlu0 %1968, %v1915
    %v1970 = vpop.permute.xlu0 %1969
    %1972 = vset.pattern.permute.xlu0 5
    %1973 = vperm.xlu0 %1972, %v1917
    %v1974 = vpop.permute.xlu0 %1973
    %v1976 = vperm.slane %v1939, 1
    %v1977 = vadd.f32 %v1970, %v1976
    %v1978 = vadd.f32 %v1974, %v1976
    %1979 = vset.pattern.permute.xlu0 6
    %1980 = vperm.xlu0 %1979, %v1915
    %v1981 = vpop.permute.xlu0 %1980
    %1983 = vset.pattern.permute.xlu0 6
    %1984 = vperm.xlu0 %1983, %v1917
    %v1985 = vpop.permute.xlu0 %1984
    %v1987 = vperm.slane %v1939, 2
    %v1988 = vadd.f32 %v1981, %v1987
    %v1989 = vadd.f32 %v1985, %v1987
    %1990 = vset.pattern.permute.xlu0 7
    %1991 = vperm.xlu0 %1990, %v1915
    %v1992 = vpop.permute.xlu0 %1991
    %1994 = vset.pattern.permute.xlu0 7
    %1995 = vperm.xlu0 %1994, %v1917
    %v1996 = vpop.permute.xlu0 %1995
    %v1998 = vperm.slane %v1939, 3
    %v1999 = vadd.f32 %v1992, %v1998
    %v2000 = vadd.f32 %v1996, %v1998
    %2003 = vrot.lane.b32.xlu0 %v1977, 16
    %v2004 = vpop.permute.xlu0 %2003
    %2005 = vrot.lane.b32.xlu0 %v1978, 16
    %v2006 = vpop.permute.xlu0 %2005
    %2011 = vrot.lane.b32.xlu0 %v1988, 32
    %v2012 = vpop.permute.xlu0 %2011
    %2013 = vrot.lane.b32.xlu0 %v1989, 32
    %v2014 = vpop.permute.xlu0 %2013
    %2019 = vrot.lane.b32.xlu0 %v1999, 48
    %v2020 = vpop.permute.xlu0 %2019
    %2021 = vrot.lane.b32.xlu0 %v2000, 48
    %v2022 = vpop.permute.xlu0 %2021
    %v2025 = vsel %vm373, %v1966, %v2004
    %v2026 = vsel %vm373, %v1967, %v2006
    %v2027 = vsel %vm193, %v2025, %v2012
    %v2028 = vsel %vm193, %v2026, %v2014
    %v2029 = vsel %vm378, %v2027, %v2020
    %v2030 = vsel %vm378, %v2028, %v2022
    %v2031 = vmul.f32 %v2029, 0.2
    %v2032 = vmul.f32 %v2030, 0.2
    %v2033 = vmax.f32 %v2029, %v2031
    %v2034 = vmax.f32 %v2030, %v2032
    %v2035 = vadd.f32 %v2033, %v116
    %v2036 = vadd.f32 %v2034, %v117
    %v2037 = vsel %vm387, %v2035, -inf
    %2038 = vmax.xlane.f32.xlu0 %v2037
    %v2039 = vpop.xlane.xlu0 %2038
    %v2040 = vsel %vm387, %v2036, -inf
    %2041 = vmax.xlane.f32.xlu0 %v2040
    %v2042 = vpop.xlane.xlu0 %2041
    %v2043 = vsub.f32 %v2035, %v2039
    %v2044 = vsub.f32 %v2036, %v2042
    %v2045 = vmul.f32 %v2043, 1.442695
    %v2046 = vpow.pop %v2045
    %v2047 = vmul.f32 %v2044, 1.442695
    %v2048 = vpow.pop %v2047
    %v2049 = vpack.c.bf16 %v2046, %v2046
    %v2050 = vpack.c.bf16 %v2048, %v2048
    %v2053 = vunpack.c.l.b16 %v2049
    %v2054 = vunpack.c.l.b16 %v2050
    %v2055 = vpack.c.b16 %v2054, %v2053
    %v2057 = vsel %vm387, %v2055, 0
    %2059 = vmatpush.bf16.msra.mxu0 0
    %2060 = vmatpush.bf16.msra.mxu0 0
    %2061 = vmatpush.bf16.msra.mxu0 0
    %2062 = vmatpush.bf16.msra.mxu0 0
    %2063 = vmatpush.bf16.msra.mxu0 %v426
    %2064 = vmatpush.bf16.msra.mxu0 %v425
    %2065 = vmatpush.bf16.msra.mxu0 %v424
    %2066 = vmatpush.bf16.msra.mxu0 %v423
    %2067 = vmatmul.bf16.gmra.mxu0 %v2057
    %v2068 = vpop.f32.mrf.mxu0
    %v2069 = vadd.f32 0.0, %v2068
    %v2070 = vpop.f32.mrf.mxu0
    %v2071 = vadd.f32 0.0, %v2070
    %2072 = vdwg.mxu0
    %v2073 = vrcp.pop %v2069
    %v2074 = vrcp.pop %v2071
    %v2077 = vunpack.c.l.b16 %v1919
    %v2078 = vunpack.c.l.b16 %v1921
    %v2079 = vpack.c.b16 %v2078, %v2077
    %v2081 = vsel %vm373, %v2055, 0
    %2083 = vmatpush.bf16.msra.mxu0 0
    %2084 = vmatpush.bf16.msra.mxu0 0
    %2085 = vmatpush.bf16.msra.mxu0 0
    %2086 = vmatpush.bf16.msra.mxu0 0
    %2087 = vmatpush.bf16.msra.mxu0 0
    %2088 = vmatpush.bf16.msra.mxu0 0
    %2089 = vmatpush.bf16.msra.mxu0 0
    %2090 = vmatpush.bf16.msra.mxu0 %v2079
    %2091 = vmatmul.bf16.gmra.mxu0 %v2081
    %v2092 = vpop.f32.mrf.mxu0
    %v2093 = vadd.f32 0.0, %v2092
    %v2094 = vpop.f32.mrf.mxu0
    %v2095 = vadd.f32 0.0, %v2094
    %2096 = vdwg.mxu0
    %2098 = vset.pattern.permute.xlu0 0
    %2099 = vperm.xlu0 %2098, %v2073
    %v2100 = vpop.permute.xlu0 %2099
    %2103 = vset.pattern.permute.xlu0 0
    %2104 = vperm.xlu0 %2103, %v2074
    %v2105 = vpop.permute.xlu0 %2104
    %v2107 = vmul.f32 %v2093, %v2100
    %v2108 = vmul.f32 %v2095, %v2105
    %2109 = vrot.lane.b32.xlu0 %v2055, 112
    %v2110 = vpop.permute.xlu0 %2109
    %v2111 = vunpack.c.h.b16 %v1919
    %v2112 = vunpack.c.h.b16 %v1921
    %v2113 = vpack.c.b16 %v2112, %v2111
    %v2116 = vsel %vm373, %v2110, 0
    %2118 = vmatpush.bf16.msra.mxu0 0
    %2119 = vmatpush.bf16.msra.mxu0 0
    %2120 = vmatpush.bf16.msra.mxu0 0
    %2121 = vmatpush.bf16.msra.mxu0 0
    %2122 = vmatpush.bf16.msra.mxu0 0
    %2123 = vmatpush.bf16.msra.mxu0 0
    %2124 = vmatpush.bf16.msra.mxu0 0
    %2125 = vmatpush.bf16.msra.mxu0 %v2113
    %2126 = vmatmul.bf16.gmra.mxu0 %v2116
    %v2127 = vpop.f32.mrf.mxu0
    %v2128 = vadd.f32 0.0, %v2127
    %v2129 = vpop.f32.mrf.mxu0
    %v2130 = vadd.f32 0.0, %v2129
    %2131 = vdwg.mxu0
    %2132 = vset.pattern.permute.xlu0 1
    %2133 = vperm.xlu0 %2132, %v2073
    %v2134 = vpop.permute.xlu0 %2133
    %2136 = vset.pattern.permute.xlu0 1
    %2137 = vperm.xlu0 %2136, %v2074
    %v2138 = vpop.permute.xlu0 %2137
    %v2140 = vmul.f32 %v2128, %v2134
    %v2141 = vmul.f32 %v2130, %v2138
    %2142 = vrot.lane.b32.xlu0 %v2055, 96
    %v2143 = vpop.permute.xlu0 %2142
    %v2146 = vunpack.c.l.b16 %v1920
    %v2147 = vunpack.c.l.b16 %v1922
    %v2148 = vpack.c.b16 %v2147, %v2146
    %v2151 = vsel %vm373, %v2143, 0
    %2153 = vmatpush.bf16.msra.mxu0 0
    %2154 = vmatpush.bf16.msra.mxu0 0
    %2155 = vmatpush.bf16.msra.mxu0 0
    %2156 = vmatpush.bf16.msra.mxu0 0
    %2157 = vmatpush.bf16.msra.mxu0 0
    %2158 = vmatpush.bf16.msra.mxu0 0
    %2159 = vmatpush.bf16.msra.mxu0 0
    %2160 = vmatpush.bf16.msra.mxu0 %v2148
    %2161 = vmatmul.bf16.gmra.mxu0 %v2151
    %v2162 = vpop.f32.mrf.mxu0
    %v2163 = vadd.f32 0.0, %v2162
    %v2164 = vpop.f32.mrf.mxu0
    %v2165 = vadd.f32 0.0, %v2164
    %2166 = vdwg.mxu0
    %2167 = vset.pattern.permute.xlu0 2
    %2168 = vperm.xlu0 %2167, %v2073
    %v2169 = vpop.permute.xlu0 %2168
    %2171 = vset.pattern.permute.xlu0 2
    %2172 = vperm.xlu0 %2171, %v2074
    %v2173 = vpop.permute.xlu0 %2172
    %v2175 = vmul.f32 %v2163, %v2169
    %v2176 = vmul.f32 %v2165, %v2173
    %2177 = vrot.lane.b32.xlu0 %v2055, 80
    %v2178 = vpop.permute.xlu0 %2177
    %v2179 = vunpack.c.h.b16 %v1920
    %v2180 = vunpack.c.h.b16 %v1922
    %v2181 = vpack.c.b16 %v2180, %v2179
    %v2184 = vsel %vm373, %v2178, 0
    %2186 = vmatpush.bf16.msra.mxu0 0
    %2187 = vmatpush.bf16.msra.mxu0 0
    %2188 = vmatpush.bf16.msra.mxu0 0
    %2189 = vmatpush.bf16.msra.mxu0 0
    %2190 = vmatpush.bf16.msra.mxu0 0
    %2191 = vmatpush.bf16.msra.mxu0 0
    %2192 = vmatpush.bf16.msra.mxu0 0
    %2193 = vmatpush.bf16.msra.mxu0 %v2181
    %2194 = vmatmul.bf16.gmra.mxu0 %v2184
    %v2195 = vpop.f32.mrf.mxu0
    %v2196 = vadd.f32 0.0, %v2195
    %v2197 = vpop.f32.mrf.mxu0
    %v2198 = vadd.f32 0.0, %v2197
    %2199 = vdwg.mxu0
    %2200 = vset.pattern.permute.xlu0 3
    %2201 = vperm.xlu0 %2200, %v2073
    %v2202 = vpop.permute.xlu0 %2201
    %2204 = vset.pattern.permute.xlu0 3
    %2205 = vperm.xlu0 %2204, %v2074
    %v2206 = vpop.permute.xlu0 %2205
    %v2208 = vmul.f32 %v2196, %v2202
    %v2209 = vmul.f32 %v2198, %v2206
    %v2210 = vld [vmem:[#allocation7] sm:$0xf]
    %v2212 = vperm.slane %v2210, 0
    %v2213 = vperm.slane %v2210, 1
    %v2214 = vperm.slane %v2210, 2
    %v2215 = vperm.slane %v2210, 3
    %v2220 = vadd.f32 %v2107, %v2212
    %v2221 = vadd.f32 %v2140, %v2213
    %v2222 = vadd.f32 %v2175, %v2214
    %v2223 = vadd.f32 %v2208, %v2215
    %v2224 = vadd.f32 %v2108, %v2212
    %v2225 = vadd.f32 %v2141, %v2213
    %v2226 = vadd.f32 %v2176, %v2214
    %v2227 = vadd.f32 %v2209, %v2215
    %v2228 = vmax.f32 %v2220, 0.0
    %v2229 = vmax.f32 %v2221, 0.0
    %v2230 = vmax.f32 %v2222, 0.0
    %v2231 = vmax.f32 %v2223, 0.0
    %v2232 = vmax.f32 %v2224, 0.0
    %v2233 = vmax.f32 %v2225, 0.0
    %v2234 = vmax.f32 %v2226, 0.0
    %v2235 = vmax.f32 %v2227, 0.0
    %v2236 = vpack.c.bf16 %v2232, %v2228
    %v2237 = vpack.c.bf16 %v2233, %v2229
    %v2238 = vpack.c.bf16 %v2234, %v2230
    %v2239 = vpack.c.bf16 %v2235, %v2231
    %v2240 = vld [vmem:[#allocation8] sm:$0xff]
    %v2241 = vld [vmem:[#allocation8 + $0x8] sm:$0xff]
    %v2242 = vld [vmem:[#allocation8 + $0x10] sm:$0xf]
    %v2243 = vld [vmem:[#allocation8 + $0x14] sm:$0xff]
    %v2244 = vld [vmem:[#allocation8 + $0x1c] sm:$0xff]
    %v2245 = vld [vmem:[#allocation8 + $0x24] sm:$0xf]
    %v2246 = vld [vmem:[#allocation8 + $0x28] sm:$0xff]
    %v2247 = vld [vmem:[#allocation8 + $0x30] sm:$0xff]
    %v2248 = vld [vmem:[#allocation8 + $0x38] sm:$0xf]
    %v2249 = vld [vmem:[#allocation8 + $0x3c] sm:$0xff]
    %v2250 = vld [vmem:[#allocation8 + $0x44] sm:$0xff]
    %v2251 = vld [vmem:[#allocation8 + $0x4c] sm:$0xf]
    %v2252 = vld [vmem:[#allocation8 + $0x50] sm:$0xff]
    %v2253 = vld [vmem:[#allocation8 + $0x58] sm:$0xff]
    %v2254 = vld [vmem:[#allocation8 + $0x60] sm:$0xf]
    %v2255 = vld [vmem:[#allocation8 + $0x64] sm:$0xff]
    %v2256 = vld [vmem:[#allocation8 + $0x6c] sm:$0xff]
    %v2257 = vld [vmem:[#allocation8 + $0x74] sm:$0xf]
    %v2258 = vld [vmem:[#allocation8 + $0x78] sm:$0xff]
    %v2259 = vld [vmem:[#allocation8 + $0x80] sm:$0xff]
    %v2260 = vld [vmem:[#allocation8 + $0x88] sm:$0xf]
    %v2261 = vld [vmem:[#allocation8 + $0x8c] sm:$0xff]
    %v2262 = vld [vmem:[#allocation8 + $0x94] sm:$0xff]
    %v2263 = vld [vmem:[#allocation8 + $0x9c] sm:$0xf]
    %v2264 = vld [vmem:[#allocation8 + $0xa0] sm:$0xff]
    %v2265 = vld [vmem:[#allocation8 + $0xa8] sm:$0xff]
    %v2266 = vld [vmem:[#allocation8 + $0xb0] sm:$0xf]
    %v2267 = vld [vmem:[#allocation8 + $0xb4] sm:$0xff]
    %v2268 = vld [vmem:[#allocation8 + $0xbc] sm:$0xff]
    %v2269 = vld [vmem:[#allocation8 + $0xc4] sm:$0xf]
    %v2270 = vld [vmem:[#allocation8 + $0xc8] sm:$0xff]
    %v2271 = vld [vmem:[#allocation8 + $0xd0] sm:$0xff]
    %v2272 = vld [vmem:[#allocation8 + $0xd8] sm:$0xf]
    %v2273 = vld [vmem:[#allocation8 + $0xdc] sm:$0xff]
    %v2274 = vld [vmem:[#allocation8 + $0xe4] sm:$0xff]
    %v2275 = vld [vmem:[#allocation8 + $0xec] sm:$0xf]
    %v2276 = vld [vmem:[#allocation8 + $0xf0] sm:$0xff]
    %v2277 = vld [vmem:[#allocation8 + $0xf8] sm:$0xff]
    %v2278 = vld [vmem:[#allocation8 + $0x100] sm:$0xf]
    %v2279 = vld [vmem:[#allocation8 + $0x104] sm:$0xff]
    %v2280 = vld [vmem:[#allocation8 + $0x10c] sm:$0xff]
    %v2281 = vld [vmem:[#allocation8 + $0x114] sm:$0xf]
    %v2282 = vld [vmem:[#allocation8 + $0x118] sm:$0xff]
    %v2283 = vld [vmem:[#allocation8 + $0x120] sm:$0xff]
    %v2284 = vld [vmem:[#allocation8 + $0x128] sm:$0xf]
    %v2285 = vld [vmem:[#allocation8 + $0x12c] sm:$0xff]
    %v2286 = vld [vmem:[#allocation8 + $0x134] sm:$0xff]
    %v2287 = vld [vmem:[#allocation8 + $0x13c] sm:$0xf]
    %v2288 = vld [vmem:[#allocation8 + $0x140] sm:$0xff]
    %v2289 = vld [vmem:[#allocation8 + $0x148] sm:$0xff]
    %v2290 = vld [vmem:[#allocation8 + $0x150] sm:$0xf]
    %v2291 = vld [vmem:[#allocation8 + $0x154] sm:$0xff]
    %v2292 = vld [vmem:[#allocation8 + $0x15c] sm:$0xff]
    %v2293 = vld [vmem:[#allocation8 + $0x164] sm:$0xf]
    %v2294 = vld [vmem:[#allocation8 + $0x168] sm:$0xff]
    %v2295 = vld [vmem:[#allocation8 + $0x170] sm:$0xff]
    %v2296 = vld [vmem:[#allocation8 + $0x178] sm:$0xf]
    %v2297 = vld [vmem:[#allocation8 + $0x17c] sm:$0xff]
    %v2298 = vld [vmem:[#allocation8 + $0x184] sm:$0xff]
    %v2299 = vld [vmem:[#allocation8 + $0x18c] sm:$0xf]
    %v2300 = vld [vmem:[#allocation8 + $0x190] sm:$0xff]
    %v2301 = vld [vmem:[#allocation8 + $0x198] sm:$0xff]
    %v2302 = vld [vmem:[#allocation8 + $0x1a0] sm:$0xf]
    %v2303 = vld [vmem:[#allocation8 + $0x1a4] sm:$0xff]
    %v2304 = vld [vmem:[#allocation8 + $0x1ac] sm:$0xff]
    %v2305 = vld [vmem:[#allocation8 + $0x1b4] sm:$0xf]
    %v2306 = vld [vmem:[#allocation8 + $0x1b8] sm:$0xff]
    %v2307 = vld [vmem:[#allocation8 + $0x1c0] sm:$0xff]
    %v2308 = vld [vmem:[#allocation8 + $0x1c8] sm:$0xf]
    %v2309 = vld [vmem:[#allocation8 + $0x1cc] sm:$0xff]
    %v2310 = vld [vmem:[#allocation8 + $0x1d4] sm:$0xff]
    %v2311 = vld [vmem:[#allocation8 + $0x1dc] sm:$0xf]
    %v2312 = vld [vmem:[#allocation8 + $0x1e0] sm:$0xff]
    %v2313 = vld [vmem:[#allocation8 + $0x1e8] sm:$0xff]
    %v2314 = vld [vmem:[#allocation8 + $0x1f0] sm:$0xf]
    %v2315 = vld [vmem:[#allocation8 + $0x1f4] sm:$0xff]
    %v2316 = vld [vmem:[#allocation8 + $0x1fc] sm:$0xff]
    %v2317 = vld [vmem:[#allocation8 + $0x204] sm:$0xf]
    %v2318 = vld [vmem:[#allocation8 + $0x208] sm:$0xff]
    %v2319 = vld [vmem:[#allocation8 + $0x210] sm:$0xff]
    %v2320 = vld [vmem:[#allocation8 + $0x218] sm:$0xf]
    %v2321 = vld [vmem:[#allocation8 + $0x21c] sm:$0xff]
    %v2322 = vld [vmem:[#allocation8 + $0x224] sm:$0xff]
    %v2323 = vld [vmem:[#allocation8 + $0x22c] sm:$0xf]
    %v2324 = vld [vmem:[#allocation8 + $0x230] sm:$0xff]
    %v2325 = vld [vmem:[#allocation8 + $0x238] sm:$0xff]
    %v2326 = vld [vmem:[#allocation8 + $0x240] sm:$0xf]
    %v2327 = vld [vmem:[#allocation8 + $0x244] sm:$0xff]
    %v2328 = vld [vmem:[#allocation8 + $0x24c] sm:$0xff]
    %v2329 = vld [vmem:[#allocation8 + $0x254] sm:$0xf]
    %v2330 = vld [vmem:[#allocation8 + $0x258] sm:$0xff]
    %v2331 = vld [vmem:[#allocation8 + $0x260] sm:$0xff]
    %v2332 = vld [vmem:[#allocation8 + $0x268] sm:$0xf]
    %v2333 = vld [vmem:[#allocation8 + $0x26c] sm:$0xff]
    %v2334 = vld [vmem:[#allocation8 + $0x274] sm:$0xff]
    %v2335 = vld [vmem:[#allocation8 + $0x27c] sm:$0xf]
    %v2336 = vld [vmem:[#allocation8 + $0x280] sm:$0xff]
    %v2337 = vld [vmem:[#allocation8 + $0x288] sm:$0xff]
    %v2338 = vld [vmem:[#allocation8 + $0x290] sm:$0xf]
    %v2339 = vld [vmem:[#allocation8 + $0x294] sm:$0xff]
    %v2340 = vld [vmem:[#allocation8 + $0x29c] sm:$0xff]
    %v2341 = vld [vmem:[#allocation8 + $0x2a4] sm:$0xf]
    %v2342 = vld [vmem:[#allocation8 + $0x2a8] sm:$0xff]
    %v2343 = vld [vmem:[#allocation8 + $0x2b0] sm:$0xff]
    %v2344 = vld [vmem:[#allocation8 + $0x2b8] sm:$0xf]
    %v2345 = vld [vmem:[#allocation8 + $0x2bc] sm:$0xff]
    %v2346 = vld [vmem:[#allocation8 + $0x2c4] sm:$0xff]
    %v2347 = vld [vmem:[#allocation8 + $0x2cc] sm:$0xf]
    %v2348 = vld [vmem:[#allocation8 + $0x2d0] sm:$0xff]
    %v2349 = vld [vmem:[#allocation8 + $0x2d8] sm:$0xff]
    %v2350 = vld [vmem:[#allocation8 + $0x2e0] sm:$0xf]
    %v2351 = vld [vmem:[#allocation8 + $0x2e4] sm:$0xff]
    %v2352 = vld [vmem:[#allocation8 + $0x2ec] sm:$0xff]
    %v2353 = vld [vmem:[#allocation8 + $0x2f4] sm:$0xf]
    %v2354 = vld [vmem:[#allocation8 + $0x2f8] sm:$0xff]
    %v2355 = vld [vmem:[#allocation8 + $0x300] sm:$0xff]
    %v2356 = vld [vmem:[#allocation8 + $0x308] sm:$0xf]
    %v2357 = vld [vmem:[#allocation8 + $0x30c] sm:$0xff]
    %v2358 = vld [vmem:[#allocation8 + $0x314] sm:$0xff]
    %v2359 = vld [vmem:[#allocation8 + $0x31c] sm:$0xf]
    %v2360 = vld [vmem:[#allocation8 + $0x320] sm:$0xff]
    %v2361 = vld [vmem:[#allocation8 + $0x328] sm:$0xff]
    %v2362 = vld [vmem:[#allocation8 + $0x330] sm:$0xf]
    %v2363 = vld [vmem:[#allocation8 + $0x334] sm:$0xff]
    %v2364 = vld [vmem:[#allocation8 + $0x33c] sm:$0xff]
    %v2365 = vld [vmem:[#allocation8 + $0x344] sm:$0xf]
    %v2366 = vld [vmem:[#allocation8 + $0x348] sm:$0xff]
    %v2367 = vld [vmem:[#allocation8 + $0x350] sm:$0xff]
    %v2368 = vld [vmem:[#allocation8 + $0x358] sm:$0xf]
    %v2369 = vld [vmem:[#allocation8 + $0x35c] sm:$0xff]
    %v2370 = vld [vmem:[#allocation8 + $0x364] sm:$0xff]
    %v2371 = vld [vmem:[#allocation8 + $0x36c] sm:$0xf]
    %v2372 = vld [vmem:[#allocation8 + $0x370] sm:$0xff]
    %v2373 = vld [vmem:[#allocation8 + $0x378] sm:$0xff]
    %v2374 = vld [vmem:[#allocation8 + $0x380] sm:$0xf]
    %v2375 = vld [vmem:[#allocation8 + $0x384] sm:$0xff]
    %v2376 = vld [vmem:[#allocation8 + $0x38c] sm:$0xff]
    %v2377 = vld [vmem:[#allocation8 + $0x394] sm:$0xf]
    %v2378 = vld [vmem:[#allocation8 + $0x398] sm:$0xff]
    %v2379 = vld [vmem:[#allocation8 + $0x3a0] sm:$0xff]
    %v2380 = vld [vmem:[#allocation8 + $0x3a8] sm:$0xf]
    %v2381 = vld [vmem:[#allocation8 + $0x3ac] sm:$0xff]
    %v2382 = vld [vmem:[#allocation8 + $0x3b4] sm:$0xff]
    %v2383 = vld [vmem:[#allocation8 + $0x3bc] sm:$0xf]
    %v2384 = vld [vmem:[#allocation8 + $0x3c0] sm:$0xff]
    %v2385 = vld [vmem:[#allocation8 + $0x3c8] sm:$0xff]
    %v2386 = vld [vmem:[#allocation8 + $0x3d0] sm:$0xf]
    %v2387 = vld [vmem:[#allocation8 + $0x3d4] sm:$0xff]
    %v2388 = vld [vmem:[#allocation8 + $0x3dc] sm:$0xff]
    %v2389 = vld [vmem:[#allocation8 + $0x3e4] sm:$0xf]
    %v2390 = vld [vmem:[#allocation8 + $0x3e8] sm:$0xff]
    %v2391 = vld [vmem:[#allocation8 + $0x3f0] sm:$0xff]
    %v2392 = vld [vmem:[#allocation8 + $0x3f8] sm:$0xf]
    %v2393 = vld [vmem:[#allocation8 + $0x3fc] sm:$0xff]
    %v2394 = vld [vmem:[#allocation8 + $0x404] sm:$0xff]
    %v2395 = vld [vmem:[#allocation8 + $0x40c] sm:$0xf]
    %v2396 = vld [vmem:[#allocation8 + $0x410] sm:$0xff]
    %v2397 = vld [vmem:[#allocation8 + $0x418] sm:$0xff]
    %v2398 = vld [vmem:[#allocation8 + $0x420] sm:$0xf]
    %v2399 = vld [vmem:[#allocation8 + $0x424] sm:$0xff]
    %v2400 = vld [vmem:[#allocation8 + $0x42c] sm:$0xff]
    %v2401 = vld [vmem:[#allocation8 + $0x434] sm:$0xf]
    %v2402 = vld [vmem:[#allocation8 + $0x438] sm:$0xff]
    %v2403 = vld [vmem:[#allocation8 + $0x440] sm:$0xff]
    %v2404 = vld [vmem:[#allocation8 + $0x448] sm:$0xf]
    %v2405 = vld [vmem:[#allocation8 + $0x44c] sm:$0xff]
    %v2406 = vld [vmem:[#allocation8 + $0x454] sm:$0xff]
    %v2407 = vld [vmem:[#allocation8 + $0x45c] sm:$0xf]
    %v2408 = vld [vmem:[#allocation8 + $0x460] sm:$0xff]
    %v2409 = vld [vmem:[#allocation8 + $0x468] sm:$0xff]
    %v2410 = vld [vmem:[#allocation8 + $0x470] sm:$0xf]
    %v2411 = vld [vmem:[#allocation8 + $0x474] sm:$0xff]
    %v2412 = vld [vmem:[#allocation8 + $0x47c] sm:$0xff]
    %v2413 = vld [vmem:[#allocation8 + $0x484] sm:$0xf]
    %v2414 = vld [vmem:[#allocation8 + $0x488] sm:$0xff]
    %v2415 = vld [vmem:[#allocation8 + $0x490] sm:$0xff]
    %v2416 = vld [vmem:[#allocation8 + $0x498] sm:$0xf]
    %v2417 = vld [vmem:[#allocation8 + $0x49c] sm:$0xff]
    %v2418 = vld [vmem:[#allocation8 + $0x4a4] sm:$0xff]
    %v2419 = vld [vmem:[#allocation8 + $0x4ac] sm:$0xf]
    %v2420 = vld [vmem:[#allocation8 + $0x4b0] sm:$0xff]
    %v2421 = vld [vmem:[#allocation8 + $0x4b8] sm:$0xff]
    %v2422 = vld [vmem:[#allocation8 + $0x4c0] sm:$0xf]
    %v2423 = vld [vmem:[#allocation8 + $0x4c4] sm:$0xff]
    %v2424 = vld [vmem:[#allocation8 + $0x4cc] sm:$0xff]
    %v2425 = vld [vmem:[#allocation8 + $0x4d4] sm:$0xf]
    %v2426 = vld [vmem:[#allocation8 + $0x4d8] sm:$0xff]
    %v2427 = vld [vmem:[#allocation8 + $0x4e0] sm:$0xff]
    %v2428 = vld [vmem:[#allocation8 + $0x4e8] sm:$0xf]
    %v2429 = vld [vmem:[#allocation8 + $0x4ec] sm:$0xff]
    %v2430 = vld [vmem:[#allocation8 + $0x4f4] sm:$0xff]
    %v2431 = vld [vmem:[#allocation8 + $0x4fc] sm:$0xf]
    %v2624 = vunpack.c.l.b16 %v2240
    %v2625 = vunpack.c.h.b16 %v2240
    %v2626 = vunpack.c.l.b16 %v2241
    %v2627 = vunpack.c.h.b16 %v2241
    %v2628 = vunpack.c.l.b16 %v2242
    %v2629 = vunpack.c.l.b16 %v2243
    %v2630 = vunpack.c.h.b16 %v2243
    %v2631 = vunpack.c.l.b16 %v2244
    %v2632 = vunpack.c.h.b16 %v2244
    %v2633 = vunpack.c.l.b16 %v2245
    %v2634 = vunpack.c.l.b16 %v2246
    %v2635 = vunpack.c.h.b16 %v2246
    %v2636 = vunpack.c.l.b16 %v2247
    %v2637 = vunpack.c.h.b16 %v2247
    %v2638 = vunpack.c.l.b16 %v2248
    %v2639 = vunpack.c.l.b16 %v2249
    %v2640 = vunpack.c.h.b16 %v2249
    %v2641 = vunpack.c.l.b16 %v2250
    %v2642 = vunpack.c.h.b16 %v2250
    %v2643 = vunpack.c.l.b16 %v2251
    %v2644 = vunpack.c.l.b16 %v2252
    %v2645 = vunpack.c.h.b16 %v2252
    %v2646 = vunpack.c.l.b16 %v2253
    %v2647 = vunpack.c.h.b16 %v2253
    %v2648 = vunpack.c.l.b16 %v2254
    %v2649 = vunpack.c.l.b16 %v2255
    %v2650 = vunpack.c.h.b16 %v2255
    %v2651 = vunpack.c.l.b16 %v2256
    %v2652 = vunpack.c.h.b16 %v2256
    %v2653 = vunpack.c.l.b16 %v2257
    %v2654 = vunpack.c.l.b16 %v2258
    %v2655 = vunpack.c.h.b16 %v2258
    %v2656 = vunpack.c.l.b16 %v2259
    %v2657 = vunpack.c.h.b16 %v2259
    %v2658 = vunpack.c.l.b16 %v2260
    %v2659 = vunpack.c.l.b16 %v2261
    %v2660 = vunpack.c.h.b16 %v2261
    %v2661 = vunpack.c.l.b16 %v2262
    %v2662 = vunpack.c.h.b16 %v2262
    %v2663 = vunpack.c.l.b16 %v2263
    %v2664 = vunpack.c.l.b16 %v2264
    %v2665 = vunpack.c.h.b16 %v2264
    %v2666 = vunpack.c.l.b16 %v2265
    %v2667 = vunpack.c.h.b16 %v2265
    %v2668 = vunpack.c.l.b16 %v2266
    %v2669 = vunpack.c.l.b16 %v2267
    %v2670 = vunpack.c.h.b16 %v2267
    %v2671 = vunpack.c.l.b16 %v2268
    %v2672 = vunpack.c.h.b16 %v2268
    %v2673 = vunpack.c.l.b16 %v2269
    %v2674 = vunpack.c.l.b16 %v2270
    %v2675 = vunpack.c.h.b16 %v2270
    %v2676 = vunpack.c.l.b16 %v2271
    %v2677 = vunpack.c.h.b16 %v2271
    %v2678 = vunpack.c.l.b16 %v2272
    %v2679 = vunpack.c.l.b16 %v2273
    %v2680 = vunpack.c.h.b16 %v2273
    %v2681 = vunpack.c.l.b16 %v2274
    %v2682 = vunpack.c.h.b16 %v2274
    %v2683 = vunpack.c.l.b16 %v2275
    %v2684 = vunpack.c.l.b16 %v2276
    %v2685 = vunpack.c.h.b16 %v2276
    %v2686 = vunpack.c.l.b16 %v2277
    %v2687 = vunpack.c.h.b16 %v2277
    %v2688 = vunpack.c.l.b16 %v2278
    %v2689 = vunpack.c.l.b16 %v2279
    %v2690 = vunpack.c.h.b16 %v2279
    %v2691 = vunpack.c.l.b16 %v2280
    %v2692 = vunpack.c.h.b16 %v2280
    %v2693 = vunpack.c.l.b16 %v2281
    %v2694 = vunpack.c.l.b16 %v2282
    %v2695 = vunpack.c.h.b16 %v2282
    %v2696 = vunpack.c.l.b16 %v2283
    %v2697 = vunpack.c.h.b16 %v2283
    %v2698 = vunpack.c.l.b16 %v2284
    %v2699 = vunpack.c.l.b16 %v2285
    %v2700 = vunpack.c.h.b16 %v2285
    %v2701 = vunpack.c.l.b16 %v2286
    %v2702 = vunpack.c.h.b16 %v2286
    %v2703 = vunpack.c.l.b16 %v2287
    %v2704 = vunpack.c.l.b16 %v2288
    %v2705 = vunpack.c.h.b16 %v2288
    %v2706 = vunpack.c.l.b16 %v2289
    %v2707 = vunpack.c.h.b16 %v2289
    %v2708 = vunpack.c.l.b16 %v2290
    %v2709 = vunpack.c.l.b16 %v2291
    %v2710 = vunpack.c.h.b16 %v2291
    %v2711 = vunpack.c.l.b16 %v2292
    %v2712 = vunpack.c.h.b16 %v2292
    %v2713 = vunpack.c.l.b16 %v2293
    %v2714 = vunpack.c.l.b16 %v2294
    %v2715 = vunpack.c.h.b16 %v2294
    %v2716 = vunpack.c.l.b16 %v2295
    %v2717 = vunpack.c.h.b16 %v2295
    %v2718 = vunpack.c.l.b16 %v2296
    %v2719 = vunpack.c.l.b16 %v2297
    %v2720 = vunpack.c.h.b16 %v2297
    %v2721 = vunpack.c.l.b16 %v2298
    %v2722 = vunpack.c.h.b16 %v2298
    %v2723 = vunpack.c.l.b16 %v2299
    %v2724 = vunpack.c.l.b16 %v2300
    %v2725 = vunpack.c.h.b16 %v2300
    %v2726 = vunpack.c.l.b16 %v2301
    %v2727 = vunpack.c.h.b16 %v2301
    %v2728 = vunpack.c.l.b16 %v2302
    %v2729 = vunpack.c.l.b16 %v2303
    %v2730 = vunpack.c.h.b16 %v2303
    %v2731 = vunpack.c.l.b16 %v2304
    %v2732 = vunpack.c.h.b16 %v2304
    %v2733 = vunpack.c.l.b16 %v2305
    %v2734 = vunpack.c.l.b16 %v2306
    %v2735 = vunpack.c.h.b16 %v2306
    %v2736 = vunpack.c.l.b16 %v2307
    %v2737 = vunpack.c.h.b16 %v2307
    %v2738 = vunpack.c.l.b16 %v2308
    %v2739 = vunpack.c.l.b16 %v2309
    %v2740 = vunpack.c.h.b16 %v2309
    %v2741 = vunpack.c.l.b16 %v2310
    %v2742 = vunpack.c.h.b16 %v2310
    %v2743 = vunpack.c.l.b16 %v2311
    %v2744 = vunpack.c.l.b16 %v2312
    %v2745 = vunpack.c.h.b16 %v2312
    %v2746 = vunpack.c.l.b16 %v2313
    %v2747 = vunpack.c.h.b16 %v2313
    %v2748 = vunpack.c.l.b16 %v2314
    %v2749 = vunpack.c.l.b16 %v2315
    %v2750 = vunpack.c.h.b16 %v2315
    %v2751 = vunpack.c.l.b16 %v2316
    %v2752 = vunpack.c.h.b16 %v2316
    %v2753 = vunpack.c.l.b16 %v2317
    %v2754 = vunpack.c.l.b16 %v2318
    %v2755 = vunpack.c.h.b16 %v2318
    %v2756 = vunpack.c.l.b16 %v2319
    %v2757 = vunpack.c.h.b16 %v2319
    %v2758 = vunpack.c.l.b16 %v2320
    %v2759 = vunpack.c.l.b16 %v2321
    %v2760 = vunpack.c.h.b16 %v2321
    %v2761 = vunpack.c.l.b16 %v2322
    %v2762 = vunpack.c.h.b16 %v2322
    %v2763 = vunpack.c.l.b16 %v2323
    %v2764 = vunpack.c.l.b16 %v2324
    %v2765 = vunpack.c.h.b16 %v2324
    %v2766 = vunpack.c.l.b16 %v2325
    %v2767 = vunpack.c.h.b16 %v2325
    %v2768 = vunpack.c.l.b16 %v2326
    %v2769 = vunpack.c.l.b16 %v2327
    %v2770 = vunpack.c.h.b16 %v2327
    %v2771 = vunpack.c.l.b16 %v2328
    %v2772 = vunpack.c.h.b16 %v2328
    %v2773 = vunpack.c.l.b16 %v2329
    %v2774 = vunpack.c.l.b16 %v2330
    %v2775 = vunpack.c.h.b16 %v2330
    %v2776 = vunpack.c.l.b16 %v2331
    %v2777 = vunpack.c.h.b16 %v2331
    %v2778 = vunpack.c.l.b16 %v2332
    %v2779 = vunpack.c.l.b16 %v2333
    %v2780 = vunpack.c.h.b16 %v2333
    %v2781 = vunpack.c.l.b16 %v2334
    %v2782 = vunpack.c.h.b16 %v2334
    %v2783 = vunpack.c.l.b16 %v2335
    %v2784 = vunpack.c.l.b16 %v2336
    %v2785 = vunpack.c.h.b16 %v2336
    %v2786 = vunpack.c.l.b16 %v2337
    %v2787 = vunpack.c.h.b16 %v2337
    %v2788 = vunpack.c.l.b16 %v2338
    %v2789 = vunpack.c.l.b16 %v2339
    %v2790 = vunpack.c.h.b16 %v2339
    %v2791 = vunpack.c.l.b16 %v2340
    %v2792 = vunpack.c.h.b16 %v2340
    %v2793 = vunpack.c.l.b16 %v2341
    %v2794 = vunpack.c.l.b16 %v2342
    %v2795 = vunpack.c.h.b16 %v2342
    %v2796 = vunpack.c.l.b16 %v2343
    %v2797 = vunpack.c.h.b16 %v2343
    %v2798 = vunpack.c.l.b16 %v2344
    %v2799 = vunpack.c.l.b16 %v2345
    %v2800 = vunpack.c.h.b16 %v2345
    %v2801 = vunpack.c.l.b16 %v2346
    %v2802 = vunpack.c.h.b16 %v2346
    %v2803 = vunpack.c.l.b16 %v2347
    %v2804 = vunpack.c.l.b16 %v2348
    %v2805 = vunpack.c.h.b16 %v2348
    %v2806 = vunpack.c.l.b16 %v2349
    %v2807 = vunpack.c.h.b16 %v2349
    %v2808 = vunpack.c.l.b16 %v2350
    %v2809 = vunpack.c.l.b16 %v2351
    %v2810 = vunpack.c.h.b16 %v2351
    %v2811 = vunpack.c.l.b16 %v2352
    %v2812 = vunpack.c.h.b16 %v2352
    %v2813 = vunpack.c.l.b16 %v2353
    %v2814 = vunpack.c.l.b16 %v2354
    %v2815 = vunpack.c.h.b16 %v2354
    %v2816 = vunpack.c.l.b16 %v2355
    %v2817 = vunpack.c.h.b16 %v2355
    %v2818 = vunpack.c.l.b16 %v2356
    %v2819 = vunpack.c.l.b16 %v2357
    %v2820 = vunpack.c.h.b16 %v2357
    %v2821 = vunpack.c.l.b16 %v2358
    %v2822 = vunpack.c.h.b16 %v2358
    %v2823 = vunpack.c.l.b16 %v2359
    %v2824 = vunpack.c.l.b16 %v2360
    %v2825 = vunpack.c.h.b16 %v2360
    %v2826 = vunpack.c.l.b16 %v2361
    %v2827 = vunpack.c.h.b16 %v2361
    %v2828 = vunpack.c.l.b16 %v2362
    %v2829 = vunpack.c.l.b16 %v2363
    %v2830 = vunpack.c.h.b16 %v2363
    %v2831 = vunpack.c.l.b16 %v2364
    %v2832 = vunpack.c.h.b16 %v2364
    %v2833 = vunpack.c.l.b16 %v2365
    %v2834 = vunpack.c.l.b16 %v2366
    %v2835 = vunpack.c.h.b16 %v2366
    %v2836 = vunpack.c.l.b16 %v2367
    %v2837 = vunpack.c.h.b16 %v2367
    %v2838 = vunpack.c.l.b16 %v2368
    %v2839 = vunpack.c.l.b16 %v2369
    %v2840 = vunpack.c.h.b16 %v2369
    %v2841 = vunpack.c.l.b16 %v2370
    %v2842 = vunpack.c.h.b16 %v2370
    %v2843 = vunpack.c.l.b16 %v2371
    %v2844 = vunpack.c.l.b16 %v2372
    %v2845 = vunpack.c.h.b16 %v2372
    %v2846 = vunpack.c.l.b16 %v2373
    %v2847 = vunpack.c.h.b16 %v2373
    %v2848 = vunpack.c.l.b16 %v2374
    %v2849 = vunpack.c.l.b16 %v2375
    %v2850 = vunpack.c.h.b16 %v2375
    %v2851 = vunpack.c.l.b16 %v2376
    %v2852 = vunpack.c.h.b16 %v2376
    %v2853 = vunpack.c.l.b16 %v2377
    %v2854 = vunpack.c.l.b16 %v2378
    %v2855 = vunpack.c.h.b16 %v2378
    %v2856 = vunpack.c.l.b16 %v2379
    %v2857 = vunpack.c.h.b16 %v2379
    %v2858 = vunpack.c.l.b16 %v2380
    %v2859 = vunpack.c.l.b16 %v2381
    %v2860 = vunpack.c.h.b16 %v2381
    %v2861 = vunpack.c.l.b16 %v2382
    %v2862 = vunpack.c.h.b16 %v2382
    %v2863 = vunpack.c.l.b16 %v2383
    %v2864 = vunpack.c.l.b16 %v2384
    %v2865 = vunpack.c.h.b16 %v2384
    %v2866 = vunpack.c.l.b16 %v2385
    %v2867 = vunpack.c.h.b16 %v2385
    %v2868 = vunpack.c.l.b16 %v2386
    %v2869 = vunpack.c.l.b16 %v2387
    %v2870 = vunpack.c.h.b16 %v2387
    %v2871 = vunpack.c.l.b16 %v2388
    %v2872 = vunpack.c.h.b16 %v2388
    %v2873 = vunpack.c.l.b16 %v2389
    %v2874 = vunpack.c.l.b16 %v2390
    %v2875 = vunpack.c.h.b16 %v2390
    %v2876 = vunpack.c.l.b16 %v2391
    %v2877 = vunpack.c.h.b16 %v2391
    %v2878 = vunpack.c.l.b16 %v2392
    %v2879 = vunpack.c.l.b16 %v2393
    %v2880 = vunpack.c.h.b16 %v2393
    %v2881 = vunpack.c.l.b16 %v2394
    %v2882 = vunpack.c.h.b16 %v2394
    %v2883 = vunpack.c.l.b16 %v2395
    %v2884 = vunpack.c.l.b16 %v2396
    %v2885 = vunpack.c.h.b16 %v2396
    %v2886 = vunpack.c.l.b16 %v2397
    %v2887 = vunpack.c.h.b16 %v2397
    %v2888 = vunpack.c.l.b16 %v2398
    %v2889 = vunpack.c.l.b16 %v2399
    %v2890 = vunpack.c.h.b16 %v2399
    %v2891 = vunpack.c.l.b16 %v2400
    %v2892 = vunpack.c.h.b16 %v2400
    %v2893 = vunpack.c.l.b16 %v2401
    %v2894 = vunpack.c.l.b16 %v2402
    %v2895 = vunpack.c.h.b16 %v2402
    %v2896 = vunpack.c.l.b16 %v2403
    %v2897 = vunpack.c.h.b16 %v2403
    %v2898 = vunpack.c.l.b16 %v2404
    %v2899 = vunpack.c.l.b16 %v2405
    %v2900 = vunpack.c.h.b16 %v2405
    %v2901 = vunpack.c.l.b16 %v2406
    %v2902 = vunpack.c.h.b16 %v2406
    %v2903 = vunpack.c.l.b16 %v2407
    %v2904 = vunpack.c.l.b16 %v2408
    %v2905 = vunpack.c.h.b16 %v2408
    %v2906 = vunpack.c.l.b16 %v2409
    %v2907 = vunpack.c.h.b16 %v2409
    %v2908 = vunpack.c.l.b16 %v2410
    %v2909 = vunpack.c.l.b16 %v2411
    %v2910 = vunpack.c.h.b16 %v2411
    %v2911 = vunpack.c.l.b16 %v2412
    %v2912 = vunpack.c.h.b16 %v2412
    %v2913 = vunpack.c.l.b16 %v2413
    %v2914 = vunpack.c.l.b16 %v2414
    %v2915 = vunpack.c.h.b16 %v2414
    %v2916 = vunpack.c.l.b16 %v2415
    %v2917 = vunpack.c.h.b16 %v2415
    %v2918 = vunpack.c.l.b16 %v2416
    %v2919 = vunpack.c.l.b16 %v2417
    %v2920 = vunpack.c.h.b16 %v2417
    %v2921 = vunpack.c.l.b16 %v2418
    %v2922 = vunpack.c.h.b16 %v2418
    %v2923 = vunpack.c.l.b16 %v2419
    %v2924 = vunpack.c.l.b16 %v2420
    %v2925 = vunpack.c.h.b16 %v2420
    %v2926 = vunpack.c.l.b16 %v2421
    %v2927 = vunpack.c.h.b16 %v2421
    %v2928 = vunpack.c.l.b16 %v2422
    %v2929 = vunpack.c.l.b16 %v2423
    %v2930 = vunpack.c.h.b16 %v2423
    %v2931 = vunpack.c.l.b16 %v2424
    %v2932 = vunpack.c.h.b16 %v2424
    %v2933 = vunpack.c.l.b16 %v2425
    %v2934 = vunpack.c.l.b16 %v2426
    %v2935 = vunpack.c.h.b16 %v2426
    %v2936 = vunpack.c.l.b16 %v2427
    %v2937 = vunpack.c.h.b16 %v2427
    %v2938 = vunpack.c.l.b16 %v2428
    %v2939 = vunpack.c.l.b16 %v2429
    %v2940 = vunpack.c.h.b16 %v2429
    %v2941 = vunpack.c.l.b16 %v2430
    %v2942 = vunpack.c.h.b16 %v2430
    %v2943 = vunpack.c.l.b16 %v2431
    %v2944 = vpack.c.b16 %v2629, %v2624
    %v2945 = vpack.c.b16 %v2630, %v2625
    %v2946 = vpack.c.b16 %v2631, %v2626
    %v2947 = vpack.c.b16 %v2632, %v2627
    %v2948 = vpack.c.b16 %v2633, %v2628
    %v2949 = vpack.c.b16 %v2639, %v2634
    %v2950 = vpack.c.b16 %v2640, %v2635
    %v2951 = vpack.c.b16 %v2641, %v2636
    %v2952 = vpack.c.b16 %v2642, %v2637
    %v2953 = vpack.c.b16 %v2643, %v2638
    %v2954 = vpack.c.b16 %v2649, %v2644
    %v2955 = vpack.c.b16 %v2650, %v2645
    %v2956 = vpack.c.b16 %v2651, %v2646
    %v2957 = vpack.c.b16 %v2652, %v2647
    %v2958 = vpack.c.b16 %v2653, %v2648
    %v2959 = vpack.c.b16 %v2659, %v2654
    %v2960 = vpack.c.b16 %v2660, %v2655
    %v2961 = vpack.c.b16 %v2661, %v2656
    %v2962 = vpack.c.b16 %v2662, %v2657
    %v2963 = vpack.c.b16 %v2663, %v2658
    %v2964 = vpack.c.b16 %v2669, %v2664
    %v2965 = vpack.c.b16 %v2670, %v2665
    %v2966 = vpack.c.b16 %v2671, %v2666
    %v2967 = vpack.c.b16 %v2672, %v2667
    %v2968 = vpack.c.b16 %v2673, %v2668
    %v2969 = vpack.c.b16 %v2679, %v2674
    %v2970 = vpack.c.b16 %v2680, %v2675
    %v2971 = vpack.c.b16 %v2681, %v2676
    %v2972 = vpack.c.b16 %v2682, %v2677
    %v2973 = vpack.c.b16 %v2683, %v2678
    %v2974 = vpack.c.b16 %v2689, %v2684
    %v2975 = vpack.c.b16 %v2690, %v2685
    %v2976 = vpack.c.b16 %v2691, %v2686
    %v2977 = vpack.c.b16 %v2692, %v2687
    %v2978 = vpack.c.b16 %v2693, %v2688
    %v2979 = vpack.c.b16 %v2699, %v2694
    %v2980 = vpack.c.b16 %v2700, %v2695
    %v2981 = vpack.c.b16 %v2701, %v2696
    %v2982 = vpack.c.b16 %v2702, %v2697
    %v2983 = vpack.c.b16 %v2703, %v2698
    %v2984 = vpack.c.b16 %v2709, %v2704
    %v2985 = vpack.c.b16 %v2710, %v2705
    %v2986 = vpack.c.b16 %v2711, %v2706
    %v2987 = vpack.c.b16 %v2712, %v2707
    %v2988 = vpack.c.b16 %v2713, %v2708
    %v2989 = vpack.c.b16 %v2719, %v2714
    %v2990 = vpack.c.b16 %v2720, %v2715
    %v2991 = vpack.c.b16 %v2721, %v2716
    %v2992 = vpack.c.b16 %v2722, %v2717
    %v2993 = vpack.c.b16 %v2723, %v2718
    %v2994 = vpack.c.b16 %v2729, %v2724
    %v2995 = vpack.c.b16 %v2730, %v2725
    %v2996 = vpack.c.b16 %v2731, %v2726
    %v2997 = vpack.c.b16 %v2732, %v2727
    %v2998 = vpack.c.b16 %v2733, %v2728
    %v2999 = vpack.c.b16 %v2739, %v2734
    %v3000 = vpack.c.b16 %v2740, %v2735
    %v3001 = vpack.c.b16 %v2741, %v2736
    %v3002 = vpack.c.b16 %v2742, %v2737
    %v3003 = vpack.c.b16 %v2743, %v2738
    %v3004 = vpack.c.b16 %v2749, %v2744
    %v3005 = vpack.c.b16 %v2750, %v2745
    %v3006 = vpack.c.b16 %v2751, %v2746
    %v3007 = vpack.c.b16 %v2752, %v2747
    %v3008 = vpack.c.b16 %v2753, %v2748
    %v3009 = vpack.c.b16 %v2759, %v2754
    %v3010 = vpack.c.b16 %v2760, %v2755
    %v3011 = vpack.c.b16 %v2761, %v2756
    %v3012 = vpack.c.b16 %v2762, %v2757
    %v3013 = vpack.c.b16 %v2763, %v2758
    %v3014 = vpack.c.b16 %v2769, %v2764
    %v3015 = vpack.c.b16 %v2770, %v2765
    %v3016 = vpack.c.b16 %v2771, %v2766
    %v3017 = vpack.c.b16 %v2772, %v2767
    %v3018 = vpack.c.b16 %v2773, %v2768
    %v3019 = vpack.c.b16 %v2779, %v2774
    %v3020 = vpack.c.b16 %v2780, %v2775
    %v3021 = vpack.c.b16 %v2781, %v2776
    %v3022 = vpack.c.b16 %v2782, %v2777
    %v3023 = vpack.c.b16 %v2783, %v2778
    %v3024 = vpack.c.b16 %v2789, %v2784
    %v3025 = vpack.c.b16 %v2790, %v2785
    %v3026 = vpack.c.b16 %v2791, %v2786
    %v3027 = vpack.c.b16 %v2792, %v2787
    %v3028 = vpack.c.b16 %v2793, %v2788
    %v3029 = vpack.c.b16 %v2799, %v2794
    %v3030 = vpack.c.b16 %v2800, %v2795
    %v3031 = vpack.c.b16 %v2801, %v2796
    %v3032 = vpack.c.b16 %v2802, %v2797
    %v3033 = vpack.c.b16 %v2803, %v2798
    %v3034 = vpack.c.b16 %v2809, %v2804
    %v3035 = vpack.c.b16 %v2810, %v2805
    %v3036 = vpack.c.b16 %v2811, %v2806
    %v3037 = vpack.c.b16 %v2812, %v2807
    %v3038 = vpack.c.b16 %v2813, %v2808
    %v3039 = vpack.c.b16 %v2819, %v2814
    %v3040 = vpack.c.b16 %v2820, %v2815
    %v3041 = vpack.c.b16 %v2821, %v2816
    %v3042 = vpack.c.b16 %v2822, %v2817
    %v3043 = vpack.c.b16 %v2823, %v2818
    %v3044 = vpack.c.b16 %v2829, %v2824
    %v3045 = vpack.c.b16 %v2830, %v2825
    %v3046 = vpack.c.b16 %v2831, %v2826
    %v3047 = vpack.c.b16 %v2832, %v2827
    %v3048 = vpack.c.b16 %v2833, %v2828
    %v3049 = vpack.c.b16 %v2839, %v2834
    %v3050 = vpack.c.b16 %v2840, %v2835
    %v3051 = vpack.c.b16 %v2841, %v2836
    %v3052 = vpack.c.b16 %v2842, %v2837
    %v3053 = vpack.c.b16 %v2843, %v2838
    %v3054 = vpack.c.b16 %v2849, %v2844
    %v3055 = vpack.c.b16 %v2850, %v2845
    %v3056 = vpack.c.b16 %v2851, %v2846
    %v3057 = vpack.c.b16 %v2852, %v2847
    %v3058 = vpack.c.b16 %v2853, %v2848
    %v3059 = vpack.c.b16 %v2859, %v2854
    %v3060 = vpack.c.b16 %v2860, %v2855
    %v3061 = vpack.c.b16 %v2861, %v2856
    %v3062 = vpack.c.b16 %v2862, %v2857
    %v3063 = vpack.c.b16 %v2863, %v2858
    %v3064 = vpack.c.b16 %v2869, %v2864
    %v3065 = vpack.c.b16 %v2870, %v2865
    %v3066 = vpack.c.b16 %v2871, %v2866
    %v3067 = vpack.c.b16 %v2872, %v2867
    %v3068 = vpack.c.b16 %v2873, %v2868
    %v3069 = vpack.c.b16 %v2879, %v2874
    %v3070 = vpack.c.b16 %v2880, %v2875
    %v3071 = vpack.c.b16 %v2881, %v2876
    %v3072 = vpack.c.b16 %v2882, %v2877
    %v3073 = vpack.c.b16 %v2883, %v2878
    %v3074 = vpack.c.b16 %v2889, %v2884
    %v3075 = vpack.c.b16 %v2890, %v2885
    %v3076 = vpack.c.b16 %v2891, %v2886
    %v3077 = vpack.c.b16 %v2892, %v2887
    %v3078 = vpack.c.b16 %v2893, %v2888
    %v3079 = vpack.c.b16 %v2899, %v2894
    %v3080 = vpack.c.b16 %v2900, %v2895
    %v3081 = vpack.c.b16 %v2901, %v2896
    %v3082 = vpack.c.b16 %v2902, %v2897
    %v3083 = vpack.c.b16 %v2903, %v2898
    %v3084 = vpack.c.b16 %v2909, %v2904
    %v3085 = vpack.c.b16 %v2910, %v2905
    %v3086 = vpack.c.b16 %v2911, %v2906
    %v3087 = vpack.c.b16 %v2912, %v2907
    %v3088 = vpack.c.b16 %v2913, %v2908
    %v3089 = vpack.c.b16 %v2919, %v2914
    %v3090 = vpack.c.b16 %v2920, %v2915
    %v3091 = vpack.c.b16 %v2921, %v2916
    %v3092 = vpack.c.b16 %v2922, %v2917
    %v3093 = vpack.c.b16 %v2923, %v2918
    %v3094 = vpack.c.b16 %v2929, %v2924
    %v3095 = vpack.c.b16 %v2930, %v2925
    %v3096 = vpack.c.b16 %v2931, %v2926
    %v3097 = vpack.c.b16 %v2932, %v2927
    %v3098 = vpack.c.b16 %v2933, %v2928
    %v3099 = vpack.c.b16 %v2939, %v2934
    %v3100 = vpack.c.b16 %v2940, %v2935
    %v3101 = vpack.c.b16 %v2941, %v2936
    %v3102 = vpack.c.b16 %v2942, %v2937
    %v3103 = vpack.c.b16 %v2943, %v2938
    %3264 = vmatpush.bf16.msra.mxu0 %v2979
    %3265 = vmatpush.bf16.msra.mxu0 %v2974
    %3266 = vmatpush.bf16.msra.mxu0 %v2969
    %3267 = vmatpush.bf16.msra.mxu0 %v2964
    %3268 = vmatpush.bf16.msra.mxu0 %v2959
    %3269 = vmatpush.bf16.msra.mxu0 %v2954
    %3270 = vmatpush.bf16.msra.mxu0 %v2949
    %3271 = vmatpush.bf16.msra.mxu0 %v2944
    %3272 = vmatmul.bf16.gmra.mxu0 %v2236
    %v3273 = vpop.f32.mrf.mxu0
    %v3274 = vadd.f32 0.0, %v3273
    %v3275 = vpop.f32.mrf.mxu0
    %v3276 = vadd.f32 0.0, %v3275
    %3277 = vdwg.mxu0
    %3278 = vmatpush.bf16.msra.mxu0 %v3019
    %3279 = vmatpush.bf16.msra.mxu0 %v3014
    %3280 = vmatpush.bf16.msra.mxu0 %v3009
    %3281 = vmatpush.bf16.msra.mxu0 %v3004
    %3282 = vmatpush.bf16.msra.mxu0 %v2999
    %3283 = vmatpush.bf16.msra.mxu0 %v2994
    %3284 = vmatpush.bf16.msra.mxu0 %v2989
    %3285 = vmatpush.bf16.msra.mxu0 %v2984
    %3286 = vmatmul.bf16.gmra.mxu0 %v2237
    %v3287 = vpop.f32.mrf.mxu0
    %v3288 = vadd.f32 %v3274, %v3287
    %v3289 = vpop.f32.mrf.mxu0
    %v3290 = vadd.f32 %v3276, %v3289
    %3291 = vdwg.mxu0
    %3292 = vmatpush.bf16.msra.mxu0 %v3059
    %3293 = vmatpush.bf16.msra.mxu0 %v3054
    %3294 = vmatpush.bf16.msra.mxu0 %v3049
    %3295 = vmatpush.bf16.msra.mxu0 %v3044
    %3296 = vmatpush.bf16.msra.mxu0 %v3039
    %3297 = vmatpush.bf16.msra.mxu0 %v3034
    %3298 = vmatpush.bf16.msra.mxu0 %v3029
    %3299 = vmatpush.bf16.msra.mxu0 %v3024
    %3300 = vmatmul.bf16.gmra.mxu0 %v2238
    %v3301 = vpop.f32.mrf.mxu0
    %v3302 = vadd.f32 %v3288, %v3301
    %v3303 = vpop.f32.mrf.mxu0
    %v3304 = vadd.f32 %v3290, %v3303
    %3305 = vdwg.mxu0
    %3306 = vmatpush.bf16.msra.mxu0 %v3099
    %3307 = vmatpush.bf16.msra.mxu0 %v3094
    %3308 = vmatpush.bf16.msra.mxu0 %v3089
    %3309 = vmatpush.bf16.msra.mxu0 %v3084
    %3310 = vmatpush.bf16.msra.mxu0 %v3079
    %3311 = vmatpush.bf16.msra.mxu0 %v3074
    %3312 = vmatpush.bf16.msra.mxu0 %v3069
    %3313 = vmatpush.bf16.msra.mxu0 %v3064
    %3314 = vmatmul.bf16.gmra.mxu0 %v2239
    %v3315 = vpop.f32.mrf.mxu0
    %v3316 = vadd.f32 %v3302, %v3315
    %v3317 = vpop.f32.mrf.mxu0
    %v3318 = vadd.f32 %v3304, %v3317
    %3319 = vdwg.mxu0
    %3320 = vmatpush.bf16.msra.mxu0 %v2980
    %3321 = vmatpush.bf16.msra.mxu0 %v2975
    %3322 = vmatpush.bf16.msra.mxu0 %v2970
    %3323 = vmatpush.bf16.msra.mxu0 %v2965
    %3324 = vmatpush.bf16.msra.mxu0 %v2960
    %3325 = vmatpush.bf16.msra.mxu0 %v2955
    %3326 = vmatpush.bf16.msra.mxu0 %v2950
    %3327 = vmatpush.bf16.msra.mxu0 %v2945
    %3328 = vmatmul.bf16.gmra.mxu0 %v2236
    %v3329 = vpop.f32.mrf.mxu0
    %v3330 = vadd.f32 0.0, %v3329
    %v3331 = vpop.f32.mrf.mxu0
    %v3332 = vadd.f32 0.0, %v3331
    %3333 = vdwg.mxu0
    %3334 = vmatpush.bf16.msra.mxu0 %v3020
    %3335 = vmatpush.bf16.msra.mxu0 %v3015
    %3336 = vmatpush.bf16.msra.mxu0 %v3010
    %3337 = vmatpush.bf16.msra.mxu0 %v3005
    %3338 = vmatpush.bf16.msra.mxu0 %v3000
    %3339 = vmatpush.bf16.msra.mxu0 %v2995
    %3340 = vmatpush.bf16.msra.mxu0 %v2990
    %3341 = vmatpush.bf16.msra.mxu0 %v2985
    %3342 = vmatmul.bf16.gmra.mxu0 %v2237
    %v3343 = vpop.f32.mrf.mxu0
    %v3344 = vadd.f32 %v3330, %v3343
    %v3345 = vpop.f32.mrf.mxu0
    %v3346 = vadd.f32 %v3332, %v3345
    %3347 = vdwg.mxu0
    %3348 = vmatpush.bf16.msra.mxu0 %v3060
    %3349 = vmatpush.bf16.msra.mxu0 %v3055
    %3350 = vmatpush.bf16.msra.mxu0 %v3050
    %3351 = vmatpush.bf16.msra.mxu0 %v3045
    %3352 = vmatpush.bf16.msra.mxu0 %v3040
    %3353 = vmatpush.bf16.msra.mxu0 %v3035
    %3354 = vmatpush.bf16.msra.mxu0 %v3030
    %3355 = vmatpush.bf16.msra.mxu0 %v3025
    %3356 = vmatmul.bf16.gmra.mxu0 %v2238
    %v3357 = vpop.f32.mrf.mxu0
    %v3358 = vadd.f32 %v3344, %v3357
    %v3359 = vpop.f32.mrf.mxu0
    %v3360 = vadd.f32 %v3346, %v3359
    %3361 = vdwg.mxu0
    %3362 = vmatpush.bf16.msra.mxu0 %v3100
    %3363 = vmatpush.bf16.msra.mxu0 %v3095
    %3364 = vmatpush.bf16.msra.mxu0 %v3090
    %3365 = vmatpush.bf16.msra.mxu0 %v3085
    %3366 = vmatpush.bf16.msra.mxu0 %v3080
    %3367 = vmatpush.bf16.msra.mxu0 %v3075
    %3368 = vmatpush.bf16.msra.mxu0 %v3070
    %3369 = vmatpush.bf16.msra.mxu0 %v3065
    %3370 = vmatmul.bf16.gmra.mxu0 %v2239
    %v3371 = vpop.f32.mrf.mxu0
    %v3372 = vadd.f32 %v3358, %v3371
    %v3373 = vpop.f32.mrf.mxu0
    %v3374 = vadd.f32 %v3360, %v3373
    %3375 = vdwg.mxu0
    %3376 = vmatpush.bf16.msra.mxu0 %v2981
    %3377 = vmatpush.bf16.msra.mxu0 %v2976
    %3378 = vmatpush.bf16.msra.mxu0 %v2971
    %3379 = vmatpush.bf16.msra.mxu0 %v2966
    %3380 = vmatpush.bf16.msra.mxu0 %v2961
    %3381 = vmatpush.bf16.msra.mxu0 %v2956
    %3382 = vmatpush.bf16.msra.mxu0 %v2951
    %3383 = vmatpush.bf16.msra.mxu0 %v2946
    %3384 = vmatmul.bf16.gmra.mxu0 %v2236
    %v3385 = vpop.f32.mrf.mxu0
    %v3386 = vadd.f32 0.0, %v3385
    %v3387 = vpop.f32.mrf.mxu0
    %v3388 = vadd.f32 0.0, %v3387
    %3389 = vdwg.mxu0
    %3390 = vmatpush.bf16.msra.mxu0 %v3021
    %3391 = vmatpush.bf16.msra.mxu0 %v3016
    %3392 = vmatpush.bf16.msra.mxu0 %v3011
    %3393 = vmatpush.bf16.msra.mxu0 %v3006
    %3394 = vmatpush.bf16.msra.mxu0 %v3001
    %3395 = vmatpush.bf16.msra.mxu0 %v2996
    %3396 = vmatpush.bf16.msra.mxu0 %v2991
    %3397 = vmatpush.bf16.msra.mxu0 %v2986
    %3398 = vmatmul.bf16.gmra.mxu0 %v2237
    %v3399 = vpop.f32.mrf.mxu0
    %v3400 = vadd.f32 %v3386, %v3399
    %v3401 = vpop.f32.mrf.mxu0
    %v3402 = vadd.f32 %v3388, %v3401
    %3403 = vdwg.mxu0
    %3404 = vmatpush.bf16.msra.mxu0 %v3061
    %3405 = vmatpush.bf16.msra.mxu0 %v3056
    %3406 = vmatpush.bf16.msra.mxu0 %v3051
    %3407 = vmatpush.bf16.msra.mxu0 %v3046
    %3408 = vmatpush.bf16.msra.mxu0 %v3041
    %3409 = vmatpush.bf16.msra.mxu0 %v3036
    %3410 = vmatpush.bf16.msra.mxu0 %v3031
    %3411 = vmatpush.bf16.msra.mxu0 %v3026
    %3412 = vmatmul.bf16.gmra.mxu0 %v2238
    %v3413 = vpop.f32.mrf.mxu0
    %v3414 = vadd.f32 %v3400, %v3413
    %v3415 = vpop.f32.mrf.mxu0
    %v3416 = vadd.f32 %v3402, %v3415
    %3417 = vdwg.mxu0
    %3418 = vmatpush.bf16.msra.mxu0 %v3101
    %3419 = vmatpush.bf16.msra.mxu0 %v3096
    %3420 = vmatpush.bf16.msra.mxu0 %v3091
    %3421 = vmatpush.bf16.msra.mxu0 %v3086
    %3422 = vmatpush.bf16.msra.mxu0 %v3081
    %3423 = vmatpush.bf16.msra.mxu0 %v3076
    %3424 = vmatpush.bf16.msra.mxu0 %v3071
    %3425 = vmatpush.bf16.msra.mxu0 %v3066
    %3426 = vmatmul.bf16.gmra.mxu0 %v2239
    %v3427 = vpop.f32.mrf.mxu0
    %v3428 = vadd.f32 %v3414, %v3427
    %v3429 = vpop.f32.mrf.mxu0
    %v3430 = vadd.f32 %v3416, %v3429
    %3431 = vdwg.mxu0
    %3432 = vmatpush.bf16.msra.mxu0 %v2982
    %3433 = vmatpush.bf16.msra.mxu0 %v2977
    %3434 = vmatpush.bf16.msra.mxu0 %v2972
    %3435 = vmatpush.bf16.msra.mxu0 %v2967
    %3436 = vmatpush.bf16.msra.mxu0 %v2962
    %3437 = vmatpush.bf16.msra.mxu0 %v2957
    %3438 = vmatpush.bf16.msra.mxu0 %v2952
    %3439 = vmatpush.bf16.msra.mxu0 %v2947
    %3440 = vmatmul.bf16.gmra.mxu0 %v2236
    %v3441 = vpop.f32.mrf.mxu0
    %v3442 = vadd.f32 0.0, %v3441
    %v3443 = vpop.f32.mrf.mxu0
    %v3444 = vadd.f32 0.0, %v3443
    %3445 = vdwg.mxu0
    %3446 = vmatpush.bf16.msra.mxu0 %v3022
    %3447 = vmatpush.bf16.msra.mxu0 %v3017
    %3448 = vmatpush.bf16.msra.mxu0 %v3012
    %3449 = vmatpush.bf16.msra.mxu0 %v3007
    %3450 = vmatpush.bf16.msra.mxu0 %v3002
    %3451 = vmatpush.bf16.msra.mxu0 %v2997
    %3452 = vmatpush.bf16.msra.mxu0 %v2992
    %3453 = vmatpush.bf16.msra.mxu0 %v2987
    %3454 = vmatmul.bf16.gmra.mxu0 %v2237
    %v3455 = vpop.f32.mrf.mxu0
    %v3456 = vadd.f32 %v3442, %v3455
    %v3457 = vpop.f32.mrf.mxu0
    %v3458 = vadd.f32 %v3444, %v3457
    %3459 = vdwg.mxu0
    %3460 = vmatpush.bf16.msra.mxu0 %v3062
    %3461 = vmatpush.bf16.msra.mxu0 %v3057
    %3462 = vmatpush.bf16.msra.mxu0 %v3052
    %3463 = vmatpush.bf16.msra.mxu0 %v3047
    %3464 = vmatpush.bf16.msra.mxu0 %v3042
    %3465 = vmatpush.bf16.msra.mxu0 %v3037
    %3466 = vmatpush.bf16.msra.mxu0 %v3032
    %3467 = vmatpush.bf16.msra.mxu0 %v3027
    %3468 = vmatmul.bf16.gmra.mxu0 %v2238
    %v3469 = vpop.f32.mrf.mxu0
    %v3470 = vadd.f32 %v3456, %v3469
    %v3471 = vpop.f32.mrf.mxu0
    %v3472 = vadd.f32 %v3458, %v3471
    %3473 = vdwg.mxu0
    %3474 = vmatpush.bf16.msra.mxu0 %v3102
    %3475 = vmatpush.bf16.msra.mxu0 %v3097
    %3476 = vmatpush.bf16.msra.mxu0 %v3092
    %3477 = vmatpush.bf16.msra.mxu0 %v3087
    %3478 = vmatpush.bf16.msra.mxu0 %v3082
    %3479 = vmatpush.bf16.msra.mxu0 %v3077
    %3480 = vmatpush.bf16.msra.mxu0 %v3072
    %3481 = vmatpush.bf16.msra.mxu0 %v3067
    %3482 = vmatmul.bf16.gmra.mxu0 %v2239
    %v3483 = vpop.f32.mrf.mxu0
    %v3484 = vadd.f32 %v3470, %v3483
    %v3485 = vpop.f32.mrf.mxu0
    %v3486 = vadd.f32 %v3472, %v3485
    %3487 = vdwg.mxu0
    %3488 = vmatpush.bf16.msra.mxu0 %v2983
    %3489 = vmatpush.bf16.msra.mxu0 %v2978
    %3490 = vmatpush.bf16.msra.mxu0 %v2973
    %3491 = vmatpush.bf16.msra.mxu0 %v2968
    %3492 = vmatpush.bf16.msra.mxu0 %v2963
    %3493 = vmatpush.bf16.msra.mxu0 %v2958
    %3494 = vmatpush.bf16.msra.mxu0 %v2953
    %3495 = vmatpush.bf16.msra.mxu0 %v2948
    %3496 = vmatmul.bf16.gmra.mxu0 %v2236
    %v3497 = vpop.f32.mrf.mxu0
    %v3498 = vadd.f32 0.0, %v3497
    %v3499 = vpop.f32.mrf.mxu0
    %v3500 = vadd.f32 0.0, %v3499
    %3501 = vdwg.mxu0
    %3502 = vmatpush.bf16.msra.mxu0 %v3023
    %3503 = vmatpush.bf16.msra.mxu0 %v3018
    %3504 = vmatpush.bf16.msra.mxu0 %v3013
    %3505 = vmatpush.bf16.msra.mxu0 %v3008
    %3506 = vmatpush.bf16.msra.mxu0 %v3003
    %3507 = vmatpush.bf16.msra.mxu0 %v2998
    %3508 = vmatpush.bf16.msra.mxu0 %v2993
    %3509 = vmatpush.bf16.msra.mxu0 %v2988
    %3510 = vmatmul.bf16.gmra.mxu0 %v2237
    %v3511 = vpop.f32.mrf.mxu0
    %v3512 = vadd.f32 %v3498, %v3511
    %v3513 = vpop.f32.mrf.mxu0
    %v3514 = vadd.f32 %v3500, %v3513
    %3515 = vdwg.mxu0
    %3516 = vmatpush.bf16.msra.mxu0 %v3063
    %3517 = vmatpush.bf16.msra.mxu0 %v3058
    %3518 = vmatpush.bf16.msra.mxu0 %v3053
    %3519 = vmatpush.bf16.msra.mxu0 %v3048
    %3520 = vmatpush.bf16.msra.mxu0 %v3043
    %3521 = vmatpush.bf16.msra.mxu0 %v3038
    %3522 = vmatpush.bf16.msra.mxu0 %v3033
    %3523 = vmatpush.bf16.msra.mxu0 %v3028
    %3524 = vmatmul.bf16.gmra.mxu0 %v2238
    %v3525 = vpop.f32.mrf.mxu0
    %v3526 = vadd.f32 %v3512, %v3525
    %v3527 = vpop.f32.mrf.mxu0
    %v3528 = vadd.f32 %v3514, %v3527
    %3529 = vdwg.mxu0
    %3530 = vmatpush.bf16.msra.mxu0 %v3103
    %3531 = vmatpush.bf16.msra.mxu0 %v3098
    %3532 = vmatpush.bf16.msra.mxu0 %v3093
    %3533 = vmatpush.bf16.msra.mxu0 %v3088
    %3534 = vmatpush.bf16.msra.mxu0 %v3083
    %3535 = vmatpush.bf16.msra.mxu0 %v3078
    %3536 = vmatpush.bf16.msra.mxu0 %v3073
    %3537 = vmatpush.bf16.msra.mxu0 %v3068
    %3538 = vmatmul.bf16.gmra.mxu0 %v2239
    %v3539 = vpop.f32.mrf.mxu0
    %v3540 = vadd.f32 %v3526, %v3539
    %v3541 = vpop.f32.mrf.mxu0
    %v3542 = vadd.f32 %v3528, %v3541
    %3543 = vdwg.mxu0
    %v3544 = vpack.c.bf16 %v3372, %v3316
    %v3545 = vpack.c.bf16 %v3484, %v3428
    %v3546 = vpack.c.bf16 %v3374, %v3318
    %v3547 = vpack.c.bf16 %v3486, %v3430
    %3548 = vxpose.xlu0.b32.start [1/16] %v3540, 128
    %3549 = vxpose.xlu0.b32.cont [2/16] %v3542, 128
    %3550 = vxpose.xlu0.b32.cont [3/16] 0.0, 128
    %3551 = vxpose.xlu0.b32.cont [4/16] 0.0, 128
    %3552 = vxpose.xlu0.b32.cont [5/16] 0.0, 128
    %3553 = vxpose.xlu0.b32.cont [6/16] 0.0, 128
    %3554 = vxpose.xlu0.b32.cont [7/16] 0.0, 128
    %3555 = vxpose.xlu0.b32.cont [8/16] 0.0, 128
    %3556 = vxpose.xlu0.b32.cont [9/16] 0.0, 128
    %3557 = vxpose.xlu0.b32.cont [10/16] 0.0, 128
    %3558 = vxpose.xlu0.b32.cont [11/16] 0.0, 128
    %3559 = vxpose.xlu0.b32.cont [12/16] 0.0, 128
    %3560 = vxpose.xlu0.b32.cont [13/16] 0.0, 128
    %3561 = vxpose.xlu0.b32.cont [14/16] 0.0, 128
    %3562 = vxpose.xlu0.b32.cont [15/16] 0.0, 128
    %3563 = vxpose.xlu0.b32.end [16/16] 0.0, 128
    %v3564 = vpop.trf.xlu0
    %v3565 = vpop.trf.xlu0
    %v3566 = vpop.trf.xlu0
    %v3567 = vpop.trf.xlu0
    %v3568 = vpop.trf.xlu0
    %v3569 = vpop.trf.xlu0
    %v3570 = vpop.trf.xlu0
    %v3571 = vpop.trf.xlu0
    %v3572 = vpop.trf.xlu0
    %v3573 = vpop.trf.xlu0
    %v3574 = vpop.trf.xlu0
    %v3575 = vpop.trf.xlu0
    %v3576 = vpop.trf.xlu0
    %v3577 = vpop.trf.xlu0
    %v3578 = vpop.trf.xlu0
    %v3579 = vpop.trf.xlu0
    %3581 = vset.pattern.permute.xlu0 4
    %3582 = vperm.xlu0 %3581, %v3540
    %v3583 = vpop.permute.xlu0 %3582
    %3586 = vset.pattern.permute.xlu0 4
    %3587 = vperm.xlu0 %3586, %v3542
    %v3588 = vpop.permute.xlu0 %3587
    %v3590 = vperm.slane %v3564, 0
    %v3591 = vadd.f32 %v3583, %v3590
    %v3592 = vadd.f32 %v3588, %v3590
    %3593 = vset.pattern.permute.xlu0 5
    %3594 = vperm.xlu0 %3593, %v3540
    %v3595 = vpop.permute.xlu0 %3594
    %3597 = vset.pattern.permute.xlu0 5
    %3598 = vperm.xlu0 %3597, %v3542
    %v3599 = vpop.permute.xlu0 %3598
    %v3601 = vperm.slane %v3564, 1
    %v3602 = vadd.f32 %v3595, %v3601
    %v3603 = vadd.f32 %v3599, %v3601
    %3604 = vset.pattern.permute.xlu0 6
    %3605 = vperm.xlu0 %3604, %v3540
    %v3606 = vpop.permute.xlu0 %3605
    %3608 = vset.pattern.permute.xlu0 6
    %3609 = vperm.xlu0 %3608, %v3542
    %v3610 = vpop.permute.xlu0 %3609
    %v3612 = vperm.slane %v3564, 2
    %v3613 = vadd.f32 %v3606, %v3612
    %v3614 = vadd.f32 %v3610, %v3612
    %3615 = vset.pattern.permute.xlu0 7
    %3616 = vperm.xlu0 %3615, %v3540
    %v3617 = vpop.permute.xlu0 %3616
    %3619 = vset.pattern.permute.xlu0 7
    %3620 = vperm.xlu0 %3619, %v3542
    %v3621 = vpop.permute.xlu0 %3620
    %v3623 = vperm.slane %v3564, 3
    %v3624 = vadd.f32 %v3617, %v3623
    %v3625 = vadd.f32 %v3621, %v3623
    %3628 = vrot.lane.b32.xlu0 %v3602, 16
    %v3629 = vpop.permute.xlu0 %3628
    %3630 = vrot.lane.b32.xlu0 %v3603, 16
    %v3631 = vpop.permute.xlu0 %3630
    %3636 = vrot.lane.b32.xlu0 %v3613, 32
    %v3637 = vpop.permute.xlu0 %3636
    %3638 = vrot.lane.b32.xlu0 %v3614, 32
    %v3639 = vpop.permute.xlu0 %3638
    %3644 = vrot.lane.b32.xlu0 %v3624, 48
    %v3645 = vpop.permute.xlu0 %3644
    %3646 = vrot.lane.b32.xlu0 %v3625, 48
    %v3647 = vpop.permute.xlu0 %3646
    %v3650 = vsel %vm373, %v3591, %v3629
    %v3651 = vsel %vm373, %v3592, %v3631
    %v3652 = vsel %vm193, %v3650, %v3637
    %v3653 = vsel %vm193, %v3651, %v3639
    %v3654 = vsel %vm378, %v3652, %v3645
    %v3655 = vsel %vm378, %v3653, %v3647
    %v3656 = vmul.f32 %v3654, 0.2
    %v3657 = vmul.f32 %v3655, 0.2
    %v3658 = vmax.f32 %v3654, %v3656
    %v3659 = vmax.f32 %v3655, %v3657
    %v3660 = vadd.f32 %v3658, %v116
    %v3661 = vadd.f32 %v3659, %v117
    %v3662 = vsel %vm387, %v3660, -inf
    %3663 = vmax.xlane.f32.xlu0 %v3662
    %v3664 = vpop.xlane.xlu0 %3663
    %v3665 = vsel %vm387, %v3661, -inf
    %3666 = vmax.xlane.f32.xlu0 %v3665
    %v3667 = vpop.xlane.xlu0 %3666
    %v3668 = vsub.f32 %v3660, %v3664
    %v3669 = vsub.f32 %v3661, %v3667
    %v3670 = vmul.f32 %v3668, 1.442695
    %v3671 = vpow.pop %v3670
    %v3672 = vmul.f32 %v3669, 1.442695
    %v3673 = vpow.pop %v3672
    %v3674 = vpack.c.bf16 %v3671, %v3671
    %v3675 = vpack.c.bf16 %v3673, %v3673
    %v3678 = vunpack.c.l.b16 %v3674
    %v3679 = vunpack.c.l.b16 %v3675
    %v3680 = vpack.c.b16 %v3679, %v3678
    %v3682 = vsel %vm387, %v3680, 0
    %3684 = vmatpush.bf16.msra.mxu0 0
    %3685 = vmatpush.bf16.msra.mxu0 0
    %3686 = vmatpush.bf16.msra.mxu0 0
    %3687 = vmatpush.bf16.msra.mxu0 0
    %3688 = vmatpush.bf16.msra.mxu0 %v426
    %3689 = vmatpush.bf16.msra.mxu0 %v425
    %3690 = vmatpush.bf16.msra.mxu0 %v424
    %3691 = vmatpush.bf16.msra.mxu0 %v423
    %3692 = vmatmul.bf16.gmra.mxu0 %v3682
    %v3693 = vpop.f32.mrf.mxu0
    %v3694 = vadd.f32 0.0, %v3693
    %v3695 = vpop.f32.mrf.mxu0
    %v3696 = vadd.f32 0.0, %v3695
    %3697 = vdwg.mxu0
    %v3698 = vrcp.pop %v3694
    %v3699 = vrcp.pop %v3696
    %v3702 = vunpack.c.l.b16 %v3544
    %v3703 = vunpack.c.l.b16 %v3546
    %v3704 = vpack.c.b16 %v3703, %v3702
    %v3706 = vsel %vm373, %v3680, 0
    %3708 = vmatpush.bf16.msra.mxu0 0
    %3709 = vmatpush.bf16.msra.mxu0 0
    %3710 = vmatpush.bf16.msra.mxu0 0
    %3711 = vmatpush.bf16.msra.mxu0 0
    %3712 = vmatpush.bf16.msra.mxu0 0
    %3713 = vmatpush.bf16.msra.mxu0 0
    %3714 = vmatpush.bf16.msra.mxu0 0
    %3715 = vmatpush.bf16.msra.mxu0 %v3704
    %3716 = vmatmul.bf16.gmra.mxu0 %v3706
    %v3717 = vpop.f32.mrf.mxu0
    %v3718 = vadd.f32 0.0, %v3717
    %v3719 = vpop.f32.mrf.mxu0
    %v3720 = vadd.f32 0.0, %v3719
    %3721 = vdwg.mxu0
    %3723 = vset.pattern.permute.xlu0 0
    %3724 = vperm.xlu0 %3723, %v3698
    %v3725 = vpop.permute.xlu0 %3724
    %3728 = vset.pattern.permute.xlu0 0
    %3729 = vperm.xlu0 %3728, %v3699
    %v3730 = vpop.permute.xlu0 %3729
    %v3732 = vmul.f32 %v3718, %v3725
    %v3733 = vmul.f32 %v3720, %v3730
    %3734 = vrot.lane.b32.xlu0 %v3680, 112
    %v3735 = vpop.permute.xlu0 %3734
    %v3736 = vunpack.c.h.b16 %v3544
    %v3737 = vunpack.c.h.b16 %v3546
    %v3738 = vpack.c.b16 %v3737, %v3736
    %v3741 = vsel %vm373, %v3735, 0
    %3743 = vmatpush.bf16.msra.mxu0 0
    %3744 = vmatpush.bf16.msra.mxu0 0
    %3745 = vmatpush.bf16.msra.mxu0 0
    %3746 = vmatpush.bf16.msra.mxu0 0
    %3747 = vmatpush.bf16.msra.mxu0 0
    %3748 = vmatpush.bf16.msra.mxu0 0
    %3749 = vmatpush.bf16.msra.mxu0 0
    %3750 = vmatpush.bf16.msra.mxu0 %v3738
    %3751 = vmatmul.bf16.gmra.mxu0 %v3741
    %v3752 = vpop.f32.mrf.mxu0
    %v3753 = vadd.f32 0.0, %v3752
    %v3754 = vpop.f32.mrf.mxu0
    %v3755 = vadd.f32 0.0, %v3754
    %3756 = vdwg.mxu0
    %3757 = vset.pattern.permute.xlu0 1
    %3758 = vperm.xlu0 %3757, %v3698
    %v3759 = vpop.permute.xlu0 %3758
    %3761 = vset.pattern.permute.xlu0 1
    %3762 = vperm.xlu0 %3761, %v3699
    %v3763 = vpop.permute.xlu0 %3762
    %v3765 = vmul.f32 %v3753, %v3759
    %v3766 = vmul.f32 %v3755, %v3763
    %3767 = vrot.lane.b32.xlu0 %v3680, 96
    %v3768 = vpop.permute.xlu0 %3767
    %v3771 = vunpack.c.l.b16 %v3545
    %v3772 = vunpack.c.l.b16 %v3547
    %v3773 = vpack.c.b16 %v3772, %v3771
    %v3776 = vsel %vm373, %v3768, 0
    %3778 = vmatpush.bf16.msra.mxu0 0
    %3779 = vmatpush.bf16.msra.mxu0 0
    %3780 = vmatpush.bf16.msra.mxu0 0
    %3781 = vmatpush.bf16.msra.mxu0 0
    %3782 = vmatpush.bf16.msra.mxu0 0
    %3783 = vmatpush.bf16.msra.mxu0 0
    %3784 = vmatpush.bf16.msra.mxu0 0
    %3785 = vmatpush.bf16.msra.mxu0 %v3773
    %3786 = vmatmul.bf16.gmra.mxu0 %v3776
    %v3787 = vpop.f32.mrf.mxu0
    %v3788 = vadd.f32 0.0, %v3787
    %v3789 = vpop.f32.mrf.mxu0
    %v3790 = vadd.f32 0.0, %v3789
    %3791 = vdwg.mxu0
    %3792 = vset.pattern.permute.xlu0 2
    %3793 = vperm.xlu0 %3792, %v3698
    %v3794 = vpop.permute.xlu0 %3793
    %3796 = vset.pattern.permute.xlu0 2
    %3797 = vperm.xlu0 %3796, %v3699
    %v3798 = vpop.permute.xlu0 %3797
    %v3800 = vmul.f32 %v3788, %v3794
    %v3801 = vmul.f32 %v3790, %v3798
    %3802 = vrot.lane.b32.xlu0 %v3680, 80
    %v3803 = vpop.permute.xlu0 %3802
    %v3804 = vunpack.c.h.b16 %v3545
    %v3805 = vunpack.c.h.b16 %v3547
    %v3806 = vpack.c.b16 %v3805, %v3804
    %v3809 = vsel %vm373, %v3803, 0
    %3811 = vmatpush.bf16.msra.mxu0 0
    %3812 = vmatpush.bf16.msra.mxu0 0
    %3813 = vmatpush.bf16.msra.mxu0 0
    %3814 = vmatpush.bf16.msra.mxu0 0
    %3815 = vmatpush.bf16.msra.mxu0 0
    %3816 = vmatpush.bf16.msra.mxu0 0
    %3817 = vmatpush.bf16.msra.mxu0 0
    %3818 = vmatpush.bf16.msra.mxu0 %v3806
    %3819 = vmatmul.bf16.gmra.mxu0 %v3809
    %v3820 = vpop.f32.mrf.mxu0
    %v3821 = vadd.f32 0.0, %v3820
    %v3822 = vpop.f32.mrf.mxu0
    %v3823 = vadd.f32 0.0, %v3822
    %3824 = vdwg.mxu0
    %3825 = vset.pattern.permute.xlu0 3
    %3826 = vperm.xlu0 %3825, %v3698
    %v3827 = vpop.permute.xlu0 %3826
    %3829 = vset.pattern.permute.xlu0 3
    %3830 = vperm.xlu0 %3829, %v3699
    %v3831 = vpop.permute.xlu0 %3830
    %v3833 = vmul.f32 %v3821, %v3827
    %v3834 = vmul.f32 %v3823, %v3831
    %v3835 = vld [vmem:[%s8] sm:$0xf]
    %v3837 = vperm.slane %v3835, 0
    %v3838 = vperm.slane %v3835, 1
    %v3839 = vperm.slane %v3835, 2
    %v3840 = vperm.slane %v3835, 3
    %v3845 = vadd.f32 %v3732, %v3837
    %v3846 = vadd.f32 %v3765, %v3838
    %v3847 = vadd.f32 %v3800, %v3839
    %v3848 = vadd.f32 %v3833, %v3840
    %v3849 = vadd.f32 %v3733, %v3837
    %v3850 = vadd.f32 %v3766, %v3838
    %v3851 = vadd.f32 %v3801, %v3839
    %v3852 = vadd.f32 %v3834, %v3840
    %v3853 = vmax.f32 %v3845, 0.0
    %v3854 = vmax.f32 %v3846, 0.0
    %v3855 = vmax.f32 %v3847, 0.0
    %v3856 = vmax.f32 %v3848, 0.0
    %v3857 = vmax.f32 %v3849, 0.0
    %v3858 = vmax.f32 %v3850, 0.0
    %v3859 = vmax.f32 %v3851, 0.0
    %v3860 = vmax.f32 %v3852, 0.0
    %v3861 = vpack.c.bf16 %v3857, %v3853
    %v3862 = vpack.c.bf16 %v3858, %v3854
    %v3863 = vpack.c.bf16 %v3859, %v3855
    %v3864 = vpack.c.bf16 %v3860, %v3856
    %v3865 = vld [vmem:[#allocation10] sm:$0xff]
    %v3866 = vld [vmem:[#allocation10 + $0x8] sm:$0xff]
    %v3867 = vld [vmem:[#allocation10 + $0x10] sm:$0xff]
    %v3868 = vld [vmem:[#allocation10 + $0x18] sm:$0xff]
    %v3869 = vld [vmem:[#allocation10 + $0x20] sm:$0xff]
    %v3870 = vld [vmem:[#allocation10 + $0x28] sm:$0xff]
    %v3871 = vld [vmem:[#allocation10 + $0x30] sm:$0xff]
    %v3872 = vld [vmem:[#allocation10 + $0x38] sm:$0xff]
    %v3873 = vld [vmem:[#allocation10 + $0x40] sm:$0xff]
    %v3874 = vld [vmem:[#allocation10 + $0x48] sm:$0xff]
    %v3875 = vld [vmem:[#allocation10 + $0x50] sm:$0xff]
    %v3876 = vld [vmem:[#allocation10 + $0x58] sm:$0xff]
    %v3877 = vld [vmem:[#allocation10 + $0x60] sm:$0xff]
    %v3878 = vld [vmem:[#allocation10 + $0x68] sm:$0xff]
    %v3879 = vld [vmem:[#allocation10 + $0x70] sm:$0xff]
    %v3880 = vld [vmem:[#allocation10 + $0x78] sm:$0xff]
    %v3881 = vld [vmem:[#allocation10 + $0x80] sm:$0xff]
    %v3882 = vld [vmem:[#allocation10 + $0x88] sm:$0xff]
    %v3883 = vld [vmem:[#allocation10 + $0x90] sm:$0xff]
    %v3884 = vld [vmem:[#allocation10 + $0x98] sm:$0xff]
    %v3885 = vld [vmem:[#allocation10 + $0xa0] sm:$0xff]
    %v3886 = vld [vmem:[#allocation10 + $0xa8] sm:$0xff]
    %v3887 = vld [vmem:[#allocation10 + $0xb0] sm:$0xff]
    %v3888 = vld [vmem:[#allocation10 + $0xb8] sm:$0xff]
    %v3889 = vld [vmem:[#allocation10 + $0xc0] sm:$0xff]
    %v3890 = vld [vmem:[#allocation10 + $0xc8] sm:$0xff]
    %v3891 = vld [vmem:[#allocation10 + $0xd0] sm:$0xff]
    %v3892 = vld [vmem:[#allocation10 + $0xd8] sm:$0xff]
    %v3893 = vld [vmem:[#allocation10 + $0xe0] sm:$0xff]
    %v3894 = vld [vmem:[#allocation10 + $0xe8] sm:$0xff]
    %v3895 = vld [vmem:[#allocation10 + $0xf0] sm:$0xff]
    %v3896 = vld [vmem:[#allocation10 + $0xf8] sm:$0xff]
    %v3897 = vld [vmem:[#allocation10 + $0x100] sm:$0xff]
    %v3898 = vld [vmem:[#allocation10 + $0x108] sm:$0xff]
    %v3899 = vld [vmem:[#allocation10 + $0x110] sm:$0xff]
    %v3900 = vld [vmem:[#allocation10 + $0x118] sm:$0xff]
    %v3901 = vld [vmem:[#allocation10 + $0x120] sm:$0xff]
    %v3902 = vld [vmem:[#allocation10 + $0x128] sm:$0xff]
    %v3903 = vld [vmem:[#allocation10 + $0x130] sm:$0xff]
    %v3904 = vld [vmem:[#allocation10 + $0x138] sm:$0xff]
    %v3905 = vld [vmem:[#allocation10 + $0x140] sm:$0xff]
    %v3906 = vld [vmem:[#allocation10 + $0x148] sm:$0xff]
    %v3907 = vld [vmem:[#allocation10 + $0x150] sm:$0xff]
    %v3908 = vld [vmem:[#allocation10 + $0x158] sm:$0xff]
    %v3909 = vld [vmem:[#allocation10 + $0x160] sm:$0xff]
    %v3910 = vld [vmem:[#allocation10 + $0x168] sm:$0xff]
    %v3911 = vld [vmem:[#allocation10 + $0x170] sm:$0xff]
    %v3912 = vld [vmem:[#allocation10 + $0x178] sm:$0xff]
    %v3913 = vld [vmem:[#allocation10 + $0x180] sm:$0xff]
    %v3914 = vld [vmem:[#allocation10 + $0x188] sm:$0xff]
    %v3915 = vld [vmem:[#allocation10 + $0x190] sm:$0xff]
    %v3916 = vld [vmem:[#allocation10 + $0x198] sm:$0xff]
    %v3917 = vld [vmem:[#allocation10 + $0x1a0] sm:$0xff]
    %v3918 = vld [vmem:[#allocation10 + $0x1a8] sm:$0xff]
    %v3919 = vld [vmem:[#allocation10 + $0x1b0] sm:$0xff]
    %v3920 = vld [vmem:[#allocation10 + $0x1b8] sm:$0xff]
    %v3921 = vld [vmem:[#allocation10 + $0x1c0] sm:$0xff]
    %v3922 = vld [vmem:[#allocation10 + $0x1c8] sm:$0xff]
    %v3923 = vld [vmem:[#allocation10 + $0x1d0] sm:$0xff]
    %v3924 = vld [vmem:[#allocation10 + $0x1d8] sm:$0xff]
    %v3925 = vld [vmem:[#allocation10 + $0x1e0] sm:$0xff]
    %v3926 = vld [vmem:[#allocation10 + $0x1e8] sm:$0xff]
    %v3927 = vld [vmem:[#allocation10 + $0x1f0] sm:$0xff]
    %v3928 = vld [vmem:[#allocation10 + $0x1f8] sm:$0xff]
    %v3993 = vunpack.c.l.b16 %v3865
    %v3994 = vunpack.c.h.b16 %v3865
    %v3995 = vunpack.c.l.b16 %v3866
    %v3996 = vunpack.c.h.b16 %v3866
    %v3997 = vunpack.c.l.b16 %v3867
    %v3998 = vunpack.c.h.b16 %v3867
    %v3999 = vunpack.c.l.b16 %v3868
    %v4000 = vunpack.c.h.b16 %v3868
    %v4001 = vunpack.c.l.b16 %v3869
    %v4002 = vunpack.c.h.b16 %v3869
    %v4003 = vunpack.c.l.b16 %v3870
    %v4004 = vunpack.c.h.b16 %v3870
    %v4005 = vunpack.c.l.b16 %v3871
    %v4006 = vunpack.c.h.b16 %v3871
    %v4007 = vunpack.c.l.b16 %v3872
    %v4008 = vunpack.c.h.b16 %v3872
    %v4009 = vunpack.c.l.b16 %v3873
    %v4010 = vunpack.c.h.b16 %v3873
    %v4011 = vunpack.c.l.b16 %v3874
    %v4012 = vunpack.c.h.b16 %v3874
    %v4013 = vunpack.c.l.b16 %v3875
    %v4014 = vunpack.c.h.b16 %v3875
    %v4015 = vunpack.c.l.b16 %v3876
    %v4016 = vunpack.c.h.b16 %v3876
    %v4017 = vunpack.c.l.b16 %v3877
    %v4018 = vunpack.c.h.b16 %v3877
    %v4019 = vunpack.c.l.b16 %v3878
    %v4020 = vunpack.c.h.b16 %v3878
    %v4021 = vunpack.c.l.b16 %v3879
    %v4022 = vunpack.c.h.b16 %v3879
    %v4023 = vunpack.c.l.b16 %v3880
    %v4024 = vunpack.c.h.b16 %v3880
    %v4025 = vunpack.c.l.b16 %v3881
    %v4026 = vunpack.c.h.b16 %v3881
    %v4027 = vunpack.c.l.b16 %v3882
    %v4028 = vunpack.c.h.b16 %v3882
    %v4029 = vunpack.c.l.b16 %v3883
    %v4030 = vunpack.c.h.b16 %v3883
    %v4031 = vunpack.c.l.b16 %v3884
    %v4032 = vunpack.c.h.b16 %v3884
    %v4033 = vunpack.c.l.b16 %v3885
    %v4034 = vunpack.c.h.b16 %v3885
    %v4035 = vunpack.c.l.b16 %v3886
    %v4036 = vunpack.c.h.b16 %v3886
    %v4037 = vunpack.c.l.b16 %v3887
    %v4038 = vunpack.c.h.b16 %v3887
    %v4039 = vunpack.c.l.b16 %v3888
    %v4040 = vunpack.c.h.b16 %v3888
    %v4041 = vunpack.c.l.b16 %v3889
    %v4042 = vunpack.c.h.b16 %v3889
    %v4043 = vunpack.c.l.b16 %v3890
    %v4044 = vunpack.c.h.b16 %v3890
    %v4045 = vunpack.c.l.b16 %v3891
    %v4046 = vunpack.c.h.b16 %v3891
    %v4047 = vunpack.c.l.b16 %v3892
    %v4048 = vunpack.c.h.b16 %v3892
    %v4049 = vunpack.c.l.b16 %v3893
    %v4050 = vunpack.c.h.b16 %v3893
    %v4051 = vunpack.c.l.b16 %v3894
    %v4052 = vunpack.c.h.b16 %v3894
    %v4053 = vunpack.c.l.b16 %v3895
    %v4054 = vunpack.c.h.b16 %v3895
    %v4055 = vunpack.c.l.b16 %v3896
    %v4056 = vunpack.c.h.b16 %v3896
    %v4057 = vunpack.c.l.b16 %v3897
    %v4058 = vunpack.c.h.b16 %v3897
    %v4059 = vunpack.c.l.b16 %v3898
    %v4060 = vunpack.c.h.b16 %v3898
    %v4061 = vunpack.c.l.b16 %v3899
    %v4062 = vunpack.c.h.b16 %v3899
    %v4063 = vunpack.c.l.b16 %v3900
    %v4064 = vunpack.c.h.b16 %v3900
    %v4065 = vunpack.c.l.b16 %v3901
    %v4066 = vunpack.c.h.b16 %v3901
    %v4067 = vunpack.c.l.b16 %v3902
    %v4068 = vunpack.c.h.b16 %v3902
    %v4069 = vunpack.c.l.b16 %v3903
    %v4070 = vunpack.c.h.b16 %v3903
    %v4071 = vunpack.c.l.b16 %v3904
    %v4072 = vunpack.c.h.b16 %v3904
    %v4073 = vunpack.c.l.b16 %v3905
    %v4074 = vunpack.c.h.b16 %v3905
    %v4075 = vunpack.c.l.b16 %v3906
    %v4076 = vunpack.c.h.b16 %v3906
    %v4077 = vunpack.c.l.b16 %v3907
    %v4078 = vunpack.c.h.b16 %v3907
    %v4079 = vunpack.c.l.b16 %v3908
    %v4080 = vunpack.c.h.b16 %v3908
    %v4081 = vunpack.c.l.b16 %v3909
    %v4082 = vunpack.c.h.b16 %v3909
    %v4083 = vunpack.c.l.b16 %v3910
    %v4084 = vunpack.c.h.b16 %v3910
    %v4085 = vunpack.c.l.b16 %v3911
    %v4086 = vunpack.c.h.b16 %v3911
    %v4087 = vunpack.c.l.b16 %v3912
    %v4088 = vunpack.c.h.b16 %v3912
    %v4089 = vunpack.c.l.b16 %v3913
    %v4090 = vunpack.c.h.b16 %v3913
    %v4091 = vunpack.c.l.b16 %v3914
    %v4092 = vunpack.c.h.b16 %v3914
    %v4093 = vunpack.c.l.b16 %v3915
    %v4094 = vunpack.c.h.b16 %v3915
    %v4095 = vunpack.c.l.b16 %v3916
    %v4096 = vunpack.c.h.b16 %v3916
    %v4097 = vunpack.c.l.b16 %v3917
    %v4098 = vunpack.c.h.b16 %v3917
    %v4099 = vunpack.c.l.b16 %v3918
    %v4100 = vunpack.c.h.b16 %v3918
    %v4101 = vunpack.c.l.b16 %v3919
    %v4102 = vunpack.c.h.b16 %v3919
    %v4103 = vunpack.c.l.b16 %v3920
    %v4104 = vunpack.c.h.b16 %v3920
    %v4105 = vunpack.c.l.b16 %v3921
    %v4106 = vunpack.c.h.b16 %v3921
    %v4107 = vunpack.c.l.b16 %v3922
    %v4108 = vunpack.c.h.b16 %v3922
    %v4109 = vunpack.c.l.b16 %v3923
    %v4110 = vunpack.c.h.b16 %v3923
    %v4111 = vunpack.c.l.b16 %v3924
    %v4112 = vunpack.c.h.b16 %v3924
    %v4113 = vunpack.c.l.b16 %v3925
    %v4114 = vunpack.c.h.b16 %v3925
    %v4115 = vunpack.c.l.b16 %v3926
    %v4116 = vunpack.c.h.b16 %v3926
    %v4117 = vunpack.c.l.b16 %v3927
    %v4118 = vunpack.c.h.b16 %v3927
    %v4119 = vunpack.c.l.b16 %v3928
    %v4120 = vunpack.c.h.b16 %v3928
    %v4121 = vpack.c.b16 %v3995, %v3993
    %v4122 = vpack.c.b16 %v3996, %v3994
    %v4123 = vpack.c.b16 %v3999, %v3997
    %v4124 = vpack.c.b16 %v4000, %v3998
    %v4125 = vpack.c.b16 %v4003, %v4001
    %v4126 = vpack.c.b16 %v4004, %v4002
    %v4127 = vpack.c.b16 %v4007, %v4005
    %v4128 = vpack.c.b16 %v4008, %v4006
    %v4129 = vpack.c.b16 %v4011, %v4009
    %v4130 = vpack.c.b16 %v4012, %v4010
    %v4131 = vpack.c.b16 %v4015, %v4013
    %v4132 = vpack.c.b16 %v4016, %v4014
    %v4133 = vpack.c.b16 %v4019, %v4017
    %v4134 = vpack.c.b16 %v4020, %v4018
    %v4135 = vpack.c.b16 %v4023, %v4021
    %v4136 = vpack.c.b16 %v4024, %v4022
    %v4137 = vpack.c.b16 %v4027, %v4025
    %v4138 = vpack.c.b16 %v4028, %v4026
    %v4139 = vpack.c.b16 %v4031, %v4029
    %v4140 = vpack.c.b16 %v4032, %v4030
    %v4141 = vpack.c.b16 %v4035, %v4033
    %v4142 = vpack.c.b16 %v4036, %v4034
    %v4143 = vpack.c.b16 %v4039, %v4037
    %v4144 = vpack.c.b16 %v4040, %v4038
    %v4145 = vpack.c.b16 %v4043, %v4041
    %v4146 = vpack.c.b16 %v4044, %v4042
    %v4147 = vpack.c.b16 %v4047, %v4045
    %v4148 = vpack.c.b16 %v4048, %v4046
    %v4149 = vpack.c.b16 %v4051, %v4049
    %v4150 = vpack.c.b16 %v4052, %v4050
    %v4151 = vpack.c.b16 %v4055, %v4053
    %v4152 = vpack.c.b16 %v4056, %v4054
    %v4153 = vpack.c.b16 %v4059, %v4057
    %v4154 = vpack.c.b16 %v4060, %v4058
    %v4155 = vpack.c.b16 %v4063, %v4061
    %v4156 = vpack.c.b16 %v4064, %v4062
    %v4157 = vpack.c.b16 %v4067, %v4065
    %v4158 = vpack.c.b16 %v4068, %v4066
    %v4159 = vpack.c.b16 %v4071, %v4069
    %v4160 = vpack.c.b16 %v4072, %v4070
    %v4161 = vpack.c.b16 %v4075, %v4073
    %v4162 = vpack.c.b16 %v4076, %v4074
    %v4163 = vpack.c.b16 %v4079, %v4077
    %v4164 = vpack.c.b16 %v4080, %v4078
    %v4165 = vpack.c.b16 %v4083, %v4081
    %v4166 = vpack.c.b16 %v4084, %v4082
    %v4167 = vpack.c.b16 %v4087, %v4085
    %v4168 = vpack.c.b16 %v4088, %v4086
    %v4169 = vpack.c.b16 %v4091, %v4089
    %v4170 = vpack.c.b16 %v4092, %v4090
    %v4171 = vpack.c.b16 %v4095, %v4093
    %v4172 = vpack.c.b16 %v4096, %v4094
    %v4173 = vpack.c.b16 %v4099, %v4097
    %v4174 = vpack.c.b16 %v4100, %v4098
    %v4175 = vpack.c.b16 %v4103, %v4101
    %v4176 = vpack.c.b16 %v4104, %v4102
    %v4177 = vpack.c.b16 %v4107, %v4105
    %v4178 = vpack.c.b16 %v4108, %v4106
    %v4179 = vpack.c.b16 %v4111, %v4109
    %v4180 = vpack.c.b16 %v4112, %v4110
    %v4181 = vpack.c.b16 %v4115, %v4113
    %v4182 = vpack.c.b16 %v4116, %v4114
    %v4183 = vpack.c.b16 %v4119, %v4117
    %v4184 = vpack.c.b16 %v4120, %v4118
    %4249 = vmatpush.bf16.msra.mxu0 %v4135
    %4250 = vmatpush.bf16.msra.mxu0 %v4133
    %4251 = vmatpush.bf16.msra.mxu0 %v4131
    %4252 = vmatpush.bf16.msra.mxu0 %v4129
    %4253 = vmatpush.bf16.msra.mxu0 %v4127
    %4254 = vmatpush.bf16.msra.mxu0 %v4125
    %4255 = vmatpush.bf16.msra.mxu0 %v4123
    %4256 = vmatpush.bf16.msra.mxu0 %v4121
    %4257 = vmatmul.bf16.gmra.mxu0 %v3861
    %v4258 = vpop.f32.mrf.mxu0
    %v4259 = vadd.f32 0.0, %v4258
    %v4260 = vpop.f32.mrf.mxu0
    %v4261 = vadd.f32 0.0, %v4260
    %4262 = vdwg.mxu0
    %4263 = vmatpush.bf16.msra.mxu0 %v4151
    %4264 = vmatpush.bf16.msra.mxu0 %v4149
    %4265 = vmatpush.bf16.msra.mxu0 %v4147
    %4266 = vmatpush.bf16.msra.mxu0 %v4145
    %4267 = vmatpush.bf16.msra.mxu0 %v4143
    %4268 = vmatpush.bf16.msra.mxu0 %v4141
    %4269 = vmatpush.bf16.msra.mxu0 %v4139
    %4270 = vmatpush.bf16.msra.mxu0 %v4137
    %4271 = vmatmul.bf16.gmra.mxu0 %v3862
    %v4272 = vpop.f32.mrf.mxu0
    %v4273 = vadd.f32 %v4259, %v4272
    %v4274 = vpop.f32.mrf.mxu0
    %v4275 = vadd.f32 %v4261, %v4274
    %4276 = vdwg.mxu0
    %4277 = vmatpush.bf16.msra.mxu0 %v4167
    %4278 = vmatpush.bf16.msra.mxu0 %v4165
    %4279 = vmatpush.bf16.msra.mxu0 %v4163
    %4280 = vmatpush.bf16.msra.mxu0 %v4161
    %4281 = vmatpush.bf16.msra.mxu0 %v4159
    %4282 = vmatpush.bf16.msra.mxu0 %v4157
    %4283 = vmatpush.bf16.msra.mxu0 %v4155
    %4284 = vmatpush.bf16.msra.mxu0 %v4153
    %4285 = vmatmul.bf16.gmra.mxu0 %v3863
    %v4286 = vpop.f32.mrf.mxu0
    %v4287 = vadd.f32 %v4273, %v4286
    %v4288 = vpop.f32.mrf.mxu0
    %v4289 = vadd.f32 %v4275, %v4288
    %4290 = vdwg.mxu0
    %4291 = vmatpush.bf16.msra.mxu0 %v4183
    %4292 = vmatpush.bf16.msra.mxu0 %v4181
    %4293 = vmatpush.bf16.msra.mxu0 %v4179
    %4294 = vmatpush.bf16.msra.mxu0 %v4177
    %4295 = vmatpush.bf16.msra.mxu0 %v4175
    %4296 = vmatpush.bf16.msra.mxu0 %v4173
    %4297 = vmatpush.bf16.msra.mxu0 %v4171
    %4298 = vmatpush.bf16.msra.mxu0 %v4169
    %4299 = vmatmul.bf16.gmra.mxu0 %v3864
    %v4300 = vpop.f32.mrf.mxu0
    %v4301 = vadd.f32 %v4287, %v4300
    %v4302 = vpop.f32.mrf.mxu0
    %v4303 = vadd.f32 %v4289, %v4302
    %4304 = vdwg.mxu0
    %4305 = vmatpush.bf16.msra.mxu0 %v4136
    %4306 = vmatpush.bf16.msra.mxu0 %v4134
    %4307 = vmatpush.bf16.msra.mxu0 %v4132
    %4308 = vmatpush.bf16.msra.mxu0 %v4130
    %4309 = vmatpush.bf16.msra.mxu0 %v4128
    %4310 = vmatpush.bf16.msra.mxu0 %v4126
    %4311 = vmatpush.bf16.msra.mxu0 %v4124
    %4312 = vmatpush.bf16.msra.mxu0 %v4122
    %4313 = vmatmul.bf16.gmra.mxu0 %v3861
    %v4314 = vpop.f32.mrf.mxu0
    %v4315 = vadd.f32 0.0, %v4314
    %v4316 = vpop.f32.mrf.mxu0
    %v4317 = vadd.f32 0.0, %v4316
    %4318 = vdwg.mxu0
    %4319 = vmatpush.bf16.msra.mxu0 %v4152
    %4320 = vmatpush.bf16.msra.mxu0 %v4150
    %4321 = vmatpush.bf16.msra.mxu0 %v4148
    %4322 = vmatpush.bf16.msra.mxu0 %v4146
    %4323 = vmatpush.bf16.msra.mxu0 %v4144
    %4324 = vmatpush.bf16.msra.mxu0 %v4142
    %4325 = vmatpush.bf16.msra.mxu0 %v4140
    %4326 = vmatpush.bf16.msra.mxu0 %v4138
    %4327 = vmatmul.bf16.gmra.mxu0 %v3862
    %v4328 = vpop.f32.mrf.mxu0
    %v4329 = vadd.f32 %v4315, %v4328
    %v4330 = vpop.f32.mrf.mxu0
    %v4331 = vadd.f32 %v4317, %v4330
    %4332 = vdwg.mxu0
    %4333 = vmatpush.bf16.msra.mxu0 %v4168
    %4334 = vmatpush.bf16.msra.mxu0 %v4166
    %4335 = vmatpush.bf16.msra.mxu0 %v4164
    %4336 = vmatpush.bf16.msra.mxu0 %v4162
    %4337 = vmatpush.bf16.msra.mxu0 %v4160
    %4338 = vmatpush.bf16.msra.mxu0 %v4158
    %4339 = vmatpush.bf16.msra.mxu0 %v4156
    %4340 = vmatpush.bf16.msra.mxu0 %v4154
    %4341 = vmatmul.bf16.gmra.mxu0 %v3863
    %v4342 = vpop.f32.mrf.mxu0
    %v4343 = vadd.f32 %v4329, %v4342
    %v4344 = vpop.f32.mrf.mxu0
    %v4345 = vadd.f32 %v4331, %v4344
    %4346 = vdwg.mxu0
    %4347 = vmatpush.bf16.msra.mxu0 %v4184
    %4348 = vmatpush.bf16.msra.mxu0 %v4182
    %4349 = vmatpush.bf16.msra.mxu0 %v4180
    %4350 = vmatpush.bf16.msra.mxu0 %v4178
    %4351 = vmatpush.bf16.msra.mxu0 %v4176
    %4352 = vmatpush.bf16.msra.mxu0 %v4174
    %4353 = vmatpush.bf16.msra.mxu0 %v4172
    %4354 = vmatpush.bf16.msra.mxu0 %v4170
    %4355 = vmatmul.bf16.gmra.mxu0 %v3864
    %v4356 = vpop.f32.mrf.mxu0
    %v4357 = vadd.f32 %v4343, %v4356
    %v4358 = vpop.f32.mrf.mxu0
    %v4359 = vadd.f32 %v4345, %v4358
    %4360 = vdwg.mxu0
    %v4361 = vpack.c.bf16 %v4357, %v4301
    %v4362 = vpack.c.bf16 %v4359, %v4303
    %4363 = vxpose.xlu0.b32.start [1/16] %v4357, 128
    %4364 = vxpose.xlu0.b32.cont [2/16] %v4359, 128
    %4365 = vxpose.xlu0.b32.cont [3/16] 0.0, 128
    %4366 = vxpose.xlu0.b32.cont [4/16] 0.0, 128
    %4367 = vxpose.xlu0.b32.cont [5/16] 0.0, 128
    %4368 = vxpose.xlu0.b32.cont [6/16] 0.0, 128
    %4369 = vxpose.xlu0.b32.cont [7/16] 0.0, 128
    %4370 = vxpose.xlu0.b32.cont [8/16] 0.0, 128
    %4371 = vxpose.xlu0.b32.cont [9/16] 0.0, 128
    %4372 = vxpose.xlu0.b32.cont [10/16] 0.0, 128
    %4373 = vxpose.xlu0.b32.cont [11/16] 0.0, 128
    %4374 = vxpose.xlu0.b32.cont [12/16] 0.0, 128
    %4375 = vxpose.xlu0.b32.cont [13/16] 0.0, 128
    %4376 = vxpose.xlu0.b32.cont [14/16] 0.0, 128
    %4377 = vxpose.xlu0.b32.cont [15/16] 0.0, 128
    %4378 = vxpose.xlu0.b32.end [16/16] 0.0, 128
    %v4379 = vpop.trf.xlu0
    %v4380 = vpop.trf.xlu0
    %v4381 = vpop.trf.xlu0
    %v4382 = vpop.trf.xlu0
    %v4383 = vpop.trf.xlu0
    %v4384 = vpop.trf.xlu0
    %v4385 = vpop.trf.xlu0
    %v4386 = vpop.trf.xlu0
    %v4387 = vpop.trf.xlu0
    %v4388 = vpop.trf.xlu0
    %v4389 = vpop.trf.xlu0
    %v4390 = vpop.trf.xlu0
    %v4391 = vpop.trf.xlu0
    %v4392 = vpop.trf.xlu0
    %v4393 = vpop.trf.xlu0
    %v4394 = vpop.trf.xlu0
    %4396 = vset.pattern.permute.xlu0 1
    %4397 = vperm.xlu0 %4396, %v4357
    %v4398 = vpop.permute.xlu0 %4397
    %4401 = vset.pattern.permute.xlu0 1
    %4402 = vperm.xlu0 %4401, %v4359
    %v4403 = vpop.permute.xlu0 %4402
    %v4405 = vperm.slane %v4379, 0
    %v4406 = vadd.f32 %v4398, %v4405
    %v4407 = vadd.f32 %v4403, %v4405
    %v4408 = vmul.f32 %v4406, 0.2
    %v4409 = vmul.f32 %v4407, 0.2
    %v4410 = vmax.f32 %v4406, %v4408
    %v4411 = vmax.f32 %v4407, %v4409
    %v4412 = vadd.f32 %v4410, %v116
    %v4413 = vadd.f32 %v4411, %v117
    %v4414 = vsel %vm373, %v4412, -inf
    %4415 = vmax.xlane.f32.xlu0 %v4414
    %v4416 = vpop.xlane.xlu0 %4415
    %v4417 = vsel %vm373, %v4413, -inf
    %4418 = vmax.xlane.f32.xlu0 %v4417
    %v4419 = vpop.xlane.xlu0 %4418
    %v4420 = vsub.f32 %v4412, %v4416
    %v4421 = vsub.f32 %v4413, %v4419
    %v4422 = vmul.f32 %v4420, 1.442695
    %v4423 = vpow.pop %v4422
    %v4424 = vmul.f32 %v4421, 1.442695
    %v4425 = vpow.pop %v4424
    %v4426 = vpack.c.bf16 %v4425, %v4423
    %v4428 = vsel %vm373, %v4426, 0
    %4430 = vmatpush.bf16.msra.mxu0 0
    %4431 = vmatpush.bf16.msra.mxu0 0
    %4432 = vmatpush.bf16.msra.mxu0 0
    %4433 = vmatpush.bf16.msra.mxu0 0
    %4434 = vmatpush.bf16.msra.mxu0 0
    %4435 = vmatpush.bf16.msra.mxu0 0
    %4436 = vmatpush.bf16.msra.mxu0 0
    %4437 = vmatpush.bf16.msra.mxu0 %v423
    %4438 = vmatmul.bf16.gmra.mxu0 %v4428
    %v4439 = vpop.f32.mrf.mxu0
    %v4440 = vadd.f32 0.0, %v4439
    %v4441 = vpop.f32.mrf.mxu0
    %v4442 = vadd.f32 0.0, %v4441
    %4443 = vdwg.mxu0
    %v4444 = vrcp.pop %v4440
    %v4445 = vrcp.pop %v4442
    %v4448 = vunpack.c.l.b16 %v4361
    %v4449 = vunpack.c.l.b16 %v4362
    %v4450 = vpack.c.b16 %v4449, %v4448
    %4452 = vmatpush.bf16.msra.mxu0 0
    %4453 = vmatpush.bf16.msra.mxu0 0
    %4454 = vmatpush.bf16.msra.mxu0 0
    %4455 = vmatpush.bf16.msra.mxu0 0
    %4456 = vmatpush.bf16.msra.mxu0 0
    %4457 = vmatpush.bf16.msra.mxu0 0
    %4458 = vmatpush.bf16.msra.mxu0 0
    %4459 = vmatpush.bf16.msra.mxu0 %v4450
    %4460 = vmatmul.bf16.gmra.mxu0 %v4428
    %v4461 = vpop.f32.mrf.mxu0
    %v4462 = vadd.f32 0.0, %v4461
    %v4463 = vpop.f32.mrf.mxu0
    %v4464 = vadd.f32 0.0, %v4463
    %4465 = vdwg.mxu0
    %4467 = vset.pattern.permute.xlu0 0
    %4468 = vperm.xlu0 %4467, %v4444
    %v4469 = vpop.permute.xlu0 %4468
    %4472 = vset.pattern.permute.xlu0 0
    %4473 = vperm.xlu0 %4472, %v4445
    %v4474 = vpop.permute.xlu0 %4473
    %v4476 = vmul.f32 %v4462, %v4469
    %v4477 = vmul.f32 %v4464, %v4474
    %v4478 = vld [vmem:[%s10] sm:$0x1]
    %v4480 = vperm.slane %v4478, 0
    %v4482 = vadd.f32 %v4476, %v4480
    %v4483 = vadd.f32 %v4477, %v4480
    %v4484 = vmax.f32 %v4482, 0.0
    %v4485 = vmax.f32 %v4483, 0.0
    %4486 = vst [vmem:[#allocation11] sm:$0xff] %v4484
    %4487 = vst [vmem:[#allocation11 + $0x8] sm:$0xff] %v4485
    // Predicated region
    $region66: #{tpu_custom_call.1} parent=1 // pred_check
      _
    $region67: #{tpu_custom_call.1} parent=1 // pred_check_branch
      %4489 = sbr.rel (0) target = $region69
    $region68: #{tpu_custom_call.1} parent=1 // pred_region
      %4491 = vsyncadd [#allocation4], 0
      %s4492 = sshll.u32 [#allocation11], 4
      %s4493 = int_to_ptr.vmem [resolvable:$true] %s4492
      %s4494 = sshll.u32 %s11, 4
      %s4495 = int_to_ptr.hbm [resolvable:$true] %s4494
      %4500 = dma.vmem_to_hbm [thread:$0]  %s4493, 256, %s4495, [#allocation4], 128, 128, 8
    $region69: #{tpu_custom_call.1} parent=1 // pred_fallthru
      _
    // Predicated region
    $region70: #{tpu_custom_call.1} parent=1 // pred_check
      _
    $region71: #{tpu_custom_call.1} parent=1 // pred_check_branch
      %4502 = sbr.rel (0) target = $region73
    $region72: #{tpu_custom_call.1} parent=1 // pred_region
      %4504 = dma.done [#allocation4], 256
    $region73: #{tpu_custom_call.1} parent=1 // pred_fallthru
      _
    %4505 = vsyncpa [#allocation3], 1
    %4506 = vsyncpa [#allocation6], 1
    %4507 = vsyncpa [#allocation9], 1
    %4508 = vsyncpa [#allocation4], 1

</llo_original>
